<compile_context>
chip_gen: v5e
topology: v5e:2x2
jax: 0.10.0
libtpu: 0.0.40
codegen_flags: <defaults>
</compile_context>

<pallas_src>
import functools

import jax
import jax.numpy as jnp
from jax.experimental import pallas as pl
from jax.experimental.pallas import tpu as pltpu

C_IN = 514
C_H = 512
C_OUT = 3


def _round_up(v, m):
    return ((v + m - 1) // m) * m


def _foldnet_fold1_kernel(x_ref, w1_ref, b1_ref, w2_ref, b2_ref,
                          w3_ref, b3_ref, o_ref):
    # x_ref: (1, 514, tn) bf16; w*: (out, in) bf16; b*: (out, 1) f32.
    x = x_ref[0]                                                    # (514, tn)
    h = jnp.dot(w1_ref[...], x, preferred_element_type=jnp.float32)  # (512, tn)
    h = jnp.maximum(h + b1_ref[...], 0.0).astype(jnp.bfloat16)       # relu(conv1)
    h = jnp.dot(w2_ref[...], h, preferred_element_type=jnp.float32)  # (512, tn)
    h = jnp.maximum(h + b2_ref[...], 0.0).astype(jnp.bfloat16)       # relu(conv2)
    o = jnp.dot(w3_ref[...], h, preferred_element_type=jnp.float32)  # (3, tn)
    o_ref[0] = (o + b3_ref[...]).astype(o_ref.dtype)                 # conv3


@functools.partial(jax.jit, static_argnames=("tn",))
def foldingnet_dec_fold1(x, kernel_params, *, tn=512):
    """x: (B, 514, N) float32  ->  (B, 3, N) float32 (NCW, like PyTorch)."""
    w1, b1, w2, b2, w3, b3 = kernel_params   # weights (out,in) bf16, biases (out,1) f32
    B, C, N = x.shape
    assert C == C_IN

    # Point tile on the lane axis: multiple of 128, capped by the padded N.
    tn = min(tn, _round_up(N, 128))
    n_pad = _round_up(N, tn)

    x = x.astype(jnp.bfloat16)
    if n_pad != N:
        x = jnp.pad(x, ((0, 0), (0, 0), (0, n_pad - N)))

    grid = (B, n_pad // tn)

    flops = 2 * B * n_pad * (C_IN * C_H + C_H * C_H + C_H * C_OUT)
    bytes_accessed = (
        B * C_IN * n_pad * 2                                   # x (bf16)
        + (C_H * C_IN + C_H * C_H + C_OUT * C_H) * 2           # weights (bf16)
        + (2 * C_H + C_OUT) * 4                                # biases (f32)
        + B * C_OUT * n_pad * 4                                # output (f32)
    )

    out = pl.pallas_call(
        _foldnet_fold1_kernel,
        out_shape=jax.ShapeDtypeStruct((B, C_OUT, n_pad), jnp.float32),
        grid_spec=pltpu.PrefetchScalarGridSpec(
            num_scalar_prefetch=0,
            grid=grid,
            in_specs=[
                pl.BlockSpec((1, C_IN, tn), lambda b, j: (b, 0, j)),   # x tile
                pl.BlockSpec((C_H, C_IN), lambda b, j: (0, 0)),        # W1
                pl.BlockSpec((C_H, 1), lambda b, j: (0, 0)),           # b1
                pl.BlockSpec((C_H, C_H), lambda b, j: (0, 0)),         # W2
                pl.BlockSpec((C_H, 1), lambda b, j: (0, 0)),           # b2
                pl.BlockSpec((C_OUT, C_H), lambda b, j: (0, 0)),       # W3
                pl.BlockSpec((C_OUT, 1), lambda b, j: (0, 0)),         # b3
            ],
            out_specs=pl.BlockSpec((1, C_OUT, tn), lambda b, j: (b, 0, j)),
        ),
        compiler_params=pltpu.CompilerParams(
            dimension_semantics=("parallel", "parallel")),
        cost_estimate=pl.CostEstimate(
            flops=flops, transcendentals=0, bytes_accessed=bytes_accessed),
    )(x, w1, b1, w2, b2, w3, b3)

    if n_pad != N:
        out = out[:, :, :N]
    return out


def init_params(key):
    """Deterministic synthetic weights in PyTorch layout: W (out, in), b (out,)."""
    ks = jax.random.split(key, 6)
    scale = 0.02
    w1 = scale * jax.random.normal(ks[0], (C_H, C_IN), jnp.float32)
    b1 = scale * jax.random.normal(ks[1], (C_H,), jnp.float32)
    w2 = scale * jax.random.normal(ks[2], (C_H, C_H), jnp.float32)
    b2 = scale * jax.random.normal(ks[3], (C_H,), jnp.float32)
    w3 = scale * jax.random.normal(ks[4], (C_OUT, C_H), jnp.float32)
    b3 = scale * jax.random.normal(ks[5], (C_OUT,), jnp.float32)
    return (w1, b1, w2, b2, w3, b3)


def prepare_kernel_params(torch_params):
    """(out, in)/(out,) f32 -> kernel layout: bf16 weights, (out, 1) f32 biases."""
    w1, b1, w2, b2, w3, b3 = torch_params
    return (w1.astype(jnp.bfloat16), b1.reshape(-1, 1),
            w2.astype(jnp.bfloat16), b2.reshape(-1, 1),
            w3.astype(jnp.bfloat16), b3.reshape(-1, 1))


def _reference(x, torch_params):
    """Plain-JAX f32 reference matching the PyTorch forward (NCW in/out)."""
    w1, b1, w2, b2, w3, b3 = torch_params
    h = jnp.maximum(jnp.einsum('oi,bin->bon', w1, x) + b1[None, :, None], 0.0)
    h = jnp.maximum(jnp.einsum('oi,bin->bon', w2, h) + b2[None, :, None], 0.0)
    return jnp.einsum('oi,bin->bon', w3, h) + b3[None, :, None]


if __name__ == "__main__":
    key = jax.random.PRNGKey(0)
    kx, kp = jax.random.split(key)

    B, N = 2, 16                                            # small example
    x = jax.random.normal(kx, (B, C_IN, N), jnp.float32)    # (2, 514, 16)
    torch_params = init_params(kp)
    kernel_params = prepare_kernel_params(torch_params)

    out = foldingnet_dec_fold1(x, kernel_params)
    out = jax.block_until_ready(out)

    ref = _reference(x, torch_params)
    assert out.shape == (B, C_OUT, N), out.shape
    # bf16 matmul inputs with f32 accumulation -> loosened tolerance vs f32 ref.
    assert jnp.allclose(out, ref, atol=2e-2, rtol=2e-2), (
        "mismatch vs reference: max abs diff = %e" % float(jnp.max(jnp.abs(out - ref))))

    print("KERNEL_OK")
</pallas_src>

<mosaic_0001>
module attributes {stable_mosaic.version = 11 : i64} {
  func.func @_foldnet_fold1_kernel(%arg0: i32, %arg1: i32, %arg2: memref<1x514x128xbf16, #tpu.memory_space<vmem>>, %arg3: memref<512x514xbf16, #tpu.memory_space<vmem>>, %arg4: memref<512x1xf32, #tpu.memory_space<vmem>>, %arg5: memref<512x512xbf16, #tpu.memory_space<vmem>>, %arg6: memref<512x1xf32, #tpu.memory_space<vmem>>, %arg7: memref<3x512xbf16, #tpu.memory_space<vmem>>, %arg8: memref<3x1xf32, #tpu.memory_space<vmem>>, %arg9: memref<1x3x128xf32, #tpu.memory_space<vmem>>) attributes {dimension_semantics = [#tpu.dimension_semantics<parallel>, #tpu.dimension_semantics<parallel>], iteration_bounds = array<i64: 2, 1>, scalar_prefetch = 0 : i64, scratch_operands = 0 : i64, tpu.core_type = #tpu.core_type<tc>, window_params = [{transform_indices = @transform_0, window_bounds = array<i64: 1, 514, 128>}, {pipeline_mode = #tpu.pipeline_mode<synchronous>, transform_indices = @transform_1, window_bounds = array<i64: 512, 514>}, {pipeline_mode = #tpu.pipeline_mode<synchronous>, transform_indices = @transform_2, window_bounds = array<i64: 512, 1>}, {pipeline_mode = #tpu.pipeline_mode<synchronous>, transform_indices = @transform_3, window_bounds = array<i64: 512, 512>}, {pipeline_mode = #tpu.pipeline_mode<synchronous>, transform_indices = @transform_4, window_bounds = array<i64: 512, 1>}, {pipeline_mode = #tpu.pipeline_mode<synchronous>, transform_indices = @transform_5, window_bounds = array<i64: 3, 512>}, {pipeline_mode = #tpu.pipeline_mode<synchronous>, transform_indices = @transform_6, window_bounds = array<i64: 3, 1>}, {transform_indices = @transform_7, window_bounds = array<i64: 1, 3, 128>}]} {
    %c0 = arith.constant 0 : index
    %c0_0 = arith.constant 0 : index
    %c0_1 = arith.constant 0 : index
    %0 = vector.load %arg2[%c0, %c0_0, %c0_1] : memref<1x514x128xbf16, #tpu.memory_space<vmem>>, vector<1x514x128xbf16>
    %1 = vector.shape_cast %0 : vector<1x514x128xbf16> to vector<514x128xbf16>
    %c0_2 = arith.constant 0 : index
    %c0_3 = arith.constant 0 : index
    %2 = vector.load %arg3[%c0_2, %c0_3] : memref<512x514xbf16, #tpu.memory_space<vmem>>, vector<512x514xbf16>
    %cst = arith.constant dense<0.000000e+00> : vector<512x128xf32>
    %3 = tpu.matmul %2, %1, %cst {dimension_numbers = #tpu.dot_dimension_numbers<[1], [0], [0], [1], [0, 0, 1, 1], [], []>} : vector<512x514xbf16>, vector<514x128xbf16>, vector<512x128xf32> -> vector<512x128xf32>
    %c0_4 = arith.constant 0 : index
    %c0_5 = arith.constant 0 : index
    %4 = vector.load %arg4[%c0_4, %c0_5] : memref<512x1xf32, #tpu.memory_space<vmem>>, vector<512x1xf32>
    %5 = vector.broadcast %4 : vector<512x1xf32> to vector<512x128xf32>
    %6 = arith.addf %3, %5 : vector<512x128xf32>
    %cst_6 = arith.constant 0.000000e+00 : f32
    %7 = vector.broadcast %cst_6 : f32 to vector<512x128xf32>
    %8 = arith.maximumf %6, %7 : vector<512x128xf32>
    %9 = arith.truncf %8 : vector<512x128xf32> to vector<512x128xbf16>
    %c0_7 = arith.constant 0 : index
    %c0_8 = arith.constant 0 : index
    %10 = vector.load %arg5[%c0_7, %c0_8] : memref<512x512xbf16, #tpu.memory_space<vmem>>, vector<512x512xbf16>
    %cst_9 = arith.constant dense<0.000000e+00> : vector<512x128xf32>
    %11 = tpu.matmul %10, %9, %cst_9 {dimension_numbers = #tpu.dot_dimension_numbers<[1], [0], [0], [1], [0, 0, 1, 1], [], []>} : vector<512x512xbf16>, vector<512x128xbf16>, vector<512x128xf32> -> vector<512x128xf32>
    %c0_10 = arith.constant 0 : index
    %c0_11 = arith.constant 0 : index
    %12 = vector.load %arg6[%c0_10, %c0_11] : memref<512x1xf32, #tpu.memory_space<vmem>>, vector<512x1xf32>
    %13 = vector.broadcast %12 : vector<512x1xf32> to vector<512x128xf32>
    %14 = arith.addf %11, %13 : vector<512x128xf32>
    %cst_12 = arith.constant 0.000000e+00 : f32
    %15 = vector.broadcast %cst_12 : f32 to vector<512x128xf32>
    %16 = arith.maximumf %14, %15 : vector<512x128xf32>
    %17 = arith.truncf %16 : vector<512x128xf32> to vector<512x128xbf16>
    %c0_13 = arith.constant 0 : index
    %c0_14 = arith.constant 0 : index
    %18 = vector.load %arg7[%c0_13, %c0_14] : memref<3x512xbf16, #tpu.memory_space<vmem>>, vector<3x512xbf16>
    %cst_15 = arith.constant dense<0.000000e+00> : vector<3x128xf32>
    %19 = tpu.matmul %18, %17, %cst_15 {dimension_numbers = #tpu.dot_dimension_numbers<[1], [0], [0], [1], [0, 0, 1, 1], [], []>} : vector<3x512xbf16>, vector<512x128xbf16>, vector<3x128xf32> -> vector<3x128xf32>
    %c0_16 = arith.constant 0 : index
    %c0_17 = arith.constant 0 : index
    %20 = vector.load %arg8[%c0_16, %c0_17] : memref<3x1xf32, #tpu.memory_space<vmem>>, vector<3x1xf32>
    %21 = vector.broadcast %20 : vector<3x1xf32> to vector<3x128xf32>
    %22 = arith.addf %19, %21 : vector<3x128xf32>
    %c0_18 = arith.constant 0 : index
    %c0_19 = arith.constant 0 : index
    %c0_20 = arith.constant 0 : index
    %23 = vector.load %arg9[%c0_18, %c0_19, %c0_20] : memref<1x3x128xf32, #tpu.memory_space<vmem>>, vector<1x3x128xf32>
    %24 = vector.shape_cast %23 : vector<1x3x128xf32> to vector<3x128xf32>
    %25 = vector.shape_cast %22 : vector<3x128xf32> to vector<1x3x128xf32>
    tpu.vector_store %arg9[%c0_18, %c0_19, %c0_20], %25 {strides = array<i32>} : memref<1x3x128xf32, #tpu.memory_space<vmem>>, vector<1x3x128xf32>,
    return
  }
  func.func @transform_0(%arg0: i32, %arg1: i32) -> (i32, i32, i32) {
    %c0_i32 = arith.constant 0 : i32
    %c0_i32_0 = arith.constant 0 : i32
    return %arg0, %c0_i32, %arg1 : i32, i32, i32
  }
  func.func @transform_1(%arg0: i32, %arg1: i32) -> (i32, i32) {
    %c0_i32 = arith.constant 0 : i32
    %c0_i32_0 = arith.constant 0 : i32
    %c0_i32_1 = arith.constant 0 : i32
    return %c0_i32, %c0_i32_0 : i32, i32
  }
  func.func @transform_2(%arg0: i32, %arg1: i32) -> (i32, i32) {
    %c0_i32 = arith.constant 0 : i32
    %c0_i32_0 = arith.constant 0 : i32
    %c0_i32_1 = arith.constant 0 : i32
    return %c0_i32, %c0_i32_0 : i32, i32
  }
  func.func @transform_3(%arg0: i32, %arg1: i32) -> (i32, i32) {
    %c0_i32 = arith.constant 0 : i32
    %c0_i32_0 = arith.constant 0 : i32
    %c0_i32_1 = arith.constant 0 : i32
    return %c0_i32, %c0_i32_0 : i32, i32
  }
  func.func @transform_4(%arg0: i32, %arg1: i32) -> (i32, i32) {
    %c0_i32 = arith.constant 0 : i32
    %c0_i32_0 = arith.constant 0 : i32
    %c0_i32_1 = arith.constant 0 : i32
    return %c0_i32, %c0_i32_0 : i32, i32
  }
  func.func @transform_5(%arg0: i32, %arg1: i32) -> (i32, i32) {
    %c0_i32 = arith.constant 0 : i32
    %c0_i32_0 = arith.constant 0 : i32
    %c0_i32_1 = arith.constant 0 : i32
    return %c0_i32, %c0_i32_0 : i32, i32
  }
  func.func @transform_6(%arg0: i32, %arg1: i32) -> (i32, i32) {
    %c0_i32 = arith.constant 0 : i32
    %c0_i32_0 = arith.constant 0 : i32
    %c0_i32_1 = arith.constant 0 : i32
    return %c0_i32, %c0_i32_0 : i32, i32
  }
  func.func @transform_7(%arg0: i32, %arg1: i32) -> (i32, i32, i32) {
    %c0_i32 = arith.constant 0 : i32
    %c0_i32_0 = arith.constant 0 : i32
    return %arg0, %c0_i32, %arg1 : i32, i32, i32
  }
}

</mosaic_0001>

<llo_original>
// kernel: foldingnet_dec_fold1.1
$region0: #{foldingnet_dec_fold1.1}
  #allocation0 [shape = 'u32[]', space=smem, size = 0x4, offset = 0x4, fixed_abs, tag = 'smem constant byte address 0x4 - core index']
  #allocation1 [shape = 'u32[72,128]{1,0:T(1,128)}', space=vmem, size = 0x9000, scoped, tag = 'internal scratch']
  %s0 = inlined_call_operand.vmem [shape: bf16[2,514,128], index: 0, kind: input, shape index: {}]
  %s1 = inlined_call_operand.vmem [shape: bf16[512,514], index: 1, kind: input, shape index: {}]
  %s2 = inlined_call_operand.vmem [shape: f32[512,1], index: 2, kind: input, shape index: {}]
  %s3 = inlined_call_operand.vmem [shape: bf16[512,512], index: 3, kind: input, shape index: {}]
  %s4 = inlined_call_operand.vmem [shape: f32[512,1], index: 4, kind: input, shape index: {}]
  %s5 = inlined_call_operand.vmem [shape: bf16[3,512], index: 5, kind: input, shape index: {}]
  %s6 = inlined_call_operand.vmem [shape: f32[3,1], index: 6, kind: input, shape index: {}]
  %s7 = inlined_call_operand.vmem [shape: f32[2,3,128], index: 7, kind: output, shape index: {}]
  %s8 = sld [smem:[#allocation0]]
  $region61: #{foldingnet_dec_fold1.1} parent=0
    _
  %s10 = ssub.s32 1, %s8
  %s11 = scalar_select 0, %s10, %s8
  loop: start=0, step=1, limit=4
  $region2: #{foldingnet_dec_fold1.1} parent=0 // loop_pre_header
    _
  $region3: #{foldingnet_dec_fold1.1} parent=0 // loop_header
    %s13 = sphi 0, %s17
    %p14 = scmp.ge.s32.totalorder %s13, 4
    %s20 = sphi 0, %s32
    %s21 = sphi 0, %s28
    %s22 = sphi 0, %s20
    %s23 = sphi 0, %s21
    %s24 = sphi 0, %s22
    %s25 = sphi 0, %s23
    %s37 = sphi 0, %s39
    %s40 = sphi 0, %s37
    %s41 = sphi 0, %s40
    %s57 = sphi 0, %s41
    %s61 = sphi 0, %s61
    %s63 = sphi 0, %s61
    %s64 = sphi 0, %s63
    %s78 = sphi 0, %s64
    %s82 = sphi 0, %s82
    %s84 = sphi 0, %s82
    %s85 = sphi 0, %s84
    %s99 = sphi 0, %s85
    %s103 = sphi 0, %s103
    %s105 = sphi 0, %s103
    %s106 = sphi 0, %s105
    %s120 = sphi 0, %s106
    %s124 = sphi 0, %s124
    %s126 = sphi 0, %s124
    %s127 = sphi 0, %s126
    %s141 = sphi 0, %s127
    %s145 = sphi 0, %s145
    %s147 = sphi 0, %s145
    %s148 = sphi 0, %s147
    %s162 = sphi 0, %s148
    %s166 = sphi 0, %s166
    %s168 = sphi 0, %s166
    %s169 = sphi 0, %s168
    %s183 = sphi 0, %s169
    %s191 = sphi 0, %s193
    %s194 = sphi 0, %s191
    %s195 = sphi 0, %s194
    %s211 = sphi 0, %s195
  $region4: #{foldingnet_dec_fold1.1} parent=0 // loop_header_branch
    %16 = sbr.rel (%p14) target = $region8
  $region5: #{foldingnet_dec_fold1.1} parent=0 // loop_body
    %s18 = ssub.s32 %s13, 1
    %s19 = ssub.s32 %s13, 2
    %s26 = sadd.s32 1, %s21
    %p27 = scmp.ge.s32.totalorder %s26, 1
    %s28 = scalar_select %p27, 0, %s26
    %s29 = sadd.s32 1, %s20
    %s30 = scalar_select %p27, %s29, %s20
    %p31 = scmp.ge.s32.totalorder %s30, 2
    %s32 = scalar_select %p31, 0, %s30
    %s33 = ssub.s32 %s20, %s32
    %s34 = ssub.s32 %s21, %s28
    %s35 = sor.u32 %s33, %s34
    %p36 = scmp.eq.s32.totalorder %s35, 0
    %s38 = sadd.s32 %s37, 1
    %s39 = scalar_select %p36, %s37, %s38
    %p42 = pneg %p36
    %p43 = scmp.eq.s32.totalorder %s13, 1
    %p44 = por %p42, %p43
    %p45 = scmp.ne.s32.totalorder %s37, %s40
    %p46 = scmp.eq.s32.totalorder %s13, 0
    %p47 = por %p45, %p46
    %p48 = scmp.ne.s32.totalorder %s37, %s40
    %p49 = scmp.eq.s32.totalorder %s18, 1
    %p50 = por %p48, %p49
    %p51 = scmp.ne.s32.totalorder %s40, %s41
    %p52 = scmp.eq.s32.totalorder %s18, 0
    %p53 = por %p51, %p52
    %p54 = scmp.ne.s32.totalorder %s40, %s41
    %p55 = scmp.eq.s32.totalorder %s19, 1
    %p56 = por %p54, %p55
    %p58 = scmp.ne.s32.totalorder %s41, %s57
    %p59 = scmp.eq.s32.totalorder %s19, 0
    %p60 = por %p58, %p59
    %s62 = sadd.s32 %s61, 1
    %p65 = scmp.eq.s32.totalorder %s13, 1
    %p66 = scmp.ne.s32.totalorder %s61, %s63
    %p67 = scmp.eq.s32.totalorder %s13, 0
    %p68 = por %p66, %p67
    %p69 = scmp.ne.s32.totalorder %s61, %s63
    %p70 = scmp.eq.s32.totalorder %s18, 1
    %p71 = por %p69, %p70
    %p72 = scmp.ne.s32.totalorder %s63, %s64
    %p73 = scmp.eq.s32.totalorder %s18, 0
    %p74 = por %p72, %p73
    %p75 = scmp.ne.s32.totalorder %s63, %s64
    %p76 = scmp.eq.s32.totalorder %s19, 1
    %p77 = por %p75, %p76
    %p79 = scmp.ne.s32.totalorder %s64, %s78
    %p80 = scmp.eq.s32.totalorder %s19, 0
    %p81 = por %p79, %p80
    %s83 = sadd.s32 %s82, 1
    %p86 = scmp.eq.s32.totalorder %s13, 1
    %p87 = scmp.ne.s32.totalorder %s82, %s84
    %p88 = scmp.eq.s32.totalorder %s13, 0
    %p89 = por %p87, %p88
    %p90 = scmp.ne.s32.totalorder %s82, %s84
    %p91 = scmp.eq.s32.totalorder %s18, 1
    %p92 = por %p90, %p91
    %p93 = scmp.ne.s32.totalorder %s84, %s85
    %p94 = scmp.eq.s32.totalorder %s18, 0
    %p95 = por %p93, %p94
    %p96 = scmp.ne.s32.totalorder %s84, %s85
    %p97 = scmp.eq.s32.totalorder %s19, 1
    %p98 = por %p96, %p97
    %p100 = scmp.ne.s32.totalorder %s85, %s99
    %p101 = scmp.eq.s32.totalorder %s19, 0
    %p102 = por %p100, %p101
    %s104 = sadd.s32 %s103, 1
    %p107 = scmp.eq.s32.totalorder %s13, 1
    %p108 = scmp.ne.s32.totalorder %s103, %s105
    %p109 = scmp.eq.s32.totalorder %s13, 0
    %p110 = por %p108, %p109
    %p111 = scmp.ne.s32.totalorder %s103, %s105
    %p112 = scmp.eq.s32.totalorder %s18, 1
    %p113 = por %p111, %p112
    %p114 = scmp.ne.s32.totalorder %s105, %s106
    %p115 = scmp.eq.s32.totalorder %s18, 0
    %p116 = por %p114, %p115
    %p117 = scmp.ne.s32.totalorder %s105, %s106
    %p118 = scmp.eq.s32.totalorder %s19, 1
    %p119 = por %p117, %p118
    %p121 = scmp.ne.s32.totalorder %s106, %s120
    %p122 = scmp.eq.s32.totalorder %s19, 0
    %p123 = por %p121, %p122
    %s125 = sadd.s32 %s124, 1
    %p128 = scmp.eq.s32.totalorder %s13, 1
    %p129 = scmp.ne.s32.totalorder %s124, %s126
    %p130 = scmp.eq.s32.totalorder %s13, 0
    %p131 = por %p129, %p130
    %p132 = scmp.ne.s32.totalorder %s124, %s126
    %p133 = scmp.eq.s32.totalorder %s18, 1
    %p134 = por %p132, %p133
    %p135 = scmp.ne.s32.totalorder %s126, %s127
    %p136 = scmp.eq.s32.totalorder %s18, 0
    %p137 = por %p135, %p136
    %p138 = scmp.ne.s32.totalorder %s126, %s127
    %p139 = scmp.eq.s32.totalorder %s19, 1
    %p140 = por %p138, %p139
    %p142 = scmp.ne.s32.totalorder %s127, %s141
    %p143 = scmp.eq.s32.totalorder %s19, 0
    %p144 = por %p142, %p143
    %s146 = sadd.s32 %s145, 1
    %p149 = scmp.eq.s32.totalorder %s13, 1
    %p150 = scmp.ne.s32.totalorder %s145, %s147
    %p151 = scmp.eq.s32.totalorder %s13, 0
    %p152 = por %p150, %p151
    %p153 = scmp.ne.s32.totalorder %s145, %s147
    %p154 = scmp.eq.s32.totalorder %s18, 1
    %p155 = por %p153, %p154
    %p156 = scmp.ne.s32.totalorder %s147, %s148
    %p157 = scmp.eq.s32.totalorder %s18, 0
    %p158 = por %p156, %p157
    %p159 = scmp.ne.s32.totalorder %s147, %s148
    %p160 = scmp.eq.s32.totalorder %s19, 1
    %p161 = por %p159, %p160
    %p163 = scmp.ne.s32.totalorder %s148, %s162
    %p164 = scmp.eq.s32.totalorder %s19, 0
    %p165 = por %p163, %p164
    %s167 = sadd.s32 %s166, 1
    %p170 = scmp.eq.s32.totalorder %s13, 1
    %p171 = scmp.ne.s32.totalorder %s166, %s168
    %p172 = scmp.eq.s32.totalorder %s13, 0
    %p173 = por %p171, %p172
    %p174 = scmp.ne.s32.totalorder %s166, %s168
    %p175 = scmp.eq.s32.totalorder %s18, 1
    %p176 = por %p174, %p175
    %p177 = scmp.ne.s32.totalorder %s168, %s169
    %p178 = scmp.eq.s32.totalorder %s18, 0
    %p179 = por %p177, %p178
    %p180 = scmp.ne.s32.totalorder %s168, %s169
    %p181 = scmp.eq.s32.totalorder %s19, 1
    %p182 = por %p180, %p181
    %p184 = scmp.ne.s32.totalorder %s169, %s183
    %p185 = scmp.eq.s32.totalorder %s19, 0
    %p186 = por %p184, %p185
    %s187 = ssub.s32 %s20, %s32
    %s188 = ssub.s32 %s21, %s28
    %s189 = sor.u32 %s187, %s188
    %p190 = scmp.eq.s32.totalorder %s189, 0
    %s192 = sadd.s32 %s191, 1
    %s193 = scalar_select %p190, %s191, %s192
    %p196 = pneg %p190
    %p197 = scmp.eq.s32.totalorder %s13, 1
    %p198 = por %p196, %p197
    %p199 = scmp.ne.s32.totalorder %s191, %s194
    %p200 = scmp.eq.s32.totalorder %s13, 0
    %p201 = por %p199, %p200
    %p202 = scmp.ne.s32.totalorder %s191, %s194
    %p203 = scmp.eq.s32.totalorder %s18, 1
    %p204 = por %p202, %p203
    %p205 = scmp.ne.s32.totalorder %s194, %s195
    %p206 = scmp.eq.s32.totalorder %s18, 0
    %p207 = por %p205, %p206
    %p208 = scmp.ne.s32.totalorder %s194, %s195
    %p209 = scmp.eq.s32.totalorder %s19, 1
    %p210 = por %p208, %p209
    %p212 = scmp.ne.s32.totalorder %s195, %s211
    %p213 = scmp.eq.s32.totalorder %s19, 0
    %p214 = por %p212, %p213
    %p215 = scmp.le.s32.totalorder 1, %s13
    %p216 = scmp.lt.s32.totalorder %s13, 3
    %p217 = pnand %p215, %p216
    %p218 = pneg %p217
    // Predicated region
    $region9: #{foldingnet_dec_fold1.1} parent=5 // pred_check
      _
    $region10: #{foldingnet_dec_fold1.1} parent=5 // pred_check_branch
      %220 = sbr.rel (%p217) target = $region12
    $region11: #{foldingnet_dec_fold1.1} parent=5 // pred_region
      %s221 = ssub.s32 %s13, 1
      // Predicated region
      $region13: #{foldingnet_dec_fold1.1} parent=11 // pred_check
        %p222 = pneg %p74
      $region14: #{foldingnet_dec_fold1.1} parent=11 // pred_check_branch
        %224 = sbr.rel (%p222) target = $region16
      $region15: #{foldingnet_dec_fold1.1} parent=11 // pred_region
        _
      $region16: #{foldingnet_dec_fold1.1} parent=11 // pred_fallthru
        _
      // Predicated region
      $region17: #{foldingnet_dec_fold1.1} parent=11 // pred_check
        %p225 = pneg %p95
      $region18: #{foldingnet_dec_fold1.1} parent=11 // pred_check_branch
        %227 = sbr.rel (%p225) target = $region20
      $region19: #{foldingnet_dec_fold1.1} parent=11 // pred_region
        _
      $region20: #{foldingnet_dec_fold1.1} parent=11 // pred_fallthru
        _
      // Predicated region
      $region21: #{foldingnet_dec_fold1.1} parent=11 // pred_check
        %p228 = pneg %p116
      $region22: #{foldingnet_dec_fold1.1} parent=11 // pred_check_branch
        %230 = sbr.rel (%p228) target = $region24
      $region23: #{foldingnet_dec_fold1.1} parent=11 // pred_region
        _
      $region24: #{foldingnet_dec_fold1.1} parent=11 // pred_fallthru
        _
      // Predicated region
      $region25: #{foldingnet_dec_fold1.1} parent=11 // pred_check
        %p231 = pneg %p137
      $region26: #{foldingnet_dec_fold1.1} parent=11 // pred_check_branch
        %233 = sbr.rel (%p231) target = $region28
      $region27: #{foldingnet_dec_fold1.1} parent=11 // pred_region
        _
      $region28: #{foldingnet_dec_fold1.1} parent=11 // pred_fallthru
        _
      // Predicated region
      $region29: #{foldingnet_dec_fold1.1} parent=11 // pred_check
        %p234 = pneg %p158
      $region30: #{foldingnet_dec_fold1.1} parent=11 // pred_check_branch
        %236 = sbr.rel (%p234) target = $region32
      $region31: #{foldingnet_dec_fold1.1} parent=11 // pred_region
        _
      $region32: #{foldingnet_dec_fold1.1} parent=11 // pred_fallthru
        _
      // Predicated region
      $region33: #{foldingnet_dec_fold1.1} parent=11 // pred_check
        %p237 = pneg %p179
      $region34: #{foldingnet_dec_fold1.1} parent=11 // pred_check_branch
        %239 = sbr.rel (%p237) target = $region36
      $region35: #{foldingnet_dec_fold1.1} parent=11 // pred_region
        _
      $region36: #{foldingnet_dec_fold1.1} parent=11 // pred_fallthru
        _
    $region12: #{foldingnet_dec_fold1.1} parent=5 // pred_fallthru
      _
    %p240 = scmp.lt.s32.totalorder %s13, 2
    // Predicated region
    $region37: #{foldingnet_dec_fold1.1} parent=5 // pred_check
      %p241 = pneg %p240
    $region38: #{foldingnet_dec_fold1.1} parent=5 // pred_check_branch
      %243 = sbr.rel (%p241) target = $region40
    $region39: #{foldingnet_dec_fold1.1} parent=5 // pred_region
      // Predicated region
      $region41: #{foldingnet_dec_fold1.1} parent=39 // pred_check
        %p244 = pneg %p47
      $region42: #{foldingnet_dec_fold1.1} parent=39 // pred_check_branch
        %246 = sbr.rel (%p244) target = $region44
      $region43: #{foldingnet_dec_fold1.1} parent=39 // pred_region
        %p247 = scmp.lt.s32.totalorder %s20, 1
        %s248 = scalar_select %p247, %s20, 1
        %p249 = scmp.lt.s32.totalorder %s21, 0
        %s250 = scalar_select %p249, %s21, 0
        %s251 = smul.addr %s248, 65
        %s252 = sadd.s32 %s250, %s251
        %s253 = smul.addr %s252, 4
        %s254 = scalar_lea.vmem %s0, %s253
      $region44: #{foldingnet_dec_fold1.1} parent=39 // pred_fallthru
        _
    $region40: #{foldingnet_dec_fold1.1} parent=5 // pred_fallthru
      _
    %p255 = scmp.le.s32.totalorder 1, %s13
    %p256 = scmp.lt.s32.totalorder %s13, 3
    %p257 = pnand %p255, %p256
    %p258 = pneg %p257
    // Predicated region
    $region45: #{foldingnet_dec_fold1.1} parent=5 // pred_check
      _
    $region46: #{foldingnet_dec_fold1.1} parent=5 // pred_check_branch
      %260 = sbr.rel (%p257) target = $region48
    $region47: #{foldingnet_dec_fold1.1} parent=5 // pred_region
      %s261 = ssub.s32 %s13, 1
      %p262 = scmp.lt.s32.totalorder %s22, 1
      %s263 = scalar_select %p262, %s22, 1
      %p264 = scmp.lt.s32.totalorder %s23, 0
      %s265 = scalar_select %p264, %s23, 0
      %s266 = smul.addr %s263, 65
      %s267 = sadd.s32 %s265, %s266
      %s268 = smul.addr %s267, 4
      %s269 = scalar_lea.vmem %s0, %s268
      %p270 = pneg %p53
      %p271 = pneg %p50
      %p272 = pneg %p74
      %p273 = pneg %p71
      %p274 = pneg %p95
      %p275 = pneg %p92
      %p276 = pneg %p116
      %p277 = pneg %p113
      %p278 = pneg %p137
      %p279 = pneg %p134
      %p280 = pneg %p158
      %p281 = pneg %p155
      %p282 = pneg %p179
      %p283 = pneg %p176
      %p284 = pneg %p207
      %p285 = pneg %p204
      %p286 = scmp.lt.s32.totalorder %s22, 1
      %s287 = scalar_select %p286, %s22, 1
      %p288 = scmp.lt.s32.totalorder %s23, 0
      %s289 = scalar_select %p288, %s23, 0
      %s290 = sadd.s32 %s289, %s287
      %s291 = smul.addr %s290, 4
      %s292 = scalar_lea.vmem %s7, %s291
      %p293 = scmp.lt.s32.totalorder %s22, 1
      %s294 = scalar_select %p293, %s22, 1
      %p295 = scmp.lt.s32.totalorder %s23, 0
      %s296 = scalar_select %p295, %s23, 0
      %s297 = smul.addr %s294, 65
      %s298 = sadd.s32 %s296, %s297
      %s299 = smul.addr %s298, 4
      %s300 = scalar_lea.vmem %s0, %s299
      %p301 = scmp.lt.s32.totalorder %s22, 1
      %s302 = scalar_select %p301, %s22, 1
      %p303 = scmp.lt.s32.totalorder %s23, 0
      %s304 = scalar_select %p303, %s23, 0
      %s305 = sadd.s32 %s304, %s302
      %s306 = smul.addr %s305, 4
      %s307 = scalar_lea.vmem %s7, %s306
      %v309 = vld [vmem:[%s300] sm:$0xf]
      %v310 = vld [vmem:[%s300 + $0x4] sm:$0xf]
      %v311 = vld [vmem:[%s300 + $0x8] sm:$0xf]
      %v312 = vld [vmem:[%s300 + $0xc] sm:$0xf]
      %v313 = vld [vmem:[%s300 + $0x10] sm:$0xf]
      %v314 = vld [vmem:[%s300 + $0x14] sm:$0xf]
      %v315 = vld [vmem:[%s300 + $0x18] sm:$0xf]
      %v316 = vld [vmem:[%s300 + $0x1c] sm:$0xf]
      %v317 = vld [vmem:[%s300 + $0x20] sm:$0xf]
      %v318 = vld [vmem:[%s300 + $0x24] sm:$0xf]
      %v319 = vld [vmem:[%s300 + $0x28] sm:$0xf]
      %v320 = vld [vmem:[%s300 + $0x2c] sm:$0xf]
      %v321 = vld [vmem:[%s300 + $0x30] sm:$0xf]
      %v322 = vld [vmem:[%s300 + $0x34] sm:$0xf]
      %v323 = vld [vmem:[%s300 + $0x38] sm:$0xf]
      %v324 = vld [vmem:[%s300 + $0x3c] sm:$0xf]
      %v325 = vld [vmem:[%s300 + $0x40] sm:$0xf]
      %v326 = vld [vmem:[%s300 + $0x44] sm:$0xf]
      %v327 = vld [vmem:[%s300 + $0x48] sm:$0xf]
      %v328 = vld [vmem:[%s300 + $0x4c] sm:$0xf]
      %v329 = vld [vmem:[%s300 + $0x50] sm:$0xf]
      %v330 = vld [vmem:[%s300 + $0x54] sm:$0xf]
      %v331 = vld [vmem:[%s300 + $0x58] sm:$0xf]
      %v332 = vld [vmem:[%s300 + $0x5c] sm:$0xf]
      %v333 = vld [vmem:[%s300 + $0x60] sm:$0xf]
      %v334 = vld [vmem:[%s300 + $0x64] sm:$0xf]
      %v335 = vld [vmem:[%s300 + $0x68] sm:$0xf]
      %v336 = vld [vmem:[%s300 + $0x6c] sm:$0xf]
      %v337 = vld [vmem:[%s300 + $0x70] sm:$0xf]
      %v338 = vld [vmem:[%s300 + $0x74] sm:$0xf]
      %v339 = vld [vmem:[%s300 + $0x78] sm:$0xf]
      %v340 = vld [vmem:[%s300 + $0x7c] sm:$0xf]
      %v341 = vld [vmem:[%s300 + $0x80] sm:$0xf]
      %v342 = vld [vmem:[%s300 + $0x84] sm:$0xf]
      %v343 = vld [vmem:[%s300 + $0x88] sm:$0xf]
      %v344 = vld [vmem:[%s300 + $0x8c] sm:$0xf]
      %v345 = vld [vmem:[%s300 + $0x90] sm:$0xf]
      %v346 = vld [vmem:[%s300 + $0x94] sm:$0xf]
      %v347 = vld [vmem:[%s300 + $0x98] sm:$0xf]
      %v348 = vld [vmem:[%s300 + $0x9c] sm:$0xf]
      %v349 = vld [vmem:[%s300 + $0xa0] sm:$0xf]
      %v350 = vld [vmem:[%s300 + $0xa4] sm:$0xf]
      %v351 = vld [vmem:[%s300 + $0xa8] sm:$0xf]
      %v352 = vld [vmem:[%s300 + $0xac] sm:$0xf]
      %v353 = vld [vmem:[%s300 + $0xb0] sm:$0xf]
      %v354 = vld [vmem:[%s300 + $0xb4] sm:$0xf]
      %v355 = vld [vmem:[%s300 + $0xb8] sm:$0xf]
      %v356 = vld [vmem:[%s300 + $0xbc] sm:$0xf]
      %v357 = vld [vmem:[%s300 + $0xc0] sm:$0xf]
      %v358 = vld [vmem:[%s300 + $0xc4] sm:$0xf]
      %v359 = vld [vmem:[%s300 + $0xc8] sm:$0xf]
      %v360 = vld [vmem:[%s300 + $0xcc] sm:$0xf]
      %v361 = vld [vmem:[%s300 + $0xd0] sm:$0xf]
      %v362 = vld [vmem:[%s300 + $0xd4] sm:$0xf]
      %v363 = vld [vmem:[%s300 + $0xd8] sm:$0xf]
      %v364 = vld [vmem:[%s300 + $0xdc] sm:$0xf]
      %v365 = vld [vmem:[%s300 + $0xe0] sm:$0xf]
      %v366 = vld [vmem:[%s300 + $0xe4] sm:$0xf]
      %v367 = vld [vmem:[%s300 + $0xe8] sm:$0xf]
      %v368 = vld [vmem:[%s300 + $0xec] sm:$0xf]
      %v369 = vld [vmem:[%s300 + $0xf0] sm:$0xf]
      %v370 = vld [vmem:[%s300 + $0xf4] sm:$0xf]
      %v371 = vld [vmem:[%s300 + $0xf8] sm:$0xf]
      %v372 = vld [vmem:[%s300 + $0xfc] sm:$0xf]
      %v373 = vld [vmem:[%s300 + $0x100] sm:$0x1]
      %v374 = vld [vmem:[%s1] sm:$0xff]
      %v375 = vld [vmem:[%s1 + $0x8] sm:$0xff]
      %v376 = vld [vmem:[%s1 + $0x10] sm:$0xf]
      %v377 = vld [vmem:[%s1 + $0x14] sm:$0xff]
      %v378 = vld [vmem:[%s1 + $0x1c] sm:$0xff]
      %v379 = vld [vmem:[%s1 + $0x24] sm:$0xf]
      %v380 = vld [vmem:[%s1 + $0x28] sm:$0xff]
      %v381 = vld [vmem:[%s1 + $0x30] sm:$0xff]
      %v382 = vld [vmem:[%s1 + $0x38] sm:$0xf]
      %v383 = vld [vmem:[%s1 + $0x3c] sm:$0xff]
      %v384 = vld [vmem:[%s1 + $0x44] sm:$0xff]
      %v385 = vld [vmem:[%s1 + $0x4c] sm:$0xf]
      %v386 = vld [vmem:[%s1 + $0x50] sm:$0xff]
      %v387 = vld [vmem:[%s1 + $0x58] sm:$0xff]
      %v388 = vld [vmem:[%s1 + $0x60] sm:$0xf]
      %v389 = vld [vmem:[%s1 + $0x64] sm:$0xff]
      %v390 = vld [vmem:[%s1 + $0x6c] sm:$0xff]
      %v391 = vld [vmem:[%s1 + $0x74] sm:$0xf]
      %v392 = vld [vmem:[%s1 + $0x78] sm:$0xff]
      %v393 = vld [vmem:[%s1 + $0x80] sm:$0xff]
      %v394 = vld [vmem:[%s1 + $0x88] sm:$0xf]
      %v395 = vld [vmem:[%s1 + $0x8c] sm:$0xff]
      %v396 = vld [vmem:[%s1 + $0x94] sm:$0xff]
      %v397 = vld [vmem:[%s1 + $0x9c] sm:$0xf]
      %v398 = vld [vmem:[%s1 + $0xa0] sm:$0xff]
      %v399 = vld [vmem:[%s1 + $0xa8] sm:$0xff]
      %v400 = vld [vmem:[%s1 + $0xb0] sm:$0xf]
      %v401 = vld [vmem:[%s1 + $0xb4] sm:$0xff]
      %v402 = vld [vmem:[%s1 + $0xbc] sm:$0xff]
      %v403 = vld [vmem:[%s1 + $0xc4] sm:$0xf]
      %v404 = vld [vmem:[%s1 + $0xc8] sm:$0xff]
      %v405 = vld [vmem:[%s1 + $0xd0] sm:$0xff]
      %v406 = vld [vmem:[%s1 + $0xd8] sm:$0xf]
      %v407 = vld [vmem:[%s1 + $0xdc] sm:$0xff]
      %v408 = vld [vmem:[%s1 + $0xe4] sm:$0xff]
      %v409 = vld [vmem:[%s1 + $0xec] sm:$0xf]
      %v410 = vld [vmem:[%s1 + $0xf0] sm:$0xff]
      %v411 = vld [vmem:[%s1 + $0xf8] sm:$0xff]
      %v412 = vld [vmem:[%s1 + $0x100] sm:$0xf]
      %v413 = vld [vmem:[%s1 + $0x104] sm:$0xff]
      %v414 = vld [vmem:[%s1 + $0x10c] sm:$0xff]
      %v415 = vld [vmem:[%s1 + $0x114] sm:$0xf]
      %v416 = vld [vmem:[%s1 + $0x118] sm:$0xff]
      %v417 = vld [vmem:[%s1 + $0x120] sm:$0xff]
      %v418 = vld [vmem:[%s1 + $0x128] sm:$0xf]
      %v419 = vld [vmem:[%s1 + $0x12c] sm:$0xff]
      %v420 = vld [vmem:[%s1 + $0x134] sm:$0xff]
      %v421 = vld [vmem:[%s1 + $0x13c] sm:$0xf]
      %v422 = vld [vmem:[%s1 + $0x140] sm:$0xff]
      %v423 = vld [vmem:[%s1 + $0x148] sm:$0xff]
      %v424 = vld [vmem:[%s1 + $0x150] sm:$0xf]
      %v425 = vld [vmem:[%s1 + $0x154] sm:$0xff]
      %v426 = vld [vmem:[%s1 + $0x15c] sm:$0xff]
      %v427 = vld [vmem:[%s1 + $0x164] sm:$0xf]
      %v428 = vld [vmem:[%s1 + $0x168] sm:$0xff]
      %v429 = vld [vmem:[%s1 + $0x170] sm:$0xff]
      %v430 = vld [vmem:[%s1 + $0x178] sm:$0xf]
      %v431 = vld [vmem:[%s1 + $0x17c] sm:$0xff]
      %v432 = vld [vmem:[%s1 + $0x184] sm:$0xff]
      %v433 = vld [vmem:[%s1 + $0x18c] sm:$0xf]
      %v434 = vld [vmem:[%s1 + $0x190] sm:$0xff]
      %v435 = vld [vmem:[%s1 + $0x198] sm:$0xff]
      %v436 = vld [vmem:[%s1 + $0x1a0] sm:$0xf]
      %v437 = vld [vmem:[%s1 + $0x1a4] sm:$0xff]
      %v438 = vld [vmem:[%s1 + $0x1ac] sm:$0xff]
      %v439 = vld [vmem:[%s1 + $0x1b4] sm:$0xf]
      %v440 = vld [vmem:[%s1 + $0x1b8] sm:$0xff]
      %v441 = vld [vmem:[%s1 + $0x1c0] sm:$0xff]
      %v442 = vld [vmem:[%s1 + $0x1c8] sm:$0xf]
      %v443 = vld [vmem:[%s1 + $0x1cc] sm:$0xff]
      %v444 = vld [vmem:[%s1 + $0x1d4] sm:$0xff]
      %v445 = vld [vmem:[%s1 + $0x1dc] sm:$0xf]
      %v446 = vld [vmem:[%s1 + $0x1e0] sm:$0xff]
      %v447 = vld [vmem:[%s1 + $0x1e8] sm:$0xff]
      %v448 = vld [vmem:[%s1 + $0x1f0] sm:$0xf]
      %v449 = vld [vmem:[%s1 + $0x1f4] sm:$0xff]
      %v450 = vld [vmem:[%s1 + $0x1fc] sm:$0xff]
      %v451 = vld [vmem:[%s1 + $0x204] sm:$0xf]
      %v452 = vld [vmem:[%s1 + $0x208] sm:$0xff]
      %v453 = vld [vmem:[%s1 + $0x210] sm:$0xff]
      %v454 = vld [vmem:[%s1 + $0x218] sm:$0xf]
      %v455 = vld [vmem:[%s1 + $0x21c] sm:$0xff]
      %v456 = vld [vmem:[%s1 + $0x224] sm:$0xff]
      %v457 = vld [vmem:[%s1 + $0x22c] sm:$0xf]
      %v458 = vld [vmem:[%s1 + $0x230] sm:$0xff]
      %v459 = vld [vmem:[%s1 + $0x238] sm:$0xff]
      %v460 = vld [vmem:[%s1 + $0x240] sm:$0xf]
      %v461 = vld [vmem:[%s1 + $0x244] sm:$0xff]
      %v462 = vld [vmem:[%s1 + $0x24c] sm:$0xff]
      %v463 = vld [vmem:[%s1 + $0x254] sm:$0xf]
      %v464 = vld [vmem:[%s1 + $0x258] sm:$0xff]
      %v465 = vld [vmem:[%s1 + $0x260] sm:$0xff]
      %v466 = vld [vmem:[%s1 + $0x268] sm:$0xf]
      %v467 = vld [vmem:[%s1 + $0x26c] sm:$0xff]
      %v468 = vld [vmem:[%s1 + $0x274] sm:$0xff]
      %v469 = vld [vmem:[%s1 + $0x27c] sm:$0xf]
      %v470 = vld [vmem:[%s1 + $0x280] sm:$0xff]
      %v471 = vld [vmem:[%s1 + $0x288] sm:$0xff]
      %v472 = vld [vmem:[%s1 + $0x290] sm:$0xf]
      %v473 = vld [vmem:[%s1 + $0x294] sm:$0xff]
      %v474 = vld [vmem:[%s1 + $0x29c] sm:$0xff]
      %v475 = vld [vmem:[%s1 + $0x2a4] sm:$0xf]
      %v476 = vld [vmem:[%s1 + $0x2a8] sm:$0xff]
      %v477 = vld [vmem:[%s1 + $0x2b0] sm:$0xff]
      %v478 = vld [vmem:[%s1 + $0x2b8] sm:$0xf]
      %v479 = vld [vmem:[%s1 + $0x2bc] sm:$0xff]
      %v480 = vld [vmem:[%s1 + $0x2c4] sm:$0xff]
      %v481 = vld [vmem:[%s1 + $0x2cc] sm:$0xf]
      %v482 = vld [vmem:[%s1 + $0x2d0] sm:$0xff]
      %v483 = vld [vmem:[%s1 + $0x2d8] sm:$0xff]
      %v484 = vld [vmem:[%s1 + $0x2e0] sm:$0xf]
      %v485 = vld [vmem:[%s1 + $0x2e4] sm:$0xff]
      %v486 = vld [vmem:[%s1 + $0x2ec] sm:$0xff]
      %v487 = vld [vmem:[%s1 + $0x2f4] sm:$0xf]
      %v488 = vld [vmem:[%s1 + $0x2f8] sm:$0xff]
      %v489 = vld [vmem:[%s1 + $0x300] sm:$0xff]
      %v490 = vld [vmem:[%s1 + $0x308] sm:$0xf]
      %v491 = vld [vmem:[%s1 + $0x30c] sm:$0xff]
      %v492 = vld [vmem:[%s1 + $0x314] sm:$0xff]
      %v493 = vld [vmem:[%s1 + $0x31c] sm:$0xf]
      %v494 = vld [vmem:[%s1 + $0x320] sm:$0xff]
      %v495 = vld [vmem:[%s1 + $0x328] sm:$0xff]
      %v496 = vld [vmem:[%s1 + $0x330] sm:$0xf]
      %v497 = vld [vmem:[%s1 + $0x334] sm:$0xff]
      %v498 = vld [vmem:[%s1 + $0x33c] sm:$0xff]
      %v499 = vld [vmem:[%s1 + $0x344] sm:$0xf]
      %v500 = vld [vmem:[%s1 + $0x348] sm:$0xff]
      %v501 = vld [vmem:[%s1 + $0x350] sm:$0xff]
      %v502 = vld [vmem:[%s1 + $0x358] sm:$0xf]
      %v503 = vld [vmem:[%s1 + $0x35c] sm:$0xff]
      %v504 = vld [vmem:[%s1 + $0x364] sm:$0xff]
      %v505 = vld [vmem:[%s1 + $0x36c] sm:$0xf]
      %v506 = vld [vmem:[%s1 + $0x370] sm:$0xff]
      %v507 = vld [vmem:[%s1 + $0x378] sm:$0xff]
      %v508 = vld [vmem:[%s1 + $0x380] sm:$0xf]
      %v509 = vld [vmem:[%s1 + $0x384] sm:$0xff]
      %v510 = vld [vmem:[%s1 + $0x38c] sm:$0xff]
      %v511 = vld [vmem:[%s1 + $0x394] sm:$0xf]
      %v512 = vld [vmem:[%s1 + $0x398] sm:$0xff]
      %v513 = vld [vmem:[%s1 + $0x3a0] sm:$0xff]
      %v514 = vld [vmem:[%s1 + $0x3a8] sm:$0xf]
      %v515 = vld [vmem:[%s1 + $0x3ac] sm:$0xff]
      %v516 = vld [vmem:[%s1 + $0x3b4] sm:$0xff]
      %v517 = vld [vmem:[%s1 + $0x3bc] sm:$0xf]
      %v518 = vld [vmem:[%s1 + $0x3c0] sm:$0xff]
      %v519 = vld [vmem:[%s1 + $0x3c8] sm:$0xff]
      %v520 = vld [vmem:[%s1 + $0x3d0] sm:$0xf]
      %v521 = vld [vmem:[%s1 + $0x3d4] sm:$0xff]
      %v522 = vld [vmem:[%s1 + $0x3dc] sm:$0xff]
      %v523 = vld [vmem:[%s1 + $0x3e4] sm:$0xf]
      %v524 = vld [vmem:[%s1 + $0x3e8] sm:$0xff]
      %v525 = vld [vmem:[%s1 + $0x3f0] sm:$0xff]
      %v526 = vld [vmem:[%s1 + $0x3f8] sm:$0xf]
      %v527 = vld [vmem:[%s1 + $0x3fc] sm:$0xff]
      %v528 = vld [vmem:[%s1 + $0x404] sm:$0xff]
      %v529 = vld [vmem:[%s1 + $0x40c] sm:$0xf]
      %v530 = vld [vmem:[%s1 + $0x410] sm:$0xff]
      %v531 = vld [vmem:[%s1 + $0x418] sm:$0xff]
      %v532 = vld [vmem:[%s1 + $0x420] sm:$0xf]
      %v533 = vld [vmem:[%s1 + $0x424] sm:$0xff]
      %v534 = vld [vmem:[%s1 + $0x42c] sm:$0xff]
      %v535 = vld [vmem:[%s1 + $0x434] sm:$0xf]
      %v536 = vld [vmem:[%s1 + $0x438] sm:$0xff]
      %v537 = vld [vmem:[%s1 + $0x440] sm:$0xff]
      %v538 = vld [vmem:[%s1 + $0x448] sm:$0xf]
      %v539 = vld [vmem:[%s1 + $0x44c] sm:$0xff]
      %v540 = vld [vmem:[%s1 + $0x454] sm:$0xff]
      %v541 = vld [vmem:[%s1 + $0x45c] sm:$0xf]
      %v542 = vld [vmem:[%s1 + $0x460] sm:$0xff]
      %v543 = vld [vmem:[%s1 + $0x468] sm:$0xff]
      %v544 = vld [vmem:[%s1 + $0x470] sm:$0xf]
      %v545 = vld [vmem:[%s1 + $0x474] sm:$0xff]
      %v546 = vld [vmem:[%s1 + $0x47c] sm:$0xff]
      %v547 = vld [vmem:[%s1 + $0x484] sm:$0xf]
      %v548 = vld [vmem:[%s1 + $0x488] sm:$0xff]
      %v549 = vld [vmem:[%s1 + $0x490] sm:$0xff]
      %v550 = vld [vmem:[%s1 + $0x498] sm:$0xf]
      %v551 = vld [vmem:[%s1 + $0x49c] sm:$0xff]
      %v552 = vld [vmem:[%s1 + $0x4a4] sm:$0xff]
      %v553 = vld [vmem:[%s1 + $0x4ac] sm:$0xf]
      %v554 = vld [vmem:[%s1 + $0x4b0] sm:$0xff]
      %v555 = vld [vmem:[%s1 + $0x4b8] sm:$0xff]
      %v556 = vld [vmem:[%s1 + $0x4c0] sm:$0xf]
      %v557 = vld [vmem:[%s1 + $0x4c4] sm:$0xff]
      %v558 = vld [vmem:[%s1 + $0x4cc] sm:$0xff]
      %v559 = vld [vmem:[%s1 + $0x4d4] sm:$0xf]
      %v560 = vld [vmem:[%s1 + $0x4d8] sm:$0xff]
      %v561 = vld [vmem:[%s1 + $0x4e0] sm:$0xff]
      %v562 = vld [vmem:[%s1 + $0x4e8] sm:$0xf]
      %v563 = vld [vmem:[%s1 + $0x4ec] sm:$0xff]
      %v564 = vld [vmem:[%s1 + $0x4f4] sm:$0xff]
      %v565 = vld [vmem:[%s1 + $0x4fc] sm:$0xf]
      %v566 = vld [vmem:[%s2] sm:$0xff]
      %v567 = vld [vmem:[%s2 + $0x8] sm:$0xff]
      %v568 = vld [vmem:[%s2 + $0x10] sm:$0xff]
      %v569 = vld [vmem:[%s2 + $0x18] sm:$0xff]
      %v570 = vld [vmem:[%s2 + $0x20] sm:$0xff]
      %v571 = vld [vmem:[%s2 + $0x28] sm:$0xff]
      %v572 = vld [vmem:[%s2 + $0x30] sm:$0xff]
      %v573 = vld [vmem:[%s2 + $0x38] sm:$0xff]
      %v574 = vld [vmem:[%s2 + $0x40] sm:$0xff]
      %v575 = vld [vmem:[%s2 + $0x48] sm:$0xff]
      %v576 = vld [vmem:[%s2 + $0x50] sm:$0xff]
      %v577 = vld [vmem:[%s2 + $0x58] sm:$0xff]
      %v578 = vld [vmem:[%s2 + $0x60] sm:$0xff]
      %v579 = vld [vmem:[%s2 + $0x68] sm:$0xff]
      %v580 = vld [vmem:[%s2 + $0x70] sm:$0xff]
      %v581 = vld [vmem:[%s2 + $0x78] sm:$0xff]
      %v582 = vld [vmem:[%s2 + $0x80] sm:$0xff]
      %v583 = vld [vmem:[%s2 + $0x88] sm:$0xff]
      %v584 = vld [vmem:[%s2 + $0x90] sm:$0xff]
      %v585 = vld [vmem:[%s2 + $0x98] sm:$0xff]
      %v586 = vld [vmem:[%s2 + $0xa0] sm:$0xff]
      %v587 = vld [vmem:[%s2 + $0xa8] sm:$0xff]
      %v588 = vld [vmem:[%s2 + $0xb0] sm:$0xff]
      %v589 = vld [vmem:[%s2 + $0xb8] sm:$0xff]
      %v590 = vld [vmem:[%s2 + $0xc0] sm:$0xff]
      %v591 = vld [vmem:[%s2 + $0xc8] sm:$0xff]
      %v592 = vld [vmem:[%s2 + $0xd0] sm:$0xff]
      %v593 = vld [vmem:[%s2 + $0xd8] sm:$0xff]
      %v594 = vld [vmem:[%s2 + $0xe0] sm:$0xff]
      %v595 = vld [vmem:[%s2 + $0xe8] sm:$0xff]
      %v596 = vld [vmem:[%s2 + $0xf0] sm:$0xff]
      %v597 = vld [vmem:[%s2 + $0xf8] sm:$0xff]
      %v598 = vld [vmem:[%s2 + $0x100] sm:$0xff]
      %v599 = vld [vmem:[%s2 + $0x108] sm:$0xff]
      %v600 = vld [vmem:[%s2 + $0x110] sm:$0xff]
      %v601 = vld [vmem:[%s2 + $0x118] sm:$0xff]
      %v602 = vld [vmem:[%s2 + $0x120] sm:$0xff]
      %v603 = vld [vmem:[%s2 + $0x128] sm:$0xff]
      %v604 = vld [vmem:[%s2 + $0x130] sm:$0xff]
      %v605 = vld [vmem:[%s2 + $0x138] sm:$0xff]
      %v606 = vld [vmem:[%s2 + $0x140] sm:$0xff]
      %v607 = vld [vmem:[%s2 + $0x148] sm:$0xff]
      %v608 = vld [vmem:[%s2 + $0x150] sm:$0xff]
      %v609 = vld [vmem:[%s2 + $0x158] sm:$0xff]
      %v610 = vld [vmem:[%s2 + $0x160] sm:$0xff]
      %v611 = vld [vmem:[%s2 + $0x168] sm:$0xff]
      %v612 = vld [vmem:[%s2 + $0x170] sm:$0xff]
      %v613 = vld [vmem:[%s2 + $0x178] sm:$0xff]
      %v614 = vld [vmem:[%s2 + $0x180] sm:$0xff]
      %v615 = vld [vmem:[%s2 + $0x188] sm:$0xff]
      %v616 = vld [vmem:[%s2 + $0x190] sm:$0xff]
      %v617 = vld [vmem:[%s2 + $0x198] sm:$0xff]
      %v618 = vld [vmem:[%s2 + $0x1a0] sm:$0xff]
      %v619 = vld [vmem:[%s2 + $0x1a8] sm:$0xff]
      %v620 = vld [vmem:[%s2 + $0x1b0] sm:$0xff]
      %v621 = vld [vmem:[%s2 + $0x1b8] sm:$0xff]
      %v622 = vld [vmem:[%s2 + $0x1c0] sm:$0xff]
      %v623 = vld [vmem:[%s2 + $0x1c8] sm:$0xff]
      %v624 = vld [vmem:[%s2 + $0x1d0] sm:$0xff]
      %v625 = vld [vmem:[%s2 + $0x1d8] sm:$0xff]
      %v626 = vld [vmem:[%s2 + $0x1e0] sm:$0xff]
      %v627 = vld [vmem:[%s2 + $0x1e8] sm:$0xff]
      %v628 = vld [vmem:[%s2 + $0x1f0] sm:$0xff]
      %v629 = vld [vmem:[%s2 + $0x1f8] sm:$0xff]
      %631 = vset.pattern.permute.xlu0 0
      %632 = vperm.xlu0 %631, %v566
      %v633 = vpop.permute.xlu0 %632
      %636 = vset.pattern.permute.xlu0 0
      %637 = vperm.xlu0 %636, %v567
      %v638 = vpop.permute.xlu0 %637
      %641 = vset.pattern.permute.xlu0 0
      %642 = vperm.xlu0 %641, %v568
      %v643 = vpop.permute.xlu0 %642
      %646 = vset.pattern.permute.xlu0 0
      %647 = vperm.xlu0 %646, %v569
      %v648 = vpop.permute.xlu0 %647
      %651 = vset.pattern.permute.xlu0 0
      %652 = vperm.xlu0 %651, %v570
      %v653 = vpop.permute.xlu0 %652
      %656 = vset.pattern.permute.xlu0 0
      %657 = vperm.xlu0 %656, %v571
      %v658 = vpop.permute.xlu0 %657
      %661 = vset.pattern.permute.xlu0 0
      %662 = vperm.xlu0 %661, %v572
      %v663 = vpop.permute.xlu0 %662
      %666 = vset.pattern.permute.xlu0 0
      %667 = vperm.xlu0 %666, %v573
      %v668 = vpop.permute.xlu0 %667
      %671 = vset.pattern.permute.xlu0 0
      %672 = vperm.xlu0 %671, %v574
      %v673 = vpop.permute.xlu0 %672
      %676 = vset.pattern.permute.xlu0 0
      %677 = vperm.xlu0 %676, %v575
      %v678 = vpop.permute.xlu0 %677
      %681 = vset.pattern.permute.xlu0 0
      %682 = vperm.xlu0 %681, %v576
      %v683 = vpop.permute.xlu0 %682
      %686 = vset.pattern.permute.xlu0 0
      %687 = vperm.xlu0 %686, %v577
      %v688 = vpop.permute.xlu0 %687
      %691 = vset.pattern.permute.xlu0 0
      %692 = vperm.xlu0 %691, %v578
      %v693 = vpop.permute.xlu0 %692
      %696 = vset.pattern.permute.xlu0 0
      %697 = vperm.xlu0 %696, %v579
      %v698 = vpop.permute.xlu0 %697
      %701 = vset.pattern.permute.xlu0 0
      %702 = vperm.xlu0 %701, %v580
      %v703 = vpop.permute.xlu0 %702
      %706 = vset.pattern.permute.xlu0 0
      %707 = vperm.xlu0 %706, %v581
      %v708 = vpop.permute.xlu0 %707
      %711 = vset.pattern.permute.xlu0 0
      %712 = vperm.xlu0 %711, %v582
      %v713 = vpop.permute.xlu0 %712
      %716 = vset.pattern.permute.xlu0 0
      %717 = vperm.xlu0 %716, %v583
      %v718 = vpop.permute.xlu0 %717
      %721 = vset.pattern.permute.xlu0 0
      %722 = vperm.xlu0 %721, %v584
      %v723 = vpop.permute.xlu0 %722
      %726 = vset.pattern.permute.xlu0 0
      %727 = vperm.xlu0 %726, %v585
      %v728 = vpop.permute.xlu0 %727
      %731 = vset.pattern.permute.xlu0 0
      %732 = vperm.xlu0 %731, %v586
      %v733 = vpop.permute.xlu0 %732
      %736 = vset.pattern.permute.xlu0 0
      %737 = vperm.xlu0 %736, %v587
      %v738 = vpop.permute.xlu0 %737
      %741 = vset.pattern.permute.xlu0 0
      %742 = vperm.xlu0 %741, %v588
      %v743 = vpop.permute.xlu0 %742
      %746 = vset.pattern.permute.xlu0 0
      %747 = vperm.xlu0 %746, %v589
      %v748 = vpop.permute.xlu0 %747
      %751 = vset.pattern.permute.xlu0 0
      %752 = vperm.xlu0 %751, %v590
      %v753 = vpop.permute.xlu0 %752
      %756 = vset.pattern.permute.xlu0 0
      %757 = vperm.xlu0 %756, %v591
      %v758 = vpop.permute.xlu0 %757
      %761 = vset.pattern.permute.xlu0 0
      %762 = vperm.xlu0 %761, %v592
      %v763 = vpop.permute.xlu0 %762
      %766 = vset.pattern.permute.xlu0 0
      %767 = vperm.xlu0 %766, %v593
      %v768 = vpop.permute.xlu0 %767
      %771 = vset.pattern.permute.xlu0 0
      %772 = vperm.xlu0 %771, %v594
      %v773 = vpop.permute.xlu0 %772
      %776 = vset.pattern.permute.xlu0 0
      %777 = vperm.xlu0 %776, %v595
      %v778 = vpop.permute.xlu0 %777
      %781 = vset.pattern.permute.xlu0 0
      %782 = vperm.xlu0 %781, %v596
      %v783 = vpop.permute.xlu0 %782
      %786 = vset.pattern.permute.xlu0 0
      %787 = vperm.xlu0 %786, %v597
      %v788 = vpop.permute.xlu0 %787
      %791 = vset.pattern.permute.xlu0 0
      %792 = vperm.xlu0 %791, %v598
      %v793 = vpop.permute.xlu0 %792
      %796 = vset.pattern.permute.xlu0 0
      %797 = vperm.xlu0 %796, %v599
      %v798 = vpop.permute.xlu0 %797
      %801 = vset.pattern.permute.xlu0 0
      %802 = vperm.xlu0 %801, %v600
      %v803 = vpop.permute.xlu0 %802
      %806 = vset.pattern.permute.xlu0 0
      %807 = vperm.xlu0 %806, %v601
      %v808 = vpop.permute.xlu0 %807
      %811 = vset.pattern.permute.xlu0 0
      %812 = vperm.xlu0 %811, %v602
      %v813 = vpop.permute.xlu0 %812
      %816 = vset.pattern.permute.xlu0 0
      %817 = vperm.xlu0 %816, %v603
      %v818 = vpop.permute.xlu0 %817
      %821 = vset.pattern.permute.xlu0 0
      %822 = vperm.xlu0 %821, %v604
      %v823 = vpop.permute.xlu0 %822
      %826 = vset.pattern.permute.xlu0 0
      %827 = vperm.xlu0 %826, %v605
      %v828 = vpop.permute.xlu0 %827
      %831 = vset.pattern.permute.xlu0 0
      %832 = vperm.xlu0 %831, %v606
      %v833 = vpop.permute.xlu0 %832
      %836 = vset.pattern.permute.xlu0 0
      %837 = vperm.xlu0 %836, %v607
      %v838 = vpop.permute.xlu0 %837
      %841 = vset.pattern.permute.xlu0 0
      %842 = vperm.xlu0 %841, %v608
      %v843 = vpop.permute.xlu0 %842
      %846 = vset.pattern.permute.xlu0 0
      %847 = vperm.xlu0 %846, %v609
      %v848 = vpop.permute.xlu0 %847
      %851 = vset.pattern.permute.xlu0 0
      %852 = vperm.xlu0 %851, %v610
      %v853 = vpop.permute.xlu0 %852
      %856 = vset.pattern.permute.xlu0 0
      %857 = vperm.xlu0 %856, %v611
      %v858 = vpop.permute.xlu0 %857
      %861 = vset.pattern.permute.xlu0 0
      %862 = vperm.xlu0 %861, %v612
      %v863 = vpop.permute.xlu0 %862
      %866 = vset.pattern.permute.xlu0 0
      %867 = vperm.xlu0 %866, %v613
      %v868 = vpop.permute.xlu0 %867
      %871 = vset.pattern.permute.xlu0 0
      %872 = vperm.xlu0 %871, %v614
      %v873 = vpop.permute.xlu0 %872
      %876 = vset.pattern.permute.xlu0 0
      %877 = vperm.xlu0 %876, %v615
      %v878 = vpop.permute.xlu0 %877
      %881 = vset.pattern.permute.xlu0 0
      %882 = vperm.xlu0 %881, %v616
      %v883 = vpop.permute.xlu0 %882
      %886 = vset.pattern.permute.xlu0 0
      %887 = vperm.xlu0 %886, %v617
      %v888 = vpop.permute.xlu0 %887
      %891 = vset.pattern.permute.xlu0 0
      %892 = vperm.xlu0 %891, %v618
      %v893 = vpop.permute.xlu0 %892
      %896 = vset.pattern.permute.xlu0 0
      %897 = vperm.xlu0 %896, %v619
      %v898 = vpop.permute.xlu0 %897
      %901 = vset.pattern.permute.xlu0 0
      %902 = vperm.xlu0 %901, %v620
      %v903 = vpop.permute.xlu0 %902
      %906 = vset.pattern.permute.xlu0 0
      %907 = vperm.xlu0 %906, %v621
      %v908 = vpop.permute.xlu0 %907
      %911 = vset.pattern.permute.xlu0 0
      %912 = vperm.xlu0 %911, %v622
      %v913 = vpop.permute.xlu0 %912
      %916 = vset.pattern.permute.xlu0 0
      %917 = vperm.xlu0 %916, %v623
      %v918 = vpop.permute.xlu0 %917
      %921 = vset.pattern.permute.xlu0 0
      %922 = vperm.xlu0 %921, %v624
      %v923 = vpop.permute.xlu0 %922
      %926 = vset.pattern.permute.xlu0 0
      %927 = vperm.xlu0 %926, %v625
      %v928 = vpop.permute.xlu0 %927
      %931 = vset.pattern.permute.xlu0 0
      %932 = vperm.xlu0 %931, %v626
      %v933 = vpop.permute.xlu0 %932
      %936 = vset.pattern.permute.xlu0 0
      %937 = vperm.xlu0 %936, %v627
      %v938 = vpop.permute.xlu0 %937
      %941 = vset.pattern.permute.xlu0 0
      %942 = vperm.xlu0 %941, %v628
      %v943 = vpop.permute.xlu0 %942
      %946 = vset.pattern.permute.xlu0 0
      %947 = vperm.xlu0 %946, %v629
      %v948 = vpop.permute.xlu0 %947
      %v1142 = vunpack.c.l.b16 %v374
      %v1143 = vunpack.c.h.b16 %v374
      %v1144 = vunpack.c.l.b16 %v375
      %v1145 = vunpack.c.h.b16 %v375
      %v1146 = vunpack.c.l.b16 %v376
      %v1147 = vunpack.c.l.b16 %v377
      %v1148 = vunpack.c.h.b16 %v377
      %v1149 = vunpack.c.l.b16 %v378
      %v1150 = vunpack.c.h.b16 %v378
      %v1151 = vunpack.c.l.b16 %v379
      %v1152 = vunpack.c.l.b16 %v380
      %v1153 = vunpack.c.h.b16 %v380
      %v1154 = vunpack.c.l.b16 %v381
      %v1155 = vunpack.c.h.b16 %v381
      %v1156 = vunpack.c.l.b16 %v382
      %v1157 = vunpack.c.l.b16 %v383
      %v1158 = vunpack.c.h.b16 %v383
      %v1159 = vunpack.c.l.b16 %v384
      %v1160 = vunpack.c.h.b16 %v384
      %v1161 = vunpack.c.l.b16 %v385
      %v1162 = vunpack.c.l.b16 %v386
      %v1163 = vunpack.c.h.b16 %v386
      %v1164 = vunpack.c.l.b16 %v387
      %v1165 = vunpack.c.h.b16 %v387
      %v1166 = vunpack.c.l.b16 %v388
      %v1167 = vunpack.c.l.b16 %v389
      %v1168 = vunpack.c.h.b16 %v389
      %v1169 = vunpack.c.l.b16 %v390
      %v1170 = vunpack.c.h.b16 %v390
      %v1171 = vunpack.c.l.b16 %v391
      %v1172 = vunpack.c.l.b16 %v392
      %v1173 = vunpack.c.h.b16 %v392
      %v1174 = vunpack.c.l.b16 %v393
      %v1175 = vunpack.c.h.b16 %v393
      %v1176 = vunpack.c.l.b16 %v394
      %v1177 = vunpack.c.l.b16 %v395
      %v1178 = vunpack.c.h.b16 %v395
      %v1179 = vunpack.c.l.b16 %v396
      %v1180 = vunpack.c.h.b16 %v396
      %v1181 = vunpack.c.l.b16 %v397
      %v1182 = vunpack.c.l.b16 %v398
      %v1183 = vunpack.c.h.b16 %v398
      %v1184 = vunpack.c.l.b16 %v399
      %v1185 = vunpack.c.h.b16 %v399
      %v1186 = vunpack.c.l.b16 %v400
      %v1187 = vunpack.c.l.b16 %v401
      %v1188 = vunpack.c.h.b16 %v401
      %v1189 = vunpack.c.l.b16 %v402
      %v1190 = vunpack.c.h.b16 %v402
      %v1191 = vunpack.c.l.b16 %v403
      %v1192 = vunpack.c.l.b16 %v404
      %v1193 = vunpack.c.h.b16 %v404
      %v1194 = vunpack.c.l.b16 %v405
      %v1195 = vunpack.c.h.b16 %v405
      %v1196 = vunpack.c.l.b16 %v406
      %v1197 = vunpack.c.l.b16 %v407
      %v1198 = vunpack.c.h.b16 %v407
      %v1199 = vunpack.c.l.b16 %v408
      %v1200 = vunpack.c.h.b16 %v408
      %v1201 = vunpack.c.l.b16 %v409
      %v1202 = vunpack.c.l.b16 %v410
      %v1203 = vunpack.c.h.b16 %v410
      %v1204 = vunpack.c.l.b16 %v411
      %v1205 = vunpack.c.h.b16 %v411
      %v1206 = vunpack.c.l.b16 %v412
      %v1207 = vunpack.c.l.b16 %v413
      %v1208 = vunpack.c.h.b16 %v413
      %v1209 = vunpack.c.l.b16 %v414
      %v1210 = vunpack.c.h.b16 %v414
      %v1211 = vunpack.c.l.b16 %v415
      %v1212 = vunpack.c.l.b16 %v416
      %v1213 = vunpack.c.h.b16 %v416
      %v1214 = vunpack.c.l.b16 %v417
      %v1215 = vunpack.c.h.b16 %v417
      %v1216 = vunpack.c.l.b16 %v418
      %v1217 = vunpack.c.l.b16 %v419
      %v1218 = vunpack.c.h.b16 %v419
      %v1219 = vunpack.c.l.b16 %v420
      %v1220 = vunpack.c.h.b16 %v420
      %v1221 = vunpack.c.l.b16 %v421
      %v1222 = vunpack.c.l.b16 %v422
      %v1223 = vunpack.c.h.b16 %v422
      %v1224 = vunpack.c.l.b16 %v423
      %v1225 = vunpack.c.h.b16 %v423
      %v1226 = vunpack.c.l.b16 %v424
      %v1227 = vunpack.c.l.b16 %v425
      %v1228 = vunpack.c.h.b16 %v425
      %v1229 = vunpack.c.l.b16 %v426
      %v1230 = vunpack.c.h.b16 %v426
      %v1231 = vunpack.c.l.b16 %v427
      %v1232 = vunpack.c.l.b16 %v428
      %v1233 = vunpack.c.h.b16 %v428
      %v1234 = vunpack.c.l.b16 %v429
      %v1235 = vunpack.c.h.b16 %v429
      %v1236 = vunpack.c.l.b16 %v430
      %v1237 = vunpack.c.l.b16 %v431
      %v1238 = vunpack.c.h.b16 %v431
      %v1239 = vunpack.c.l.b16 %v432
      %v1240 = vunpack.c.h.b16 %v432
      %v1241 = vunpack.c.l.b16 %v433
      %v1242 = vunpack.c.l.b16 %v434
      %v1243 = vunpack.c.h.b16 %v434
      %v1244 = vunpack.c.l.b16 %v435
      %v1245 = vunpack.c.h.b16 %v435
      %v1246 = vunpack.c.l.b16 %v436
      %v1247 = vunpack.c.l.b16 %v437
      %v1248 = vunpack.c.h.b16 %v437
      %v1249 = vunpack.c.l.b16 %v438
      %v1250 = vunpack.c.h.b16 %v438
      %v1251 = vunpack.c.l.b16 %v439
      %v1252 = vunpack.c.l.b16 %v440
      %v1253 = vunpack.c.h.b16 %v440
      %v1254 = vunpack.c.l.b16 %v441
      %v1255 = vunpack.c.h.b16 %v441
      %v1256 = vunpack.c.l.b16 %v442
      %v1257 = vunpack.c.l.b16 %v443
      %v1258 = vunpack.c.h.b16 %v443
      %v1259 = vunpack.c.l.b16 %v444
      %v1260 = vunpack.c.h.b16 %v444
      %v1261 = vunpack.c.l.b16 %v445
      %v1262 = vunpack.c.l.b16 %v446
      %v1263 = vunpack.c.h.b16 %v446
      %v1264 = vunpack.c.l.b16 %v447
      %v1265 = vunpack.c.h.b16 %v447
      %v1266 = vunpack.c.l.b16 %v448
      %v1267 = vunpack.c.l.b16 %v449
      %v1268 = vunpack.c.h.b16 %v449
      %v1269 = vunpack.c.l.b16 %v450
      %v1270 = vunpack.c.h.b16 %v450
      %v1271 = vunpack.c.l.b16 %v451
      %v1272 = vunpack.c.l.b16 %v452
      %v1273 = vunpack.c.h.b16 %v452
      %v1274 = vunpack.c.l.b16 %v453
      %v1275 = vunpack.c.h.b16 %v453
      %v1276 = vunpack.c.l.b16 %v454
      %v1277 = vunpack.c.l.b16 %v455
      %v1278 = vunpack.c.h.b16 %v455
      %v1279 = vunpack.c.l.b16 %v456
      %v1280 = vunpack.c.h.b16 %v456
      %v1281 = vunpack.c.l.b16 %v457
      %v1282 = vunpack.c.l.b16 %v458
      %v1283 = vunpack.c.h.b16 %v458
      %v1284 = vunpack.c.l.b16 %v459
      %v1285 = vunpack.c.h.b16 %v459
      %v1286 = vunpack.c.l.b16 %v460
      %v1287 = vunpack.c.l.b16 %v461
      %v1288 = vunpack.c.h.b16 %v461
      %v1289 = vunpack.c.l.b16 %v462
      %v1290 = vunpack.c.h.b16 %v462
      %v1291 = vunpack.c.l.b16 %v463
      %v1292 = vunpack.c.l.b16 %v464
      %v1293 = vunpack.c.h.b16 %v464
      %v1294 = vunpack.c.l.b16 %v465
      %v1295 = vunpack.c.h.b16 %v465
      %v1296 = vunpack.c.l.b16 %v466
      %v1297 = vunpack.c.l.b16 %v467
      %v1298 = vunpack.c.h.b16 %v467
      %v1299 = vunpack.c.l.b16 %v468
      %v1300 = vunpack.c.h.b16 %v468
      %v1301 = vunpack.c.l.b16 %v469
      %v1302 = vunpack.c.l.b16 %v470
      %v1303 = vunpack.c.h.b16 %v470
      %v1304 = vunpack.c.l.b16 %v471
      %v1305 = vunpack.c.h.b16 %v471
      %v1306 = vunpack.c.l.b16 %v472
      %v1307 = vunpack.c.l.b16 %v473
      %v1308 = vunpack.c.h.b16 %v473
      %v1309 = vunpack.c.l.b16 %v474
      %v1310 = vunpack.c.h.b16 %v474
      %v1311 = vunpack.c.l.b16 %v475
      %v1312 = vunpack.c.l.b16 %v476
      %v1313 = vunpack.c.h.b16 %v476
      %v1314 = vunpack.c.l.b16 %v477
      %v1315 = vunpack.c.h.b16 %v477
      %v1316 = vunpack.c.l.b16 %v478
      %v1317 = vunpack.c.l.b16 %v479
      %v1318 = vunpack.c.h.b16 %v479
      %v1319 = vunpack.c.l.b16 %v480
      %v1320 = vunpack.c.h.b16 %v480
      %v1321 = vunpack.c.l.b16 %v481
      %v1322 = vunpack.c.l.b16 %v482
      %v1323 = vunpack.c.h.b16 %v482
      %v1324 = vunpack.c.l.b16 %v483
      %v1325 = vunpack.c.h.b16 %v483
      %v1326 = vunpack.c.l.b16 %v484
      %v1327 = vunpack.c.l.b16 %v485
      %v1328 = vunpack.c.h.b16 %v485
      %v1329 = vunpack.c.l.b16 %v486
      %v1330 = vunpack.c.h.b16 %v486
      %v1331 = vunpack.c.l.b16 %v487
      %v1332 = vunpack.c.l.b16 %v488
      %v1333 = vunpack.c.h.b16 %v488
      %v1334 = vunpack.c.l.b16 %v489
      %v1335 = vunpack.c.h.b16 %v489
      %v1336 = vunpack.c.l.b16 %v490
      %v1337 = vunpack.c.l.b16 %v491
      %v1338 = vunpack.c.h.b16 %v491
      %v1339 = vunpack.c.l.b16 %v492
      %v1340 = vunpack.c.h.b16 %v492
      %v1341 = vunpack.c.l.b16 %v493
      %v1342 = vunpack.c.l.b16 %v494
      %v1343 = vunpack.c.h.b16 %v494
      %v1344 = vunpack.c.l.b16 %v495
      %v1345 = vunpack.c.h.b16 %v495
      %v1346 = vunpack.c.l.b16 %v496
      %v1347 = vunpack.c.l.b16 %v497
      %v1348 = vunpack.c.h.b16 %v497
      %v1349 = vunpack.c.l.b16 %v498
      %v1350 = vunpack.c.h.b16 %v498
      %v1351 = vunpack.c.l.b16 %v499
      %v1352 = vunpack.c.l.b16 %v500
      %v1353 = vunpack.c.h.b16 %v500
      %v1354 = vunpack.c.l.b16 %v501
      %v1355 = vunpack.c.h.b16 %v501
      %v1356 = vunpack.c.l.b16 %v502
      %v1357 = vunpack.c.l.b16 %v503
      %v1358 = vunpack.c.h.b16 %v503
      %v1359 = vunpack.c.l.b16 %v504
      %v1360 = vunpack.c.h.b16 %v504
      %v1361 = vunpack.c.l.b16 %v505
      %v1362 = vunpack.c.l.b16 %v506
      %v1363 = vunpack.c.h.b16 %v506
      %v1364 = vunpack.c.l.b16 %v507
      %v1365 = vunpack.c.h.b16 %v507
      %v1366 = vunpack.c.l.b16 %v508
      %v1367 = vunpack.c.l.b16 %v509
      %v1368 = vunpack.c.h.b16 %v509
      %v1369 = vunpack.c.l.b16 %v510
      %v1370 = vunpack.c.h.b16 %v510
      %v1371 = vunpack.c.l.b16 %v511
      %v1372 = vunpack.c.l.b16 %v512
      %v1373 = vunpack.c.h.b16 %v512
      %v1374 = vunpack.c.l.b16 %v513
      %v1375 = vunpack.c.h.b16 %v513
      %v1376 = vunpack.c.l.b16 %v514
      %v1377 = vunpack.c.l.b16 %v515
      %v1378 = vunpack.c.h.b16 %v515
      %v1379 = vunpack.c.l.b16 %v516
      %v1380 = vunpack.c.h.b16 %v516
      %v1381 = vunpack.c.l.b16 %v517
      %v1382 = vunpack.c.l.b16 %v518
      %v1383 = vunpack.c.h.b16 %v518
      %v1384 = vunpack.c.l.b16 %v519
      %v1385 = vunpack.c.h.b16 %v519
      %v1386 = vunpack.c.l.b16 %v520
      %v1387 = vunpack.c.l.b16 %v521
      %v1388 = vunpack.c.h.b16 %v521
      %v1389 = vunpack.c.l.b16 %v522
      %v1390 = vunpack.c.h.b16 %v522
      %v1391 = vunpack.c.l.b16 %v523
      %v1392 = vunpack.c.l.b16 %v524
      %v1393 = vunpack.c.h.b16 %v524
      %v1394 = vunpack.c.l.b16 %v525
      %v1395 = vunpack.c.h.b16 %v525
      %v1396 = vunpack.c.l.b16 %v526
      %v1397 = vunpack.c.l.b16 %v527
      %v1398 = vunpack.c.h.b16 %v527
      %v1399 = vunpack.c.l.b16 %v528
      %v1400 = vunpack.c.h.b16 %v528
      %v1401 = vunpack.c.l.b16 %v529
      %v1402 = vunpack.c.l.b16 %v530
      %v1403 = vunpack.c.h.b16 %v530
      %v1404 = vunpack.c.l.b16 %v531
      %v1405 = vunpack.c.h.b16 %v531
      %v1406 = vunpack.c.l.b16 %v532
      %v1407 = vunpack.c.l.b16 %v533
      %v1408 = vunpack.c.h.b16 %v533
      %v1409 = vunpack.c.l.b16 %v534
      %v1410 = vunpack.c.h.b16 %v534
      %v1411 = vunpack.c.l.b16 %v535
      %v1412 = vunpack.c.l.b16 %v536
      %v1413 = vunpack.c.h.b16 %v536
      %v1414 = vunpack.c.l.b16 %v537
      %v1415 = vunpack.c.h.b16 %v537
      %v1416 = vunpack.c.l.b16 %v538
      %v1417 = vunpack.c.l.b16 %v539
      %v1418 = vunpack.c.h.b16 %v539
      %v1419 = vunpack.c.l.b16 %v540
      %v1420 = vunpack.c.h.b16 %v540
      %v1421 = vunpack.c.l.b16 %v541
      %v1422 = vunpack.c.l.b16 %v542
      %v1423 = vunpack.c.h.b16 %v542
      %v1424 = vunpack.c.l.b16 %v543
      %v1425 = vunpack.c.h.b16 %v543
      %v1426 = vunpack.c.l.b16 %v544
      %v1427 = vunpack.c.l.b16 %v545
      %v1428 = vunpack.c.h.b16 %v545
      %v1429 = vunpack.c.l.b16 %v546
      %v1430 = vunpack.c.h.b16 %v546
      %v1431 = vunpack.c.l.b16 %v547
      %v1432 = vunpack.c.l.b16 %v548
      %v1433 = vunpack.c.h.b16 %v548
      %v1434 = vunpack.c.l.b16 %v549
      %v1435 = vunpack.c.h.b16 %v549
      %v1436 = vunpack.c.l.b16 %v550
      %v1437 = vunpack.c.l.b16 %v551
      %v1438 = vunpack.c.h.b16 %v551
      %v1439 = vunpack.c.l.b16 %v552
      %v1440 = vunpack.c.h.b16 %v552
      %v1441 = vunpack.c.l.b16 %v553
      %v1442 = vunpack.c.l.b16 %v554
      %v1443 = vunpack.c.h.b16 %v554
      %v1444 = vunpack.c.l.b16 %v555
      %v1445 = vunpack.c.h.b16 %v555
      %v1446 = vunpack.c.l.b16 %v556
      %v1447 = vunpack.c.l.b16 %v557
      %v1448 = vunpack.c.h.b16 %v557
      %v1449 = vunpack.c.l.b16 %v558
      %v1450 = vunpack.c.h.b16 %v558
      %v1451 = vunpack.c.l.b16 %v559
      %v1452 = vunpack.c.l.b16 %v560
      %v1453 = vunpack.c.h.b16 %v560
      %v1454 = vunpack.c.l.b16 %v561
      %v1455 = vunpack.c.h.b16 %v561
      %v1456 = vunpack.c.l.b16 %v562
      %v1457 = vunpack.c.l.b16 %v563
      %v1458 = vunpack.c.h.b16 %v563
      %v1459 = vunpack.c.l.b16 %v564
      %v1460 = vunpack.c.h.b16 %v564
      %v1461 = vunpack.c.l.b16 %v565
      %v1462 = vpack.c.b16 %v1147, %v1142
      %v1463 = vpack.c.b16 %v1148, %v1143
      %v1464 = vpack.c.b16 %v1149, %v1144
      %v1465 = vpack.c.b16 %v1150, %v1145
      %v1466 = vpack.c.b16 %v1151, %v1146
      %v1467 = vpack.c.b16 %v1157, %v1152
      %v1468 = vpack.c.b16 %v1158, %v1153
      %v1469 = vpack.c.b16 %v1159, %v1154
      %v1470 = vpack.c.b16 %v1160, %v1155
      %v1471 = vpack.c.b16 %v1161, %v1156
      %v1472 = vpack.c.b16 %v1167, %v1162
      %v1473 = vpack.c.b16 %v1168, %v1163
      %v1474 = vpack.c.b16 %v1169, %v1164
      %v1475 = vpack.c.b16 %v1170, %v1165
      %v1476 = vpack.c.b16 %v1171, %v1166
      %v1477 = vpack.c.b16 %v1177, %v1172
      %v1478 = vpack.c.b16 %v1178, %v1173
      %v1479 = vpack.c.b16 %v1179, %v1174
      %v1480 = vpack.c.b16 %v1180, %v1175
      %v1481 = vpack.c.b16 %v1181, %v1176
      %v1482 = vpack.c.b16 %v1187, %v1182
      %v1483 = vpack.c.b16 %v1188, %v1183
      %v1484 = vpack.c.b16 %v1189, %v1184
      %v1485 = vpack.c.b16 %v1190, %v1185
      %v1486 = vpack.c.b16 %v1191, %v1186
      %v1487 = vpack.c.b16 %v1197, %v1192
      %v1488 = vpack.c.b16 %v1198, %v1193
      %v1489 = vpack.c.b16 %v1199, %v1194
      %v1490 = vpack.c.b16 %v1200, %v1195
      %v1491 = vpack.c.b16 %v1201, %v1196
      %v1492 = vpack.c.b16 %v1207, %v1202
      %v1493 = vpack.c.b16 %v1208, %v1203
      %v1494 = vpack.c.b16 %v1209, %v1204
      %v1495 = vpack.c.b16 %v1210, %v1205
      %v1496 = vpack.c.b16 %v1211, %v1206
      %v1497 = vpack.c.b16 %v1217, %v1212
      %v1498 = vpack.c.b16 %v1218, %v1213
      %v1499 = vpack.c.b16 %v1219, %v1214
      %v1500 = vpack.c.b16 %v1220, %v1215
      %v1501 = vpack.c.b16 %v1221, %v1216
      %v1502 = vpack.c.b16 %v1227, %v1222
      %v1503 = vpack.c.b16 %v1228, %v1223
      %v1504 = vpack.c.b16 %v1229, %v1224
      %v1505 = vpack.c.b16 %v1230, %v1225
      %v1506 = vpack.c.b16 %v1231, %v1226
      %v1507 = vpack.c.b16 %v1237, %v1232
      %v1508 = vpack.c.b16 %v1238, %v1233
      %v1509 = vpack.c.b16 %v1239, %v1234
      %v1510 = vpack.c.b16 %v1240, %v1235
      %v1511 = vpack.c.b16 %v1241, %v1236
      %v1512 = vpack.c.b16 %v1247, %v1242
      %v1513 = vpack.c.b16 %v1248, %v1243
      %v1514 = vpack.c.b16 %v1249, %v1244
      %v1515 = vpack.c.b16 %v1250, %v1245
      %v1516 = vpack.c.b16 %v1251, %v1246
      %v1517 = vpack.c.b16 %v1257, %v1252
      %v1518 = vpack.c.b16 %v1258, %v1253
      %v1519 = vpack.c.b16 %v1259, %v1254
      %v1520 = vpack.c.b16 %v1260, %v1255
      %v1521 = vpack.c.b16 %v1261, %v1256
      %v1522 = vpack.c.b16 %v1267, %v1262
      %v1523 = vpack.c.b16 %v1268, %v1263
      %v1524 = vpack.c.b16 %v1269, %v1264
      %v1525 = vpack.c.b16 %v1270, %v1265
      %v1526 = vpack.c.b16 %v1271, %v1266
      %v1527 = vpack.c.b16 %v1277, %v1272
      %v1528 = vpack.c.b16 %v1278, %v1273
      %v1529 = vpack.c.b16 %v1279, %v1274
      %v1530 = vpack.c.b16 %v1280, %v1275
      %v1531 = vpack.c.b16 %v1281, %v1276
      %v1532 = vpack.c.b16 %v1287, %v1282
      %v1533 = vpack.c.b16 %v1288, %v1283
      %v1534 = vpack.c.b16 %v1289, %v1284
      %v1535 = vpack.c.b16 %v1290, %v1285
      %v1536 = vpack.c.b16 %v1291, %v1286
      %v1537 = vpack.c.b16 %v1297, %v1292
      %v1538 = vpack.c.b16 %v1298, %v1293
      %v1539 = vpack.c.b16 %v1299, %v1294
      %v1540 = vpack.c.b16 %v1300, %v1295
      %v1541 = vpack.c.b16 %v1301, %v1296
      %v1542 = vpack.c.b16 %v1307, %v1302
      %v1543 = vpack.c.b16 %v1308, %v1303
      %v1544 = vpack.c.b16 %v1309, %v1304
      %v1545 = vpack.c.b16 %v1310, %v1305
      %v1546 = vpack.c.b16 %v1311, %v1306
      %v1547 = vpack.c.b16 %v1317, %v1312
      %v1548 = vpack.c.b16 %v1318, %v1313
      %v1549 = vpack.c.b16 %v1319, %v1314
      %v1550 = vpack.c.b16 %v1320, %v1315
      %v1551 = vpack.c.b16 %v1321, %v1316
      %v1552 = vpack.c.b16 %v1327, %v1322
      %v1553 = vpack.c.b16 %v1328, %v1323
      %v1554 = vpack.c.b16 %v1329, %v1324
      %v1555 = vpack.c.b16 %v1330, %v1325
      %v1556 = vpack.c.b16 %v1331, %v1326
      %v1557 = vpack.c.b16 %v1337, %v1332
      %v1558 = vpack.c.b16 %v1338, %v1333
      %v1559 = vpack.c.b16 %v1339, %v1334
      %v1560 = vpack.c.b16 %v1340, %v1335
      %v1561 = vpack.c.b16 %v1341, %v1336
      %v1562 = vpack.c.b16 %v1347, %v1342
      %v1563 = vpack.c.b16 %v1348, %v1343
      %v1564 = vpack.c.b16 %v1349, %v1344
      %v1565 = vpack.c.b16 %v1350, %v1345
      %v1566 = vpack.c.b16 %v1351, %v1346
      %v1567 = vpack.c.b16 %v1357, %v1352
      %v1568 = vpack.c.b16 %v1358, %v1353
      %v1569 = vpack.c.b16 %v1359, %v1354
      %v1570 = vpack.c.b16 %v1360, %v1355
      %v1571 = vpack.c.b16 %v1361, %v1356
      %v1572 = vpack.c.b16 %v1367, %v1362
      %v1573 = vpack.c.b16 %v1368, %v1363
      %v1574 = vpack.c.b16 %v1369, %v1364
      %v1575 = vpack.c.b16 %v1370, %v1365
      %v1576 = vpack.c.b16 %v1371, %v1366
      %v1577 = vpack.c.b16 %v1377, %v1372
      %v1578 = vpack.c.b16 %v1378, %v1373
      %v1579 = vpack.c.b16 %v1379, %v1374
      %v1580 = vpack.c.b16 %v1380, %v1375
      %v1581 = vpack.c.b16 %v1381, %v1376
      %v1582 = vpack.c.b16 %v1387, %v1382
      %v1583 = vpack.c.b16 %v1388, %v1383
      %v1584 = vpack.c.b16 %v1389, %v1384
      %v1585 = vpack.c.b16 %v1390, %v1385
      %v1586 = vpack.c.b16 %v1391, %v1386
      %v1587 = vpack.c.b16 %v1397, %v1392
      %v1588 = vpack.c.b16 %v1398, %v1393
      %v1589 = vpack.c.b16 %v1399, %v1394
      %v1590 = vpack.c.b16 %v1400, %v1395
      %v1591 = vpack.c.b16 %v1401, %v1396
      %v1592 = vpack.c.b16 %v1407, %v1402
      %v1593 = vpack.c.b16 %v1408, %v1403
      %v1594 = vpack.c.b16 %v1409, %v1404
      %v1595 = vpack.c.b16 %v1410, %v1405
      %v1596 = vpack.c.b16 %v1411, %v1406
      %v1597 = vpack.c.b16 %v1417, %v1412
      %v1598 = vpack.c.b16 %v1418, %v1413
      %v1599 = vpack.c.b16 %v1419, %v1414
      %v1600 = vpack.c.b16 %v1420, %v1415
      %v1601 = vpack.c.b16 %v1421, %v1416
      %v1602 = vpack.c.b16 %v1427, %v1422
      %v1603 = vpack.c.b16 %v1428, %v1423
      %v1604 = vpack.c.b16 %v1429, %v1424
      %v1605 = vpack.c.b16 %v1430, %v1425
      %v1606 = vpack.c.b16 %v1431, %v1426
      %v1607 = vpack.c.b16 %v1437, %v1432
      %v1608 = vpack.c.b16 %v1438, %v1433
      %v1609 = vpack.c.b16 %v1439, %v1434
      %v1610 = vpack.c.b16 %v1440, %v1435
      %v1611 = vpack.c.b16 %v1441, %v1436
      %v1612 = vpack.c.b16 %v1447, %v1442
      %v1613 = vpack.c.b16 %v1448, %v1443
      %v1614 = vpack.c.b16 %v1449, %v1444
      %v1615 = vpack.c.b16 %v1450, %v1445
      %v1616 = vpack.c.b16 %v1451, %v1446
      %v1617 = vpack.c.b16 %v1457, %v1452
      %v1618 = vpack.c.b16 %v1458, %v1453
      %v1619 = vpack.c.b16 %v1459, %v1454
      %v1620 = vpack.c.b16 %v1460, %v1455
      %v1621 = vpack.c.b16 %v1461, %v1456
      %v1815 = vunpack.c.l.b16 %v309
      %v1816 = vunpack.c.l.b16 %v310
      %v1817 = vunpack.c.l.b16 %v311
      %v1818 = vunpack.c.l.b16 %v312
      %v1819 = vunpack.c.l.b16 %v313
      %v1820 = vunpack.c.l.b16 %v314
      %v1821 = vunpack.c.l.b16 %v315
      %v1822 = vunpack.c.l.b16 %v316
      %v1823 = vunpack.c.l.b16 %v317
      %v1824 = vunpack.c.l.b16 %v318
      %v1825 = vunpack.c.l.b16 %v319
      %v1826 = vunpack.c.l.b16 %v320
      %v1827 = vunpack.c.l.b16 %v321
      %v1828 = vunpack.c.l.b16 %v322
      %v1829 = vunpack.c.l.b16 %v323
      %v1830 = vunpack.c.l.b16 %v324
      %v1831 = vunpack.c.l.b16 %v325
      %v1832 = vunpack.c.l.b16 %v326
      %v1833 = vunpack.c.l.b16 %v327
      %v1834 = vunpack.c.l.b16 %v328
      %v1835 = vunpack.c.l.b16 %v329
      %v1836 = vunpack.c.l.b16 %v330
      %v1837 = vunpack.c.l.b16 %v331
      %v1838 = vunpack.c.l.b16 %v332
      %v1839 = vunpack.c.l.b16 %v333
      %v1840 = vunpack.c.l.b16 %v334
      %v1841 = vunpack.c.l.b16 %v335
      %v1842 = vunpack.c.l.b16 %v336
      %v1843 = vunpack.c.l.b16 %v337
      %v1844 = vunpack.c.l.b16 %v338
      %v1845 = vunpack.c.l.b16 %v339
      %v1846 = vunpack.c.l.b16 %v340
      %v1847 = vunpack.c.l.b16 %v341
      %v1848 = vunpack.c.l.b16 %v342
      %v1849 = vunpack.c.l.b16 %v343
      %v1850 = vunpack.c.l.b16 %v344
      %v1851 = vunpack.c.l.b16 %v345
      %v1852 = vunpack.c.l.b16 %v346
      %v1853 = vunpack.c.l.b16 %v347
      %v1854 = vunpack.c.l.b16 %v348
      %v1855 = vunpack.c.l.b16 %v349
      %v1856 = vunpack.c.l.b16 %v350
      %v1857 = vunpack.c.l.b16 %v351
      %v1858 = vunpack.c.l.b16 %v352
      %v1859 = vunpack.c.l.b16 %v353
      %v1860 = vunpack.c.l.b16 %v354
      %v1861 = vunpack.c.l.b16 %v355
      %v1862 = vunpack.c.l.b16 %v356
      %v1863 = vunpack.c.l.b16 %v357
      %v1864 = vunpack.c.l.b16 %v358
      %v1865 = vunpack.c.l.b16 %v359
      %v1866 = vunpack.c.l.b16 %v360
      %v1867 = vunpack.c.l.b16 %v361
      %v1868 = vunpack.c.l.b16 %v362
      %v1869 = vunpack.c.l.b16 %v363
      %v1870 = vunpack.c.l.b16 %v364
      %v1871 = vunpack.c.l.b16 %v365
      %v1872 = vunpack.c.l.b16 %v366
      %v1873 = vunpack.c.l.b16 %v367
      %v1874 = vunpack.c.l.b16 %v368
      %v1875 = vunpack.c.l.b16 %v369
      %v1876 = vunpack.c.l.b16 %v370
      %v1877 = vunpack.c.l.b16 %v371
      %v1878 = vunpack.c.l.b16 %v372
      %v1879 = vunpack.c.l.b16 %v373
      %v1880 = vpack.c.b16 %v1816, %v1815
      %v1881 = vpack.c.b16 %v1818, %v1817
      %v1882 = vpack.c.b16 %v1820, %v1819
      %v1883 = vpack.c.b16 %v1822, %v1821
      %v1884 = vpack.c.b16 %v1824, %v1823
      %v1885 = vpack.c.b16 %v1826, %v1825
      %v1886 = vpack.c.b16 %v1828, %v1827
      %v1887 = vpack.c.b16 %v1830, %v1829
      %v1888 = vpack.c.b16 %v1832, %v1831
      %v1889 = vpack.c.b16 %v1834, %v1833
      %v1890 = vpack.c.b16 %v1836, %v1835
      %v1891 = vpack.c.b16 %v1838, %v1837
      %v1892 = vpack.c.b16 %v1840, %v1839
      %v1893 = vpack.c.b16 %v1842, %v1841
      %v1894 = vpack.c.b16 %v1844, %v1843
      %v1895 = vpack.c.b16 %v1846, %v1845
      %v1896 = vpack.c.b16 %v1848, %v1847
      %v1897 = vpack.c.b16 %v1850, %v1849
      %v1898 = vpack.c.b16 %v1852, %v1851
      %v1899 = vpack.c.b16 %v1854, %v1853
      %v1900 = vpack.c.b16 %v1856, %v1855
      %v1901 = vpack.c.b16 %v1858, %v1857
      %v1902 = vpack.c.b16 %v1860, %v1859
      %v1903 = vpack.c.b16 %v1862, %v1861
      %v1904 = vpack.c.b16 %v1864, %v1863
      %v1905 = vpack.c.b16 %v1866, %v1865
      %v1906 = vpack.c.b16 %v1868, %v1867
      %v1907 = vpack.c.b16 %v1870, %v1869
      %v1908 = vpack.c.b16 %v1872, %v1871
      %v1909 = vpack.c.b16 %v1874, %v1873
      %v1910 = vpack.c.b16 %v1876, %v1875
      %v1911 = vpack.c.b16 %v1878, %v1877
      %v1912 = vpack.c.b16 %v1879, %v1879
      %vm1945 = vcmask 15360
      %v1947 = vsel %vm1945, %v1466, 0
      %v1950 = vsel %vm1945, %v1471, 0
      %v1953 = vsel %vm1945, %v1476, 0
      %v1956 = vsel %vm1945, %v1481, 0
      %v1959 = vsel %vm1945, %v1486, 0
      %v1962 = vsel %vm1945, %v1491, 0
      %v1965 = vsel %vm1945, %v1496, 0
      %v1968 = vsel %vm1945, %v1501, 0
      %v1971 = vsel %vm1945, %v1506, 0
      %v1974 = vsel %vm1945, %v1511, 0
      %v1977 = vsel %vm1945, %v1516, 0
      %v1980 = vsel %vm1945, %v1521, 0
      %v1983 = vsel %vm1945, %v1526, 0
      %v1986 = vsel %vm1945, %v1531, 0
      %v1989 = vsel %vm1945, %v1536, 0
      %v1992 = vsel %vm1945, %v1541, 0
      %v1995 = vsel %vm1945, %v1546, 0
      %v1998 = vsel %vm1945, %v1551, 0
      %v2001 = vsel %vm1945, %v1556, 0
      %v2004 = vsel %vm1945, %v1561, 0
      %v2007 = vsel %vm1945, %v1566, 0
      %v2010 = vsel %vm1945, %v1571, 0
      %v2013 = vsel %vm1945, %v1576, 0
      %v2016 = vsel %vm1945, %v1581, 0
      %v2019 = vsel %vm1945, %v1586, 0
      %v2022 = vsel %vm1945, %v1591, 0
      %v2025 = vsel %vm1945, %v1596, 0
      %v2028 = vsel %vm1945, %v1601, 0
      %v2031 = vsel %vm1945, %v1606, 0
      %v2034 = vsel %vm1945, %v1611, 0
      %v2037 = vsel %vm1945, %v1616, 0
      %v2040 = vsel %vm1945, %v1621, 0
      %vm2042 = vcmask 1040384
      %v2044 = vsel %vm2042, %v1912, 0
      %2046 = vmatpush.bf16.msra.mxu0 %v1887
      %2047 = vmatpush.bf16.msra.mxu0 %v1886
      %2048 = vmatpush.bf16.msra.mxu0 %v1885
      %2049 = vmatpush.bf16.msra.mxu0 %v1884
      %2050 = vmatpush.bf16.msra.mxu0 %v1883
      %2051 = vmatpush.bf16.msra.mxu0 %v1882
      %2052 = vmatpush.bf16.msra.mxu0 %v1881
      %2053 = vmatpush.bf16.msra.mxu0 %v1880
      %2054 = vmatmul.bf16.gmra.mxu0 %v1462
      %v2055 = vpop.f32.mrf.mxu0
      %v2056 = vadd.f32 %v633, %v2055
      %v2057 = vpop.f32.mrf.mxu0
      %v2058 = vadd.f32 %v638, %v2057
      %2059 = vmatmul.bf16.gmra.mxu0 %v1467
      %v2060 = vpop.f32.mrf.mxu0
      %v2061 = vadd.f32 %v643, %v2060
      %v2062 = vpop.f32.mrf.mxu0
      %v2063 = vadd.f32 %v648, %v2062
      %2064 = vmatmul.bf16.gmra.mxu0 %v1472
      %v2065 = vpop.f32.mrf.mxu0
      %v2066 = vadd.f32 %v653, %v2065
      %v2067 = vpop.f32.mrf.mxu0
      %v2068 = vadd.f32 %v658, %v2067
      %2069 = vmatmul.bf16.gmra.mxu0 %v1477
      %v2070 = vpop.f32.mrf.mxu0
      %v2071 = vadd.f32 %v663, %v2070
      %v2072 = vpop.f32.mrf.mxu0
      %v2073 = vadd.f32 %v668, %v2072
      %2074 = vmatmul.bf16.gmra.mxu0 %v1482
      %v2075 = vpop.f32.mrf.mxu0
      %v2076 = vadd.f32 %v673, %v2075
      %v2077 = vpop.f32.mrf.mxu0
      %v2078 = vadd.f32 %v678, %v2077
      %2079 = vmatmul.bf16.gmra.mxu0 %v1487
      %v2080 = vpop.f32.mrf.mxu0
      %v2081 = vadd.f32 %v683, %v2080
      %v2082 = vpop.f32.mrf.mxu0
      %v2083 = vadd.f32 %v688, %v2082
      %2084 = vmatmul.bf16.gmra.mxu0 %v1492
      %v2085 = vpop.f32.mrf.mxu0
      %v2086 = vadd.f32 %v693, %v2085
      %v2087 = vpop.f32.mrf.mxu0
      %v2088 = vadd.f32 %v698, %v2087
      %2089 = vmatmul.bf16.gmra.mxu0 %v1497
      %v2090 = vpop.f32.mrf.mxu0
      %v2091 = vadd.f32 %v703, %v2090
      %v2092 = vpop.f32.mrf.mxu0
      %v2093 = vadd.f32 %v708, %v2092
      %2094 = vmatmul.bf16.gmra.mxu0 %v1502
      %v2095 = vpop.f32.mrf.mxu0
      %v2096 = vadd.f32 %v713, %v2095
      %v2097 = vpop.f32.mrf.mxu0
      %v2098 = vadd.f32 %v718, %v2097
      %2099 = vmatmul.bf16.gmra.mxu0 %v1507
      %v2100 = vpop.f32.mrf.mxu0
      %v2101 = vadd.f32 %v723, %v2100
      %v2102 = vpop.f32.mrf.mxu0
      %v2103 = vadd.f32 %v728, %v2102
      %2104 = vmatmul.bf16.gmra.mxu0 %v1512
      %v2105 = vpop.f32.mrf.mxu0
      %v2106 = vadd.f32 %v733, %v2105
      %v2107 = vpop.f32.mrf.mxu0
      %v2108 = vadd.f32 %v738, %v2107
      %2109 = vmatmul.bf16.gmra.mxu0 %v1517
      %v2110 = vpop.f32.mrf.mxu0
      %v2111 = vadd.f32 %v743, %v2110
      %v2112 = vpop.f32.mrf.mxu0
      %v2113 = vadd.f32 %v748, %v2112
      %2114 = vmatmul.bf16.gmra.mxu0 %v1522
      %v2115 = vpop.f32.mrf.mxu0
      %v2116 = vadd.f32 %v753, %v2115
      %v2117 = vpop.f32.mrf.mxu0
      %v2118 = vadd.f32 %v758, %v2117
      %2119 = vmatmul.bf16.gmra.mxu0 %v1527
      %v2120 = vpop.f32.mrf.mxu0
      %v2121 = vadd.f32 %v763, %v2120
      %v2122 = vpop.f32.mrf.mxu0
      %v2123 = vadd.f32 %v768, %v2122
      %2124 = vmatmul.bf16.gmra.mxu0 %v1532
      %v2125 = vpop.f32.mrf.mxu0
      %v2126 = vadd.f32 %v773, %v2125
      %v2127 = vpop.f32.mrf.mxu0
      %v2128 = vadd.f32 %v778, %v2127
      %2129 = vmatmul.bf16.gmra.mxu0 %v1537
      %v2130 = vpop.f32.mrf.mxu0
      %v2131 = vadd.f32 %v783, %v2130
      %v2132 = vpop.f32.mrf.mxu0
      %v2133 = vadd.f32 %v788, %v2132
      %2134 = vmatmul.bf16.gmra.mxu0 %v1542
      %v2135 = vpop.f32.mrf.mxu0
      %v2136 = vadd.f32 %v793, %v2135
      %v2137 = vpop.f32.mrf.mxu0
      %v2138 = vadd.f32 %v798, %v2137
      %2139 = vmatmul.bf16.gmra.mxu0 %v1547
      %v2140 = vpop.f32.mrf.mxu0
      %v2141 = vadd.f32 %v803, %v2140
      %v2142 = vpop.f32.mrf.mxu0
      %v2143 = vadd.f32 %v808, %v2142
      %2144 = vmatmul.bf16.gmra.mxu0 %v1552
      %v2145 = vpop.f32.mrf.mxu0
      %v2146 = vadd.f32 %v813, %v2145
      %v2147 = vpop.f32.mrf.mxu0
      %v2148 = vadd.f32 %v818, %v2147
      %2149 = vmatmul.bf16.gmra.mxu0 %v1557
      %v2150 = vpop.f32.mrf.mxu0
      %v2151 = vadd.f32 %v823, %v2150
      %v2152 = vpop.f32.mrf.mxu0
      %v2153 = vadd.f32 %v828, %v2152
      %2154 = vmatmul.bf16.gmra.mxu0 %v1562
      %v2155 = vpop.f32.mrf.mxu0
      %v2156 = vadd.f32 %v833, %v2155
      %v2157 = vpop.f32.mrf.mxu0
      %v2158 = vadd.f32 %v838, %v2157
      %2159 = vmatmul.bf16.gmra.mxu0 %v1567
      %v2160 = vpop.f32.mrf.mxu0
      %v2161 = vadd.f32 %v843, %v2160
      %v2162 = vpop.f32.mrf.mxu0
      %v2163 = vadd.f32 %v848, %v2162
      %2164 = vmatmul.bf16.gmra.mxu0 %v1572
      %v2165 = vpop.f32.mrf.mxu0
      %v2166 = vadd.f32 %v853, %v2165
      %v2167 = vpop.f32.mrf.mxu0
      %v2168 = vadd.f32 %v858, %v2167
      %2169 = vmatmul.bf16.gmra.mxu0 %v1577
      %v2170 = vpop.f32.mrf.mxu0
      %v2171 = vadd.f32 %v863, %v2170
      %v2172 = vpop.f32.mrf.mxu0
      %v2173 = vadd.f32 %v868, %v2172
      %2174 = vmatmul.bf16.gmra.mxu0 %v1582
      %v2175 = vpop.f32.mrf.mxu0
      %v2176 = vadd.f32 %v873, %v2175
      %v2177 = vpop.f32.mrf.mxu0
      %v2178 = vadd.f32 %v878, %v2177
      %2179 = vmatmul.bf16.gmra.mxu0 %v1587
      %v2180 = vpop.f32.mrf.mxu0
      %v2181 = vadd.f32 %v883, %v2180
      %v2182 = vpop.f32.mrf.mxu0
      %v2183 = vadd.f32 %v888, %v2182
      %2184 = vmatmul.bf16.gmra.mxu0 %v1592
      %v2185 = vpop.f32.mrf.mxu0
      %v2186 = vadd.f32 %v893, %v2185
      %v2187 = vpop.f32.mrf.mxu0
      %v2188 = vadd.f32 %v898, %v2187
      %2189 = vmatmul.bf16.gmra.mxu0 %v1597
      %v2190 = vpop.f32.mrf.mxu0
      %v2191 = vadd.f32 %v903, %v2190
      %v2192 = vpop.f32.mrf.mxu0
      %v2193 = vadd.f32 %v908, %v2192
      %2194 = vmatmul.bf16.gmra.mxu0 %v1602
      %v2195 = vpop.f32.mrf.mxu0
      %v2196 = vadd.f32 %v913, %v2195
      %v2197 = vpop.f32.mrf.mxu0
      %v2198 = vadd.f32 %v918, %v2197
      %2199 = vmatmul.bf16.gmra.mxu0 %v1607
      %v2200 = vpop.f32.mrf.mxu0
      %v2201 = vadd.f32 %v923, %v2200
      %v2202 = vpop.f32.mrf.mxu0
      %v2203 = vadd.f32 %v928, %v2202
      %2204 = vmatmul.bf16.gmra.mxu0 %v1612
      %v2205 = vpop.f32.mrf.mxu0
      %v2206 = vadd.f32 %v933, %v2205
      %v2207 = vpop.f32.mrf.mxu0
      %v2208 = vadd.f32 %v938, %v2207
      %2209 = vmatmul.bf16.gmra.mxu0 %v1617
      %v2210 = vpop.f32.mrf.mxu0
      %v2211 = vadd.f32 %v943, %v2210
      %v2212 = vpop.f32.mrf.mxu0
      %v2213 = vadd.f32 %v948, %v2212
      %2214 = vdwg.mxu0
      %2215 = vmatpush.bf16.msra.mxu0 %v1895
      %2216 = vmatpush.bf16.msra.mxu0 %v1894
      %2217 = vmatpush.bf16.msra.mxu0 %v1893
      %2218 = vmatpush.bf16.msra.mxu0 %v1892
      %2219 = vmatpush.bf16.msra.mxu0 %v1891
      %2220 = vmatpush.bf16.msra.mxu0 %v1890
      %2221 = vmatpush.bf16.msra.mxu0 %v1889
      %2222 = vmatpush.bf16.msra.mxu0 %v1888
      %2223 = vmatmul.bf16.gmra.mxu0 %v1463
      %v2224 = vpop.f32.mrf.mxu0
      %v2225 = vadd.f32 %v2056, %v2224
      %v2226 = vpop.f32.mrf.mxu0
      %v2227 = vadd.f32 %v2058, %v2226
      %2228 = vmatmul.bf16.gmra.mxu0 %v1468
      %v2229 = vpop.f32.mrf.mxu0
      %v2230 = vadd.f32 %v2061, %v2229
      %v2231 = vpop.f32.mrf.mxu0
      %v2232 = vadd.f32 %v2063, %v2231
      %2233 = vmatmul.bf16.gmra.mxu0 %v1473
      %v2234 = vpop.f32.mrf.mxu0
      %v2235 = vadd.f32 %v2066, %v2234
      %v2236 = vpop.f32.mrf.mxu0
      %v2237 = vadd.f32 %v2068, %v2236
      %2238 = vmatmul.bf16.gmra.mxu0 %v1478
      %v2239 = vpop.f32.mrf.mxu0
      %v2240 = vadd.f32 %v2071, %v2239
      %v2241 = vpop.f32.mrf.mxu0
      %v2242 = vadd.f32 %v2073, %v2241
      %2243 = vmatmul.bf16.gmra.mxu0 %v1483
      %v2244 = vpop.f32.mrf.mxu0
      %v2245 = vadd.f32 %v2076, %v2244
      %v2246 = vpop.f32.mrf.mxu0
      %v2247 = vadd.f32 %v2078, %v2246
      %2248 = vmatmul.bf16.gmra.mxu0 %v1488
      %v2249 = vpop.f32.mrf.mxu0
      %v2250 = vadd.f32 %v2081, %v2249
      %v2251 = vpop.f32.mrf.mxu0
      %v2252 = vadd.f32 %v2083, %v2251
      %2253 = vmatmul.bf16.gmra.mxu0 %v1493
      %v2254 = vpop.f32.mrf.mxu0
      %v2255 = vadd.f32 %v2086, %v2254
      %v2256 = vpop.f32.mrf.mxu0
      %v2257 = vadd.f32 %v2088, %v2256
      %2258 = vmatmul.bf16.gmra.mxu0 %v1498
      %v2259 = vpop.f32.mrf.mxu0
      %v2260 = vadd.f32 %v2091, %v2259
      %v2261 = vpop.f32.mrf.mxu0
      %v2262 = vadd.f32 %v2093, %v2261
      %2263 = vmatmul.bf16.gmra.mxu0 %v1503
      %v2264 = vpop.f32.mrf.mxu0
      %v2265 = vadd.f32 %v2096, %v2264
      %v2266 = vpop.f32.mrf.mxu0
      %v2267 = vadd.f32 %v2098, %v2266
      %2268 = vmatmul.bf16.gmra.mxu0 %v1508
      %v2269 = vpop.f32.mrf.mxu0
      %v2270 = vadd.f32 %v2101, %v2269
      %v2271 = vpop.f32.mrf.mxu0
      %v2272 = vadd.f32 %v2103, %v2271
      %2273 = vmatmul.bf16.gmra.mxu0 %v1513
      %v2274 = vpop.f32.mrf.mxu0
      %v2275 = vadd.f32 %v2106, %v2274
      %v2276 = vpop.f32.mrf.mxu0
      %v2277 = vadd.f32 %v2108, %v2276
      %2278 = vmatmul.bf16.gmra.mxu0 %v1518
      %v2279 = vpop.f32.mrf.mxu0
      %v2280 = vadd.f32 %v2111, %v2279
      %v2281 = vpop.f32.mrf.mxu0
      %v2282 = vadd.f32 %v2113, %v2281
      %2283 = vmatmul.bf16.gmra.mxu0 %v1523
      %v2284 = vpop.f32.mrf.mxu0
      %v2285 = vadd.f32 %v2116, %v2284
      %v2286 = vpop.f32.mrf.mxu0
      %v2287 = vadd.f32 %v2118, %v2286
      %2288 = vmatmul.bf16.gmra.mxu0 %v1528
      %v2289 = vpop.f32.mrf.mxu0
      %v2290 = vadd.f32 %v2121, %v2289
      %v2291 = vpop.f32.mrf.mxu0
      %v2292 = vadd.f32 %v2123, %v2291
      %2293 = vmatmul.bf16.gmra.mxu0 %v1533
      %v2294 = vpop.f32.mrf.mxu0
      %v2295 = vadd.f32 %v2126, %v2294
      %v2296 = vpop.f32.mrf.mxu0
      %v2297 = vadd.f32 %v2128, %v2296
      %2298 = vmatmul.bf16.gmra.mxu0 %v1538
      %v2299 = vpop.f32.mrf.mxu0
      %v2300 = vadd.f32 %v2131, %v2299
      %v2301 = vpop.f32.mrf.mxu0
      %v2302 = vadd.f32 %v2133, %v2301
      %2303 = vmatmul.bf16.gmra.mxu0 %v1543
      %v2304 = vpop.f32.mrf.mxu0
      %v2305 = vadd.f32 %v2136, %v2304
      %v2306 = vpop.f32.mrf.mxu0
      %v2307 = vadd.f32 %v2138, %v2306
      %2308 = vmatmul.bf16.gmra.mxu0 %v1548
      %v2309 = vpop.f32.mrf.mxu0
      %v2310 = vadd.f32 %v2141, %v2309
      %v2311 = vpop.f32.mrf.mxu0
      %v2312 = vadd.f32 %v2143, %v2311
      %2313 = vmatmul.bf16.gmra.mxu0 %v1553
      %v2314 = vpop.f32.mrf.mxu0
      %v2315 = vadd.f32 %v2146, %v2314
      %v2316 = vpop.f32.mrf.mxu0
      %v2317 = vadd.f32 %v2148, %v2316
      %2318 = vmatmul.bf16.gmra.mxu0 %v1558
      %v2319 = vpop.f32.mrf.mxu0
      %v2320 = vadd.f32 %v2151, %v2319
      %v2321 = vpop.f32.mrf.mxu0
      %v2322 = vadd.f32 %v2153, %v2321
      %2323 = vmatmul.bf16.gmra.mxu0 %v1563
      %v2324 = vpop.f32.mrf.mxu0
      %v2325 = vadd.f32 %v2156, %v2324
      %v2326 = vpop.f32.mrf.mxu0
      %v2327 = vadd.f32 %v2158, %v2326
      %2328 = vmatmul.bf16.gmra.mxu0 %v1568
      %v2329 = vpop.f32.mrf.mxu0
      %v2330 = vadd.f32 %v2161, %v2329
      %v2331 = vpop.f32.mrf.mxu0
      %v2332 = vadd.f32 %v2163, %v2331
      %2333 = vmatmul.bf16.gmra.mxu0 %v1573
      %v2334 = vpop.f32.mrf.mxu0
      %v2335 = vadd.f32 %v2166, %v2334
      %v2336 = vpop.f32.mrf.mxu0
      %v2337 = vadd.f32 %v2168, %v2336
      %2338 = vmatmul.bf16.gmra.mxu0 %v1578
      %v2339 = vpop.f32.mrf.mxu0
      %v2340 = vadd.f32 %v2171, %v2339
      %v2341 = vpop.f32.mrf.mxu0
      %v2342 = vadd.f32 %v2173, %v2341
      %2343 = vmatmul.bf16.gmra.mxu0 %v1583
      %v2344 = vpop.f32.mrf.mxu0
      %v2345 = vadd.f32 %v2176, %v2344
      %v2346 = vpop.f32.mrf.mxu0
      %v2347 = vadd.f32 %v2178, %v2346
      %2348 = vmatmul.bf16.gmra.mxu0 %v1588
      %v2349 = vpop.f32.mrf.mxu0
      %v2350 = vadd.f32 %v2181, %v2349
      %v2351 = vpop.f32.mrf.mxu0
      %v2352 = vadd.f32 %v2183, %v2351
      %2353 = vmatmul.bf16.gmra.mxu0 %v1593
      %v2354 = vpop.f32.mrf.mxu0
      %v2355 = vadd.f32 %v2186, %v2354
      %v2356 = vpop.f32.mrf.mxu0
      %v2357 = vadd.f32 %v2188, %v2356
      %2358 = vmatmul.bf16.gmra.mxu0 %v1598
      %v2359 = vpop.f32.mrf.mxu0
      %v2360 = vadd.f32 %v2191, %v2359
      %v2361 = vpop.f32.mrf.mxu0
      %v2362 = vadd.f32 %v2193, %v2361
      %2363 = vmatmul.bf16.gmra.mxu0 %v1603
      %v2364 = vpop.f32.mrf.mxu0
      %v2365 = vadd.f32 %v2196, %v2364
      %v2366 = vpop.f32.mrf.mxu0
      %v2367 = vadd.f32 %v2198, %v2366
      %2368 = vmatmul.bf16.gmra.mxu0 %v1608
      %v2369 = vpop.f32.mrf.mxu0
      %v2370 = vadd.f32 %v2201, %v2369
      %v2371 = vpop.f32.mrf.mxu0
      %v2372 = vadd.f32 %v2203, %v2371
      %2373 = vmatmul.bf16.gmra.mxu0 %v1613
      %v2374 = vpop.f32.mrf.mxu0
      %v2375 = vadd.f32 %v2206, %v2374
      %v2376 = vpop.f32.mrf.mxu0
      %v2377 = vadd.f32 %v2208, %v2376
      %2378 = vmatmul.bf16.gmra.mxu0 %v1618
      %v2379 = vpop.f32.mrf.mxu0
      %v2380 = vadd.f32 %v2211, %v2379
      %v2381 = vpop.f32.mrf.mxu0
      %v2382 = vadd.f32 %v2213, %v2381
      %2383 = vdwg.mxu0
      %2384 = vmatpush.bf16.msra.mxu0 %v1903
      %2385 = vmatpush.bf16.msra.mxu0 %v1902
      %2386 = vmatpush.bf16.msra.mxu0 %v1901
      %2387 = vmatpush.bf16.msra.mxu0 %v1900
      %2388 = vmatpush.bf16.msra.mxu0 %v1899
      %2389 = vmatpush.bf16.msra.mxu0 %v1898
      %2390 = vmatpush.bf16.msra.mxu0 %v1897
      %2391 = vmatpush.bf16.msra.mxu0 %v1896
      %2392 = vmatmul.bf16.gmra.mxu0 %v1464
      %v2393 = vpop.f32.mrf.mxu0
      %v2394 = vadd.f32 %v2225, %v2393
      %v2395 = vpop.f32.mrf.mxu0
      %v2396 = vadd.f32 %v2227, %v2395
      %2397 = vmatmul.bf16.gmra.mxu0 %v1469
      %v2398 = vpop.f32.mrf.mxu0
      %v2399 = vadd.f32 %v2230, %v2398
      %v2400 = vpop.f32.mrf.mxu0
      %v2401 = vadd.f32 %v2232, %v2400
      %2402 = vmatmul.bf16.gmra.mxu0 %v1474
      %v2403 = vpop.f32.mrf.mxu0
      %v2404 = vadd.f32 %v2235, %v2403
      %v2405 = vpop.f32.mrf.mxu0
      %v2406 = vadd.f32 %v2237, %v2405
      %2407 = vmatmul.bf16.gmra.mxu0 %v1479
      %v2408 = vpop.f32.mrf.mxu0
      %v2409 = vadd.f32 %v2240, %v2408
      %v2410 = vpop.f32.mrf.mxu0
      %v2411 = vadd.f32 %v2242, %v2410
      %2412 = vmatmul.bf16.gmra.mxu0 %v1484
      %v2413 = vpop.f32.mrf.mxu0
      %v2414 = vadd.f32 %v2245, %v2413
      %v2415 = vpop.f32.mrf.mxu0
      %v2416 = vadd.f32 %v2247, %v2415
      %2417 = vmatmul.bf16.gmra.mxu0 %v1489
      %v2418 = vpop.f32.mrf.mxu0
      %v2419 = vadd.f32 %v2250, %v2418
      %v2420 = vpop.f32.mrf.mxu0
      %v2421 = vadd.f32 %v2252, %v2420
      %2422 = vmatmul.bf16.gmra.mxu0 %v1494
      %v2423 = vpop.f32.mrf.mxu0
      %v2424 = vadd.f32 %v2255, %v2423
      %v2425 = vpop.f32.mrf.mxu0
      %v2426 = vadd.f32 %v2257, %v2425
      %2427 = vmatmul.bf16.gmra.mxu0 %v1499
      %v2428 = vpop.f32.mrf.mxu0
      %v2429 = vadd.f32 %v2260, %v2428
      %v2430 = vpop.f32.mrf.mxu0
      %v2431 = vadd.f32 %v2262, %v2430
      %2432 = vmatmul.bf16.gmra.mxu0 %v1504
      %v2433 = vpop.f32.mrf.mxu0
      %v2434 = vadd.f32 %v2265, %v2433
      %v2435 = vpop.f32.mrf.mxu0
      %v2436 = vadd.f32 %v2267, %v2435
      %2437 = vmatmul.bf16.gmra.mxu0 %v1509
      %v2438 = vpop.f32.mrf.mxu0
      %v2439 = vadd.f32 %v2270, %v2438
      %v2440 = vpop.f32.mrf.mxu0
      %v2441 = vadd.f32 %v2272, %v2440
      %2442 = vmatmul.bf16.gmra.mxu0 %v1514
      %v2443 = vpop.f32.mrf.mxu0
      %v2444 = vadd.f32 %v2275, %v2443
      %v2445 = vpop.f32.mrf.mxu0
      %v2446 = vadd.f32 %v2277, %v2445
      %2447 = vmatmul.bf16.gmra.mxu0 %v1519
      %v2448 = vpop.f32.mrf.mxu0
      %v2449 = vadd.f32 %v2280, %v2448
      %v2450 = vpop.f32.mrf.mxu0
      %v2451 = vadd.f32 %v2282, %v2450
      %2452 = vmatmul.bf16.gmra.mxu0 %v1524
      %v2453 = vpop.f32.mrf.mxu0
      %v2454 = vadd.f32 %v2285, %v2453
      %v2455 = vpop.f32.mrf.mxu0
      %v2456 = vadd.f32 %v2287, %v2455
      %2457 = vmatmul.bf16.gmra.mxu0 %v1529
      %v2458 = vpop.f32.mrf.mxu0
      %v2459 = vadd.f32 %v2290, %v2458
      %v2460 = vpop.f32.mrf.mxu0
      %v2461 = vadd.f32 %v2292, %v2460
      %2462 = vmatmul.bf16.gmra.mxu0 %v1534
      %v2463 = vpop.f32.mrf.mxu0
      %v2464 = vadd.f32 %v2295, %v2463
      %v2465 = vpop.f32.mrf.mxu0
      %v2466 = vadd.f32 %v2297, %v2465
      %2467 = vmatmul.bf16.gmra.mxu0 %v1539
      %v2468 = vpop.f32.mrf.mxu0
      %v2469 = vadd.f32 %v2300, %v2468
      %v2470 = vpop.f32.mrf.mxu0
      %v2471 = vadd.f32 %v2302, %v2470
      %2472 = vmatmul.bf16.gmra.mxu0 %v1544
      %v2473 = vpop.f32.mrf.mxu0
      %v2474 = vadd.f32 %v2305, %v2473
      %v2475 = vpop.f32.mrf.mxu0
      %v2476 = vadd.f32 %v2307, %v2475
      %2477 = vmatmul.bf16.gmra.mxu0 %v1549
      %v2478 = vpop.f32.mrf.mxu0
      %v2479 = vadd.f32 %v2310, %v2478
      %v2480 = vpop.f32.mrf.mxu0
      %v2481 = vadd.f32 %v2312, %v2480
      %2482 = vmatmul.bf16.gmra.mxu0 %v1554
      %v2483 = vpop.f32.mrf.mxu0
      %v2484 = vadd.f32 %v2315, %v2483
      %v2485 = vpop.f32.mrf.mxu0
      %v2486 = vadd.f32 %v2317, %v2485
      %2487 = vmatmul.bf16.gmra.mxu0 %v1559
      %v2488 = vpop.f32.mrf.mxu0
      %v2489 = vadd.f32 %v2320, %v2488
      %v2490 = vpop.f32.mrf.mxu0
      %v2491 = vadd.f32 %v2322, %v2490
      %2492 = vmatmul.bf16.gmra.mxu0 %v1564
      %v2493 = vpop.f32.mrf.mxu0
      %v2494 = vadd.f32 %v2325, %v2493
      %v2495 = vpop.f32.mrf.mxu0
      %v2496 = vadd.f32 %v2327, %v2495
      %2497 = vmatmul.bf16.gmra.mxu0 %v1569
      %v2498 = vpop.f32.mrf.mxu0
      %v2499 = vadd.f32 %v2330, %v2498
      %v2500 = vpop.f32.mrf.mxu0
      %v2501 = vadd.f32 %v2332, %v2500
      %2502 = vmatmul.bf16.gmra.mxu0 %v1574
      %v2503 = vpop.f32.mrf.mxu0
      %v2504 = vadd.f32 %v2335, %v2503
      %v2505 = vpop.f32.mrf.mxu0
      %v2506 = vadd.f32 %v2337, %v2505
      %2507 = vmatmul.bf16.gmra.mxu0 %v1579
      %v2508 = vpop.f32.mrf.mxu0
      %v2509 = vadd.f32 %v2340, %v2508
      %v2510 = vpop.f32.mrf.mxu0
      %v2511 = vadd.f32 %v2342, %v2510
      %2512 = vmatmul.bf16.gmra.mxu0 %v1584
      %v2513 = vpop.f32.mrf.mxu0
      %v2514 = vadd.f32 %v2345, %v2513
      %v2515 = vpop.f32.mrf.mxu0
      %v2516 = vadd.f32 %v2347, %v2515
      %2517 = vmatmul.bf16.gmra.mxu0 %v1589
      %v2518 = vpop.f32.mrf.mxu0
      %v2519 = vadd.f32 %v2350, %v2518
      %v2520 = vpop.f32.mrf.mxu0
      %v2521 = vadd.f32 %v2352, %v2520
      %2522 = vmatmul.bf16.gmra.mxu0 %v1594
      %v2523 = vpop.f32.mrf.mxu0
      %v2524 = vadd.f32 %v2355, %v2523
      %v2525 = vpop.f32.mrf.mxu0
      %v2526 = vadd.f32 %v2357, %v2525
      %2527 = vmatmul.bf16.gmra.mxu0 %v1599
      %v2528 = vpop.f32.mrf.mxu0
      %v2529 = vadd.f32 %v2360, %v2528
      %v2530 = vpop.f32.mrf.mxu0
      %v2531 = vadd.f32 %v2362, %v2530
      %2532 = vmatmul.bf16.gmra.mxu0 %v1604
      %v2533 = vpop.f32.mrf.mxu0
      %v2534 = vadd.f32 %v2365, %v2533
      %v2535 = vpop.f32.mrf.mxu0
      %v2536 = vadd.f32 %v2367, %v2535
      %2537 = vmatmul.bf16.gmra.mxu0 %v1609
      %v2538 = vpop.f32.mrf.mxu0
      %v2539 = vadd.f32 %v2370, %v2538
      %v2540 = vpop.f32.mrf.mxu0
      %v2541 = vadd.f32 %v2372, %v2540
      %2542 = vmatmul.bf16.gmra.mxu0 %v1614
      %v2543 = vpop.f32.mrf.mxu0
      %v2544 = vadd.f32 %v2375, %v2543
      %v2545 = vpop.f32.mrf.mxu0
      %v2546 = vadd.f32 %v2377, %v2545
      %2547 = vmatmul.bf16.gmra.mxu0 %v1619
      %v2548 = vpop.f32.mrf.mxu0
      %v2549 = vadd.f32 %v2380, %v2548
      %v2550 = vpop.f32.mrf.mxu0
      %v2551 = vadd.f32 %v2382, %v2550
      %2552 = vdwg.mxu0
      %2553 = vmatpush.bf16.msra.mxu0 %v1911
      %2554 = vmatpush.bf16.msra.mxu0 %v1910
      %2555 = vmatpush.bf16.msra.mxu0 %v1909
      %2556 = vmatpush.bf16.msra.mxu0 %v1908
      %2557 = vmatpush.bf16.msra.mxu0 %v1907
      %2558 = vmatpush.bf16.msra.mxu0 %v1906
      %2559 = vmatpush.bf16.msra.mxu0 %v1905
      %2560 = vmatpush.bf16.msra.mxu0 %v1904
      %2561 = vmatmul.bf16.gmra.mxu0 %v1465
      %v2562 = vpop.f32.mrf.mxu0
      %v2563 = vadd.f32 %v2394, %v2562
      %v2564 = vpop.f32.mrf.mxu0
      %v2565 = vadd.f32 %v2396, %v2564
      %2566 = vmatmul.bf16.gmra.mxu0 %v1470
      %v2567 = vpop.f32.mrf.mxu0
      %v2568 = vadd.f32 %v2399, %v2567
      %v2569 = vpop.f32.mrf.mxu0
      %v2570 = vadd.f32 %v2401, %v2569
      %2571 = vmatmul.bf16.gmra.mxu0 %v1475
      %v2572 = vpop.f32.mrf.mxu0
      %v2573 = vadd.f32 %v2404, %v2572
      %v2574 = vpop.f32.mrf.mxu0
      %v2575 = vadd.f32 %v2406, %v2574
      %2576 = vmatmul.bf16.gmra.mxu0 %v1480
      %v2577 = vpop.f32.mrf.mxu0
      %v2578 = vadd.f32 %v2409, %v2577
      %v2579 = vpop.f32.mrf.mxu0
      %v2580 = vadd.f32 %v2411, %v2579
      %2581 = vmatmul.bf16.gmra.mxu0 %v1485
      %v2582 = vpop.f32.mrf.mxu0
      %v2583 = vadd.f32 %v2414, %v2582
      %v2584 = vpop.f32.mrf.mxu0
      %v2585 = vadd.f32 %v2416, %v2584
      %2586 = vmatmul.bf16.gmra.mxu0 %v1490
      %v2587 = vpop.f32.mrf.mxu0
      %v2588 = vadd.f32 %v2419, %v2587
      %v2589 = vpop.f32.mrf.mxu0
      %v2590 = vadd.f32 %v2421, %v2589
      %2591 = vmatmul.bf16.gmra.mxu0 %v1495
      %v2592 = vpop.f32.mrf.mxu0
      %v2593 = vadd.f32 %v2424, %v2592
      %v2594 = vpop.f32.mrf.mxu0
      %v2595 = vadd.f32 %v2426, %v2594
      %2596 = vmatmul.bf16.gmra.mxu0 %v1500
      %v2597 = vpop.f32.mrf.mxu0
      %v2598 = vadd.f32 %v2429, %v2597
      %v2599 = vpop.f32.mrf.mxu0
      %v2600 = vadd.f32 %v2431, %v2599
      %2601 = vmatmul.bf16.gmra.mxu0 %v1505
      %v2602 = vpop.f32.mrf.mxu0
      %v2603 = vadd.f32 %v2434, %v2602
      %v2604 = vpop.f32.mrf.mxu0
      %v2605 = vadd.f32 %v2436, %v2604
      %2606 = vmatmul.bf16.gmra.mxu0 %v1510
      %v2607 = vpop.f32.mrf.mxu0
      %v2608 = vadd.f32 %v2439, %v2607
      %v2609 = vpop.f32.mrf.mxu0
      %v2610 = vadd.f32 %v2441, %v2609
      %2611 = vmatmul.bf16.gmra.mxu0 %v1515
      %v2612 = vpop.f32.mrf.mxu0
      %v2613 = vadd.f32 %v2444, %v2612
      %v2614 = vpop.f32.mrf.mxu0
      %v2615 = vadd.f32 %v2446, %v2614
      %2616 = vmatmul.bf16.gmra.mxu0 %v1520
      %v2617 = vpop.f32.mrf.mxu0
      %v2618 = vadd.f32 %v2449, %v2617
      %v2619 = vpop.f32.mrf.mxu0
      %v2620 = vadd.f32 %v2451, %v2619
      %2621 = vmatmul.bf16.gmra.mxu0 %v1525
      %v2622 = vpop.f32.mrf.mxu0
      %v2623 = vadd.f32 %v2454, %v2622
      %v2624 = vpop.f32.mrf.mxu0
      %v2625 = vadd.f32 %v2456, %v2624
      %2626 = vmatmul.bf16.gmra.mxu0 %v1530
      %v2627 = vpop.f32.mrf.mxu0
      %v2628 = vadd.f32 %v2459, %v2627
      %v2629 = vpop.f32.mrf.mxu0
      %v2630 = vadd.f32 %v2461, %v2629
      %2631 = vmatmul.bf16.gmra.mxu0 %v1535
      %v2632 = vpop.f32.mrf.mxu0
      %v2633 = vadd.f32 %v2464, %v2632
      %v2634 = vpop.f32.mrf.mxu0
      %v2635 = vadd.f32 %v2466, %v2634
      %2636 = vmatmul.bf16.gmra.mxu0 %v1540
      %v2637 = vpop.f32.mrf.mxu0
      %v2638 = vadd.f32 %v2469, %v2637
      %v2639 = vpop.f32.mrf.mxu0
      %v2640 = vadd.f32 %v2471, %v2639
      %2641 = vmatmul.bf16.gmra.mxu0 %v1545
      %v2642 = vpop.f32.mrf.mxu0
      %v2643 = vadd.f32 %v2474, %v2642
      %v2644 = vpop.f32.mrf.mxu0
      %v2645 = vadd.f32 %v2476, %v2644
      %2646 = vmatmul.bf16.gmra.mxu0 %v1550
      %v2647 = vpop.f32.mrf.mxu0
      %v2648 = vadd.f32 %v2479, %v2647
      %v2649 = vpop.f32.mrf.mxu0
      %v2650 = vadd.f32 %v2481, %v2649
      %2651 = vmatmul.bf16.gmra.mxu0 %v1555
      %v2652 = vpop.f32.mrf.mxu0
      %v2653 = vadd.f32 %v2484, %v2652
      %v2654 = vpop.f32.mrf.mxu0
      %v2655 = vadd.f32 %v2486, %v2654
      %2656 = vmatmul.bf16.gmra.mxu0 %v1560
      %v2657 = vpop.f32.mrf.mxu0
      %v2658 = vadd.f32 %v2489, %v2657
      %v2659 = vpop.f32.mrf.mxu0
      %v2660 = vadd.f32 %v2491, %v2659
      %2661 = vmatmul.bf16.gmra.mxu0 %v1565
      %v2662 = vpop.f32.mrf.mxu0
      %v2663 = vadd.f32 %v2494, %v2662
      %v2664 = vpop.f32.mrf.mxu0
      %v2665 = vadd.f32 %v2496, %v2664
      %2666 = vmatmul.bf16.gmra.mxu0 %v1570
      %v2667 = vpop.f32.mrf.mxu0
      %v2668 = vadd.f32 %v2499, %v2667
      %v2669 = vpop.f32.mrf.mxu0
      %v2670 = vadd.f32 %v2501, %v2669
      %2671 = vmatmul.bf16.gmra.mxu0 %v1575
      %v2672 = vpop.f32.mrf.mxu0
      %v2673 = vadd.f32 %v2504, %v2672
      %v2674 = vpop.f32.mrf.mxu0
      %v2675 = vadd.f32 %v2506, %v2674
      %2676 = vmatmul.bf16.gmra.mxu0 %v1580
      %v2677 = vpop.f32.mrf.mxu0
      %v2678 = vadd.f32 %v2509, %v2677
      %v2679 = vpop.f32.mrf.mxu0
      %v2680 = vadd.f32 %v2511, %v2679
      %2681 = vmatmul.bf16.gmra.mxu0 %v1585
      %v2682 = vpop.f32.mrf.mxu0
      %v2683 = vadd.f32 %v2514, %v2682
      %v2684 = vpop.f32.mrf.mxu0
      %v2685 = vadd.f32 %v2516, %v2684
      %2686 = vmatmul.bf16.gmra.mxu0 %v1590
      %v2687 = vpop.f32.mrf.mxu0
      %v2688 = vadd.f32 %v2519, %v2687
      %v2689 = vpop.f32.mrf.mxu0
      %v2690 = vadd.f32 %v2521, %v2689
      %2691 = vmatmul.bf16.gmra.mxu0 %v1595
      %v2692 = vpop.f32.mrf.mxu0
      %v2693 = vadd.f32 %v2524, %v2692
      %v2694 = vpop.f32.mrf.mxu0
      %v2695 = vadd.f32 %v2526, %v2694
      %2696 = vmatmul.bf16.gmra.mxu0 %v1600
      %v2697 = vpop.f32.mrf.mxu0
      %v2698 = vadd.f32 %v2529, %v2697
      %v2699 = vpop.f32.mrf.mxu0
      %v2700 = vadd.f32 %v2531, %v2699
      %2701 = vmatmul.bf16.gmra.mxu0 %v1605
      %v2702 = vpop.f32.mrf.mxu0
      %v2703 = vadd.f32 %v2534, %v2702
      %v2704 = vpop.f32.mrf.mxu0
      %v2705 = vadd.f32 %v2536, %v2704
      %2706 = vmatmul.bf16.gmra.mxu0 %v1610
      %v2707 = vpop.f32.mrf.mxu0
      %v2708 = vadd.f32 %v2539, %v2707
      %v2709 = vpop.f32.mrf.mxu0
      %v2710 = vadd.f32 %v2541, %v2709
      %2711 = vmatmul.bf16.gmra.mxu0 %v1615
      %v2712 = vpop.f32.mrf.mxu0
      %v2713 = vadd.f32 %v2544, %v2712
      %v2714 = vpop.f32.mrf.mxu0
      %v2715 = vadd.f32 %v2546, %v2714
      %2716 = vmatmul.bf16.gmra.mxu0 %v1620
      %v2717 = vpop.f32.mrf.mxu0
      %v2718 = vadd.f32 %v2549, %v2717
      %v2719 = vpop.f32.mrf.mxu0
      %v2720 = vadd.f32 %v2551, %v2719
      %2721 = vdwg.mxu0
      %2722 = vmatpush.bf16.msra.mxu0 0
      %2723 = vmatpush.bf16.msra.mxu0 0
      %2724 = vmatpush.bf16.msra.mxu0 0
      %2725 = vmatpush.bf16.msra.mxu0 0
      %2726 = vmatpush.bf16.msra.mxu0 0
      %2727 = vmatpush.bf16.msra.mxu0 0
      %2728 = vmatpush.bf16.msra.mxu0 0
      %2729 = vmatpush.bf16.msra.mxu0 %v2044
      %2730 = vmatmul.bf16.gmra.mxu0 %v1947
      %v2731 = vpop.f32.mrf.mxu0
      %v2732 = vadd.f32 %v2563, %v2731
      %v2733 = vpop.f32.mrf.mxu0
      %v2734 = vadd.f32 %v2565, %v2733
      %2735 = vmatmul.bf16.gmra.mxu0 %v1950
      %v2736 = vpop.f32.mrf.mxu0
      %v2737 = vadd.f32 %v2568, %v2736
      %v2738 = vpop.f32.mrf.mxu0
      %v2739 = vadd.f32 %v2570, %v2738
      %2740 = vmatmul.bf16.gmra.mxu0 %v1953
      %v2741 = vpop.f32.mrf.mxu0
      %v2742 = vadd.f32 %v2573, %v2741
      %v2743 = vpop.f32.mrf.mxu0
      %v2744 = vadd.f32 %v2575, %v2743
      %2745 = vmatmul.bf16.gmra.mxu0 %v1956
      %v2746 = vpop.f32.mrf.mxu0
      %v2747 = vadd.f32 %v2578, %v2746
      %v2748 = vpop.f32.mrf.mxu0
      %v2749 = vadd.f32 %v2580, %v2748
      %2750 = vmatmul.bf16.gmra.mxu0 %v1959
      %v2751 = vpop.f32.mrf.mxu0
      %v2752 = vadd.f32 %v2583, %v2751
      %v2753 = vpop.f32.mrf.mxu0
      %v2754 = vadd.f32 %v2585, %v2753
      %2755 = vmatmul.bf16.gmra.mxu0 %v1962
      %v2756 = vpop.f32.mrf.mxu0
      %v2757 = vadd.f32 %v2588, %v2756
      %v2758 = vpop.f32.mrf.mxu0
      %v2759 = vadd.f32 %v2590, %v2758
      %2760 = vmatmul.bf16.gmra.mxu0 %v1965
      %v2761 = vpop.f32.mrf.mxu0
      %v2762 = vadd.f32 %v2593, %v2761
      %v2763 = vpop.f32.mrf.mxu0
      %v2764 = vadd.f32 %v2595, %v2763
      %2765 = vmatmul.bf16.gmra.mxu0 %v1968
      %v2766 = vpop.f32.mrf.mxu0
      %v2767 = vadd.f32 %v2598, %v2766
      %v2768 = vpop.f32.mrf.mxu0
      %v2769 = vadd.f32 %v2600, %v2768
      %2770 = vmatmul.bf16.gmra.mxu0 %v1971
      %v2771 = vpop.f32.mrf.mxu0
      %v2772 = vadd.f32 %v2603, %v2771
      %v2773 = vpop.f32.mrf.mxu0
      %v2774 = vadd.f32 %v2605, %v2773
      %2775 = vmatmul.bf16.gmra.mxu0 %v1974
      %v2776 = vpop.f32.mrf.mxu0
      %v2777 = vadd.f32 %v2608, %v2776
      %v2778 = vpop.f32.mrf.mxu0
      %v2779 = vadd.f32 %v2610, %v2778
      %2780 = vmatmul.bf16.gmra.mxu0 %v1977
      %v2781 = vpop.f32.mrf.mxu0
      %v2782 = vadd.f32 %v2613, %v2781
      %v2783 = vpop.f32.mrf.mxu0
      %v2784 = vadd.f32 %v2615, %v2783
      %2785 = vmatmul.bf16.gmra.mxu0 %v1980
      %v2786 = vpop.f32.mrf.mxu0
      %v2787 = vadd.f32 %v2618, %v2786
      %v2788 = vpop.f32.mrf.mxu0
      %v2789 = vadd.f32 %v2620, %v2788
      %2790 = vmatmul.bf16.gmra.mxu0 %v1983
      %v2791 = vpop.f32.mrf.mxu0
      %v2792 = vadd.f32 %v2623, %v2791
      %v2793 = vpop.f32.mrf.mxu0
      %v2794 = vadd.f32 %v2625, %v2793
      %2795 = vmatmul.bf16.gmra.mxu0 %v1986
      %v2796 = vpop.f32.mrf.mxu0
      %v2797 = vadd.f32 %v2628, %v2796
      %v2798 = vpop.f32.mrf.mxu0
      %v2799 = vadd.f32 %v2630, %v2798
      %2800 = vmatmul.bf16.gmra.mxu0 %v1989
      %v2801 = vpop.f32.mrf.mxu0
      %v2802 = vadd.f32 %v2633, %v2801
      %v2803 = vpop.f32.mrf.mxu0
      %v2804 = vadd.f32 %v2635, %v2803
      %2805 = vmatmul.bf16.gmra.mxu0 %v1992
      %v2806 = vpop.f32.mrf.mxu0
      %v2807 = vadd.f32 %v2638, %v2806
      %v2808 = vpop.f32.mrf.mxu0
      %v2809 = vadd.f32 %v2640, %v2808
      %2810 = vmatmul.bf16.gmra.mxu0 %v1995
      %v2811 = vpop.f32.mrf.mxu0
      %v2812 = vadd.f32 %v2643, %v2811
      %v2813 = vpop.f32.mrf.mxu0
      %v2814 = vadd.f32 %v2645, %v2813
      %2815 = vmatmul.bf16.gmra.mxu0 %v1998
      %v2816 = vpop.f32.mrf.mxu0
      %v2817 = vadd.f32 %v2648, %v2816
      %v2818 = vpop.f32.mrf.mxu0
      %v2819 = vadd.f32 %v2650, %v2818
      %2820 = vmatmul.bf16.gmra.mxu0 %v2001
      %v2821 = vpop.f32.mrf.mxu0
      %v2822 = vadd.f32 %v2653, %v2821
      %v2823 = vpop.f32.mrf.mxu0
      %v2824 = vadd.f32 %v2655, %v2823
      %2825 = vmatmul.bf16.gmra.mxu0 %v2004
      %v2826 = vpop.f32.mrf.mxu0
      %v2827 = vadd.f32 %v2658, %v2826
      %v2828 = vpop.f32.mrf.mxu0
      %v2829 = vadd.f32 %v2660, %v2828
      %2830 = vmatmul.bf16.gmra.mxu0 %v2007
      %v2831 = vpop.f32.mrf.mxu0
      %v2832 = vadd.f32 %v2663, %v2831
      %v2833 = vpop.f32.mrf.mxu0
      %v2834 = vadd.f32 %v2665, %v2833
      %2835 = vmatmul.bf16.gmra.mxu0 %v2010
      %v2836 = vpop.f32.mrf.mxu0
      %v2837 = vadd.f32 %v2668, %v2836
      %v2838 = vpop.f32.mrf.mxu0
      %v2839 = vadd.f32 %v2670, %v2838
      %2840 = vmatmul.bf16.gmra.mxu0 %v2013
      %v2841 = vpop.f32.mrf.mxu0
      %v2842 = vadd.f32 %v2673, %v2841
      %v2843 = vpop.f32.mrf.mxu0
      %v2844 = vadd.f32 %v2675, %v2843
      %2845 = vmatmul.bf16.gmra.mxu0 %v2016
      %v2846 = vpop.f32.mrf.mxu0
      %v2847 = vadd.f32 %v2678, %v2846
      %v2848 = vpop.f32.mrf.mxu0
      %v2849 = vadd.f32 %v2680, %v2848
      %2850 = vmatmul.bf16.gmra.mxu0 %v2019
      %v2851 = vpop.f32.mrf.mxu0
      %v2852 = vadd.f32 %v2683, %v2851
      %v2853 = vpop.f32.mrf.mxu0
      %v2854 = vadd.f32 %v2685, %v2853
      %2855 = vmatmul.bf16.gmra.mxu0 %v2022
      %v2856 = vpop.f32.mrf.mxu0
      %v2857 = vadd.f32 %v2688, %v2856
      %v2858 = vpop.f32.mrf.mxu0
      %v2859 = vadd.f32 %v2690, %v2858
      %2860 = vmatmul.bf16.gmra.mxu0 %v2025
      %v2861 = vpop.f32.mrf.mxu0
      %v2862 = vadd.f32 %v2693, %v2861
      %v2863 = vpop.f32.mrf.mxu0
      %v2864 = vadd.f32 %v2695, %v2863
      %2865 = vmatmul.bf16.gmra.mxu0 %v2028
      %v2866 = vpop.f32.mrf.mxu0
      %v2867 = vadd.f32 %v2698, %v2866
      %v2868 = vpop.f32.mrf.mxu0
      %v2869 = vadd.f32 %v2700, %v2868
      %2870 = vmatmul.bf16.gmra.mxu0 %v2031
      %v2871 = vpop.f32.mrf.mxu0
      %v2872 = vadd.f32 %v2703, %v2871
      %v2873 = vpop.f32.mrf.mxu0
      %v2874 = vadd.f32 %v2705, %v2873
      %2875 = vmatmul.bf16.gmra.mxu0 %v2034
      %v2876 = vpop.f32.mrf.mxu0
      %v2877 = vadd.f32 %v2708, %v2876
      %v2878 = vpop.f32.mrf.mxu0
      %v2879 = vadd.f32 %v2710, %v2878
      %2880 = vmatmul.bf16.gmra.mxu0 %v2037
      %v2881 = vpop.f32.mrf.mxu0
      %v2882 = vadd.f32 %v2713, %v2881
      %v2883 = vpop.f32.mrf.mxu0
      %v2884 = vadd.f32 %v2715, %v2883
      %2885 = vmatmul.bf16.gmra.mxu0 %v2040
      %v2886 = vpop.f32.mrf.mxu0
      %v2887 = vadd.f32 %v2718, %v2886
      %v2888 = vpop.f32.mrf.mxu0
      %v2889 = vadd.f32 %v2720, %v2888
      %2890 = vdwg.mxu0
      %v2891 = vmax.f32 %v2732, 0.0
      %v2892 = vmax.f32 %v2734, 0.0
      %v2893 = vmax.f32 %v2737, 0.0
      %v2894 = vmax.f32 %v2739, 0.0
      %v2895 = vmax.f32 %v2742, 0.0
      %v2896 = vmax.f32 %v2744, 0.0
      %v2897 = vmax.f32 %v2747, 0.0
      %v2898 = vmax.f32 %v2749, 0.0
      %v2899 = vmax.f32 %v2752, 0.0
      %v2900 = vmax.f32 %v2754, 0.0
      %v2901 = vmax.f32 %v2757, 0.0
      %v2902 = vmax.f32 %v2759, 0.0
      %v2903 = vmax.f32 %v2762, 0.0
      %v2904 = vmax.f32 %v2764, 0.0
      %v2905 = vmax.f32 %v2767, 0.0
      %v2906 = vmax.f32 %v2769, 0.0
      %v2907 = vmax.f32 %v2772, 0.0
      %v2908 = vmax.f32 %v2774, 0.0
      %v2909 = vmax.f32 %v2777, 0.0
      %v2910 = vmax.f32 %v2779, 0.0
      %v2911 = vmax.f32 %v2782, 0.0
      %v2912 = vmax.f32 %v2784, 0.0
      %v2913 = vmax.f32 %v2787, 0.0
      %v2914 = vmax.f32 %v2789, 0.0
      %v2915 = vmax.f32 %v2792, 0.0
      %v2916 = vmax.f32 %v2794, 0.0
      %v2917 = vmax.f32 %v2797, 0.0
      %v2918 = vmax.f32 %v2799, 0.0
      %v2919 = vmax.f32 %v2802, 0.0
      %v2920 = vmax.f32 %v2804, 0.0
      %v2921 = vmax.f32 %v2807, 0.0
      %v2922 = vmax.f32 %v2809, 0.0
      %v2923 = vmax.f32 %v2812, 0.0
      %v2924 = vmax.f32 %v2814, 0.0
      %v2925 = vmax.f32 %v2817, 0.0
      %v2926 = vmax.f32 %v2819, 0.0
      %v2927 = vmax.f32 %v2822, 0.0
      %v2928 = vmax.f32 %v2824, 0.0
      %v2929 = vmax.f32 %v2827, 0.0
      %v2930 = vmax.f32 %v2829, 0.0
      %v2931 = vmax.f32 %v2832, 0.0
      %v2932 = vmax.f32 %v2834, 0.0
      %v2933 = vmax.f32 %v2837, 0.0
      %v2934 = vmax.f32 %v2839, 0.0
      %v2935 = vmax.f32 %v2842, 0.0
      %v2936 = vmax.f32 %v2844, 0.0
      %v2937 = vmax.f32 %v2847, 0.0
      %v2938 = vmax.f32 %v2849, 0.0
      %v2939 = vmax.f32 %v2852, 0.0
      %v2940 = vmax.f32 %v2854, 0.0
      %v2941 = vmax.f32 %v2857, 0.0
      %v2942 = vmax.f32 %v2859, 0.0
      %v2943 = vmax.f32 %v2862, 0.0
      %v2944 = vmax.f32 %v2864, 0.0
      %v2945 = vmax.f32 %v2867, 0.0
      %v2946 = vmax.f32 %v2869, 0.0
      %v2947 = vmax.f32 %v2872, 0.0
      %v2948 = vmax.f32 %v2874, 0.0
      %v2949 = vmax.f32 %v2877, 0.0
      %v2950 = vmax.f32 %v2879, 0.0
      %v2951 = vmax.f32 %v2882, 0.0
      %v2952 = vmax.f32 %v2884, 0.0
      %v2953 = vmax.f32 %v2887, 0.0
      %v2954 = vmax.f32 %v2889, 0.0
      %v2955 = vpack.c.bf16 %v2892, %v2891
      %v2956 = vpack.c.bf16 %v2894, %v2893
      %v2957 = vpack.c.bf16 %v2896, %v2895
      %v2958 = vpack.c.bf16 %v2898, %v2897
      %v2959 = vpack.c.bf16 %v2900, %v2899
      %v2960 = vpack.c.bf16 %v2902, %v2901
      %v2961 = vpack.c.bf16 %v2904, %v2903
      %v2962 = vpack.c.bf16 %v2906, %v2905
      %v2963 = vpack.c.bf16 %v2908, %v2907
      %v2964 = vpack.c.bf16 %v2910, %v2909
      %v2965 = vpack.c.bf16 %v2912, %v2911
      %v2966 = vpack.c.bf16 %v2914, %v2913
      %v2967 = vpack.c.bf16 %v2916, %v2915
      %v2968 = vpack.c.bf16 %v2918, %v2917
      %v2969 = vpack.c.bf16 %v2920, %v2919
      %v2970 = vpack.c.bf16 %v2922, %v2921
      %v2971 = vpack.c.bf16 %v2924, %v2923
      %v2972 = vpack.c.bf16 %v2926, %v2925
      %v2973 = vpack.c.bf16 %v2928, %v2927
      %v2974 = vpack.c.bf16 %v2930, %v2929
      %v2975 = vpack.c.bf16 %v2932, %v2931
      %v2976 = vpack.c.bf16 %v2934, %v2933
      %v2977 = vpack.c.bf16 %v2936, %v2935
      %v2978 = vpack.c.bf16 %v2938, %v2937
      %v2979 = vpack.c.bf16 %v2940, %v2939
      %v2980 = vpack.c.bf16 %v2942, %v2941
      %v2981 = vpack.c.bf16 %v2944, %v2943
      %v2982 = vpack.c.bf16 %v2946, %v2945
      %v2983 = vpack.c.bf16 %v2948, %v2947
      %v2984 = vpack.c.bf16 %v2950, %v2949
      %v2985 = vpack.c.bf16 %v2952, %v2951
      %v2986 = vpack.c.bf16 %v2954, %v2953
      %v2987 = vld [vmem:[%s3] sm:$0xff]
      %v2988 = vld [vmem:[%s3 + $0x8] sm:$0xff]
      %v2989 = vld [vmem:[%s3 + $0x10] sm:$0xff]
      %v2990 = vld [vmem:[%s3 + $0x18] sm:$0xff]
      %v2991 = vld [vmem:[%s3 + $0x20] sm:$0xff]
      %v2992 = vld [vmem:[%s3 + $0x28] sm:$0xff]
      %v2993 = vld [vmem:[%s3 + $0x30] sm:$0xff]
      %v2994 = vld [vmem:[%s3 + $0x38] sm:$0xff]
      %v2995 = vld [vmem:[%s3 + $0x40] sm:$0xff]
      %v2996 = vld [vmem:[%s3 + $0x48] sm:$0xff]
      %v2997 = vld [vmem:[%s3 + $0x50] sm:$0xff]
      %v2998 = vld [vmem:[%s3 + $0x58] sm:$0xff]
      %v2999 = vld [vmem:[%s3 + $0x60] sm:$0xff]
      %v3000 = vld [vmem:[%s3 + $0x68] sm:$0xff]
      %v3001 = vld [vmem:[%s3 + $0x70] sm:$0xff]
      %v3002 = vld [vmem:[%s3 + $0x78] sm:$0xff]
      %v3003 = vld [vmem:[%s3 + $0x80] sm:$0xff]
      %v3004 = vld [vmem:[%s3 + $0x88] sm:$0xff]
      %v3005 = vld [vmem:[%s3 + $0x90] sm:$0xff]
      %v3006 = vld [vmem:[%s3 + $0x98] sm:$0xff]
      %v3007 = vld [vmem:[%s3 + $0xa0] sm:$0xff]
      %v3008 = vld [vmem:[%s3 + $0xa8] sm:$0xff]
      %v3009 = vld [vmem:[%s3 + $0xb0] sm:$0xff]
      %v3010 = vld [vmem:[%s3 + $0xb8] sm:$0xff]
      %v3011 = vld [vmem:[%s3 + $0xc0] sm:$0xff]
      %v3012 = vld [vmem:[%s3 + $0xc8] sm:$0xff]
      %v3013 = vld [vmem:[%s3 + $0xd0] sm:$0xff]
      %v3014 = vld [vmem:[%s3 + $0xd8] sm:$0xff]
      %v3015 = vld [vmem:[%s3 + $0xe0] sm:$0xff]
      %v3016 = vld [vmem:[%s3 + $0xe8] sm:$0xff]
      %v3017 = vld [vmem:[%s3 + $0xf0] sm:$0xff]
      %v3018 = vld [vmem:[%s3 + $0xf8] sm:$0xff]
      %v3019 = vld [vmem:[%s3 + $0x100] sm:$0xff]
      %v3020 = vld [vmem:[%s3 + $0x108] sm:$0xff]
      %v3021 = vld [vmem:[%s3 + $0x110] sm:$0xff]
      %v3022 = vld [vmem:[%s3 + $0x118] sm:$0xff]
      %v3023 = vld [vmem:[%s3 + $0x120] sm:$0xff]
      %v3024 = vld [vmem:[%s3 + $0x128] sm:$0xff]
      %v3025 = vld [vmem:[%s3 + $0x130] sm:$0xff]
      %v3026 = vld [vmem:[%s3 + $0x138] sm:$0xff]
      %v3027 = vld [vmem:[%s3 + $0x140] sm:$0xff]
      %v3028 = vld [vmem:[%s3 + $0x148] sm:$0xff]
      %v3029 = vld [vmem:[%s3 + $0x150] sm:$0xff]
      %v3030 = vld [vmem:[%s3 + $0x158] sm:$0xff]
      %v3031 = vld [vmem:[%s3 + $0x160] sm:$0xff]
      %v3032 = vld [vmem:[%s3 + $0x168] sm:$0xff]
      %v3033 = vld [vmem:[%s3 + $0x170] sm:$0xff]
      %v3034 = vld [vmem:[%s3 + $0x178] sm:$0xff]
      %v3035 = vld [vmem:[%s3 + $0x180] sm:$0xff]
      %v3036 = vld [vmem:[%s3 + $0x188] sm:$0xff]
      %v3037 = vld [vmem:[%s3 + $0x190] sm:$0xff]
      %v3038 = vld [vmem:[%s3 + $0x198] sm:$0xff]
      %v3039 = vld [vmem:[%s3 + $0x1a0] sm:$0xff]
      %v3040 = vld [vmem:[%s3 + $0x1a8] sm:$0xff]
      %v3041 = vld [vmem:[%s3 + $0x1b0] sm:$0xff]
      %v3042 = vld [vmem:[%s3 + $0x1b8] sm:$0xff]
      %v3043 = vld [vmem:[%s3 + $0x1c0] sm:$0xff]
      %v3044 = vld [vmem:[%s3 + $0x1c8] sm:$0xff]
      %v3045 = vld [vmem:[%s3 + $0x1d0] sm:$0xff]
      %v3046 = vld [vmem:[%s3 + $0x1d8] sm:$0xff]
      %v3047 = vld [vmem:[%s3 + $0x1e0] sm:$0xff]
      %v3048 = vld [vmem:[%s3 + $0x1e8] sm:$0xff]
      %v3049 = vld [vmem:[%s3 + $0x1f0] sm:$0xff]
      %v3050 = vld [vmem:[%s3 + $0x1f8] sm:$0xff]
      %v3051 = vld [vmem:[%s3 + $0x200] sm:$0xff]
      %v3052 = vld [vmem:[%s3 + $0x208] sm:$0xff]
      %v3053 = vld [vmem:[%s3 + $0x210] sm:$0xff]
      %v3054 = vld [vmem:[%s3 + $0x218] sm:$0xff]
      %v3055 = vld [vmem:[%s3 + $0x220] sm:$0xff]
      %v3056 = vld [vmem:[%s3 + $0x228] sm:$0xff]
      %v3057 = vld [vmem:[%s3 + $0x230] sm:$0xff]
      %v3058 = vld [vmem:[%s3 + $0x238] sm:$0xff]
      %v3059 = vld [vmem:[%s3 + $0x240] sm:$0xff]
      %v3060 = vld [vmem:[%s3 + $0x248] sm:$0xff]
      %v3061 = vld [vmem:[%s3 + $0x250] sm:$0xff]
      %v3062 = vld [vmem:[%s3 + $0x258] sm:$0xff]
      %v3063 = vld [vmem:[%s3 + $0x260] sm:$0xff]
      %v3064 = vld [vmem:[%s3 + $0x268] sm:$0xff]
      %v3065 = vld [vmem:[%s3 + $0x270] sm:$0xff]
      %v3066 = vld [vmem:[%s3 + $0x278] sm:$0xff]
      %v3067 = vld [vmem:[%s3 + $0x280] sm:$0xff]
      %v3068 = vld [vmem:[%s3 + $0x288] sm:$0xff]
      %v3069 = vld [vmem:[%s3 + $0x290] sm:$0xff]
      %v3070 = vld [vmem:[%s3 + $0x298] sm:$0xff]
      %v3071 = vld [vmem:[%s3 + $0x2a0] sm:$0xff]
      %v3072 = vld [vmem:[%s3 + $0x2a8] sm:$0xff]
      %v3073 = vld [vmem:[%s3 + $0x2b0] sm:$0xff]
      %v3074 = vld [vmem:[%s3 + $0x2b8] sm:$0xff]
      %v3075 = vld [vmem:[%s3 + $0x2c0] sm:$0xff]
      %v3076 = vld [vmem:[%s3 + $0x2c8] sm:$0xff]
      %v3077 = vld [vmem:[%s3 + $0x2d0] sm:$0xff]
      %v3078 = vld [vmem:[%s3 + $0x2d8] sm:$0xff]
      %v3079 = vld [vmem:[%s3 + $0x2e0] sm:$0xff]
      %v3080 = vld [vmem:[%s3 + $0x2e8] sm:$0xff]
      %v3081 = vld [vmem:[%s3 + $0x2f0] sm:$0xff]
      %v3082 = vld [vmem:[%s3 + $0x2f8] sm:$0xff]
      %v3083 = vld [vmem:[%s3 + $0x300] sm:$0xff]
      %v3084 = vld [vmem:[%s3 + $0x308] sm:$0xff]
      %v3085 = vld [vmem:[%s3 + $0x310] sm:$0xff]
      %v3086 = vld [vmem:[%s3 + $0x318] sm:$0xff]
      %v3087 = vld [vmem:[%s3 + $0x320] sm:$0xff]
      %v3088 = vld [vmem:[%s3 + $0x328] sm:$0xff]
      %v3089 = vld [vmem:[%s3 + $0x330] sm:$0xff]
      %v3090 = vld [vmem:[%s3 + $0x338] sm:$0xff]
      %v3091 = vld [vmem:[%s3 + $0x340] sm:$0xff]
      %v3092 = vld [vmem:[%s3 + $0x348] sm:$0xff]
      %v3093 = vld [vmem:[%s3 + $0x350] sm:$0xff]
      %v3094 = vld [vmem:[%s3 + $0x358] sm:$0xff]
      %v3095 = vld [vmem:[%s3 + $0x360] sm:$0xff]
      %v3096 = vld [vmem:[%s3 + $0x368] sm:$0xff]
      %v3097 = vld [vmem:[%s3 + $0x370] sm:$0xff]
      %v3098 = vld [vmem:[%s3 + $0x378] sm:$0xff]
      %v3099 = vld [vmem:[%s3 + $0x380] sm:$0xff]
      %v3100 = vld [vmem:[%s3 + $0x388] sm:$0xff]
      %v3101 = vld [vmem:[%s3 + $0x390] sm:$0xff]
      %v3102 = vld [vmem:[%s3 + $0x398] sm:$0xff]
      %v3103 = vld [vmem:[%s3 + $0x3a0] sm:$0xff]
      %v3104 = vld [vmem:[%s3 + $0x3a8] sm:$0xff]
      %v3105 = vld [vmem:[%s3 + $0x3b0] sm:$0xff]
      %v3106 = vld [vmem:[%s3 + $0x3b8] sm:$0xff]
      %v3107 = vld [vmem:[%s3 + $0x3c0] sm:$0xff]
      %v3108 = vld [vmem:[%s3 + $0x3c8] sm:$0xff]
      %v3109 = vld [vmem:[%s3 + $0x3d0] sm:$0xff]
      %v3110 = vld [vmem:[%s3 + $0x3d8] sm:$0xff]
      %v3111 = vld [vmem:[%s3 + $0x3e0] sm:$0xff]
      %v3112 = vld [vmem:[%s3 + $0x3e8] sm:$0xff]
      %v3113 = vld [vmem:[%s3 + $0x3f0] sm:$0xff]
      %v3114 = vld [vmem:[%s3 + $0x3f8] sm:$0xff]
      %v3115 = vld [vmem:[%s4] sm:$0xff]
      %v3116 = vld [vmem:[%s4 + $0x8] sm:$0xff]
      %v3117 = vld [vmem:[%s4 + $0x10] sm:$0xff]
      %v3118 = vld [vmem:[%s4 + $0x18] sm:$0xff]
      %v3119 = vld [vmem:[%s4 + $0x20] sm:$0xff]
      %v3120 = vld [vmem:[%s4 + $0x28] sm:$0xff]
      %v3121 = vld [vmem:[%s4 + $0x30] sm:$0xff]
      %v3122 = vld [vmem:[%s4 + $0x38] sm:$0xff]
      %v3123 = vld [vmem:[%s4 + $0x40] sm:$0xff]
      %v3124 = vld [vmem:[%s4 + $0x48] sm:$0xff]
      %v3125 = vld [vmem:[%s4 + $0x50] sm:$0xff]
      %v3126 = vld [vmem:[%s4 + $0x58] sm:$0xff]
      %v3127 = vld [vmem:[%s4 + $0x60] sm:$0xff]
      %v3128 = vld [vmem:[%s4 + $0x68] sm:$0xff]
      %v3129 = vld [vmem:[%s4 + $0x70] sm:$0xff]
      %v3130 = vld [vmem:[%s4 + $0x78] sm:$0xff]
      %v3131 = vld [vmem:[%s4 + $0x80] sm:$0xff]
      %v3132 = vld [vmem:[%s4 + $0x88] sm:$0xff]
      %v3133 = vld [vmem:[%s4 + $0x90] sm:$0xff]
      %v3134 = vld [vmem:[%s4 + $0x98] sm:$0xff]
      %v3135 = vld [vmem:[%s4 + $0xa0] sm:$0xff]
      %v3136 = vld [vmem:[%s4 + $0xa8] sm:$0xff]
      %v3137 = vld [vmem:[%s4 + $0xb0] sm:$0xff]
      %v3138 = vld [vmem:[%s4 + $0xb8] sm:$0xff]
      %v3139 = vld [vmem:[%s4 + $0xc0] sm:$0xff]
      %v3140 = vld [vmem:[%s4 + $0xc8] sm:$0xff]
      %v3141 = vld [vmem:[%s4 + $0xd0] sm:$0xff]
      %v3142 = vld [vmem:[%s4 + $0xd8] sm:$0xff]
      %v3143 = vld [vmem:[%s4 + $0xe0] sm:$0xff]
      %v3144 = vld [vmem:[%s4 + $0xe8] sm:$0xff]
      %v3145 = vld [vmem:[%s4 + $0xf0] sm:$0xff]
      %v3146 = vld [vmem:[%s4 + $0xf8] sm:$0xff]
      %v3147 = vld [vmem:[%s4 + $0x100] sm:$0xff]
      %v3148 = vld [vmem:[%s4 + $0x108] sm:$0xff]
      %v3149 = vld [vmem:[%s4 + $0x110] sm:$0xff]
      %v3150 = vld [vmem:[%s4 + $0x118] sm:$0xff]
      %v3151 = vld [vmem:[%s4 + $0x120] sm:$0xff]
      %v3152 = vld [vmem:[%s4 + $0x128] sm:$0xff]
      %v3153 = vld [vmem:[%s4 + $0x130] sm:$0xff]
      %v3154 = vld [vmem:[%s4 + $0x138] sm:$0xff]
      %v3155 = vld [vmem:[%s4 + $0x140] sm:$0xff]
      %v3156 = vld [vmem:[%s4 + $0x148] sm:$0xff]
      %v3157 = vld [vmem:[%s4 + $0x150] sm:$0xff]
      %v3158 = vld [vmem:[%s4 + $0x158] sm:$0xff]
      %v3159 = vld [vmem:[%s4 + $0x160] sm:$0xff]
      %v3160 = vld [vmem:[%s4 + $0x168] sm:$0xff]
      %v3161 = vld [vmem:[%s4 + $0x170] sm:$0xff]
      %v3162 = vld [vmem:[%s4 + $0x178] sm:$0xff]
      %v3163 = vld [vmem:[%s4 + $0x180] sm:$0xff]
      %v3164 = vld [vmem:[%s4 + $0x188] sm:$0xff]
      %v3165 = vld [vmem:[%s4 + $0x190] sm:$0xff]
      %v3166 = vld [vmem:[%s4 + $0x198] sm:$0xff]
      %v3167 = vld [vmem:[%s4 + $0x1a0] sm:$0xff]
      %v3168 = vld [vmem:[%s4 + $0x1a8] sm:$0xff]
      %v3169 = vld [vmem:[%s4 + $0x1b0] sm:$0xff]
      %v3170 = vld [vmem:[%s4 + $0x1b8] sm:$0xff]
      %v3171 = vld [vmem:[%s4 + $0x1c0] sm:$0xff]
      %v3172 = vld [vmem:[%s4 + $0x1c8] sm:$0xff]
      %v3173 = vld [vmem:[%s4 + $0x1d0] sm:$0xff]
      %v3174 = vld [vmem:[%s4 + $0x1d8] sm:$0xff]
      %v3175 = vld [vmem:[%s4 + $0x1e0] sm:$0xff]
      %v3176 = vld [vmem:[%s4 + $0x1e8] sm:$0xff]
      %v3177 = vld [vmem:[%s4 + $0x1f0] sm:$0xff]
      %v3178 = vld [vmem:[%s4 + $0x1f8] sm:$0xff]
      %3180 = vset.pattern.permute.xlu0 0
      %3181 = vperm.xlu0 %3180, %v3115
      %v3182 = vpop.permute.xlu0 %3181
      %3185 = vset.pattern.permute.xlu0 0
      %3186 = vperm.xlu0 %3185, %v3116
      %v3187 = vpop.permute.xlu0 %3186
      %3190 = vset.pattern.permute.xlu0 0
      %3191 = vperm.xlu0 %3190, %v3117
      %v3192 = vpop.permute.xlu0 %3191
      %3195 = vset.pattern.permute.xlu0 0
      %3196 = vperm.xlu0 %3195, %v3118
      %v3197 = vpop.permute.xlu0 %3196
      %3200 = vset.pattern.permute.xlu0 0
      %3201 = vperm.xlu0 %3200, %v3119
      %v3202 = vpop.permute.xlu0 %3201
      %3205 = vset.pattern.permute.xlu0 0
      %3206 = vperm.xlu0 %3205, %v3120
      %v3207 = vpop.permute.xlu0 %3206
      %3210 = vset.pattern.permute.xlu0 0
      %3211 = vperm.xlu0 %3210, %v3121
      %v3212 = vpop.permute.xlu0 %3211
      %3215 = vset.pattern.permute.xlu0 0
      %3216 = vperm.xlu0 %3215, %v3122
      %v3217 = vpop.permute.xlu0 %3216
      %3220 = vset.pattern.permute.xlu0 0
      %3221 = vperm.xlu0 %3220, %v3123
      %v3222 = vpop.permute.xlu0 %3221
      %3225 = vset.pattern.permute.xlu0 0
      %3226 = vperm.xlu0 %3225, %v3124
      %v3227 = vpop.permute.xlu0 %3226
      %3230 = vset.pattern.permute.xlu0 0
      %3231 = vperm.xlu0 %3230, %v3125
      %v3232 = vpop.permute.xlu0 %3231
      %3235 = vset.pattern.permute.xlu0 0
      %3236 = vperm.xlu0 %3235, %v3126
      %v3237 = vpop.permute.xlu0 %3236
      %3240 = vset.pattern.permute.xlu0 0
      %3241 = vperm.xlu0 %3240, %v3127
      %v3242 = vpop.permute.xlu0 %3241
      %3245 = vset.pattern.permute.xlu0 0
      %3246 = vperm.xlu0 %3245, %v3128
      %v3247 = vpop.permute.xlu0 %3246
      %3250 = vset.pattern.permute.xlu0 0
      %3251 = vperm.xlu0 %3250, %v3129
      %v3252 = vpop.permute.xlu0 %3251
      %3255 = vset.pattern.permute.xlu0 0
      %3256 = vperm.xlu0 %3255, %v3130
      %v3257 = vpop.permute.xlu0 %3256
      %3260 = vset.pattern.permute.xlu0 0
      %3261 = vperm.xlu0 %3260, %v3131
      %v3262 = vpop.permute.xlu0 %3261
      %3265 = vset.pattern.permute.xlu0 0
      %3266 = vperm.xlu0 %3265, %v3132
      %v3267 = vpop.permute.xlu0 %3266
      %3270 = vset.pattern.permute.xlu0 0
      %3271 = vperm.xlu0 %3270, %v3133
      %v3272 = vpop.permute.xlu0 %3271
      %3275 = vset.pattern.permute.xlu0 0
      %3276 = vperm.xlu0 %3275, %v3134
      %v3277 = vpop.permute.xlu0 %3276
      %3280 = vset.pattern.permute.xlu0 0
      %3281 = vperm.xlu0 %3280, %v3135
      %v3282 = vpop.permute.xlu0 %3281
      %3285 = vset.pattern.permute.xlu0 0
      %3286 = vperm.xlu0 %3285, %v3136
      %v3287 = vpop.permute.xlu0 %3286
      %3290 = vset.pattern.permute.xlu0 0
      %3291 = vperm.xlu0 %3290, %v3137
      %v3292 = vpop.permute.xlu0 %3291
      %3295 = vset.pattern.permute.xlu0 0
      %3296 = vperm.xlu0 %3295, %v3138
      %v3297 = vpop.permute.xlu0 %3296
      %3300 = vset.pattern.permute.xlu0 0
      %3301 = vperm.xlu0 %3300, %v3139
      %v3302 = vpop.permute.xlu0 %3301
      %3305 = vset.pattern.permute.xlu0 0
      %3306 = vperm.xlu0 %3305, %v3140
      %v3307 = vpop.permute.xlu0 %3306
      %3310 = vset.pattern.permute.xlu0 0
      %3311 = vperm.xlu0 %3310, %v3141
      %v3312 = vpop.permute.xlu0 %3311
      %3315 = vset.pattern.permute.xlu0 0
      %3316 = vperm.xlu0 %3315, %v3142
      %v3317 = vpop.permute.xlu0 %3316
      %3320 = vset.pattern.permute.xlu0 0
      %3321 = vperm.xlu0 %3320, %v3143
      %v3322 = vpop.permute.xlu0 %3321
      %3325 = vset.pattern.permute.xlu0 0
      %3326 = vperm.xlu0 %3325, %v3144
      %v3327 = vpop.permute.xlu0 %3326
      %3330 = vset.pattern.permute.xlu0 0
      %3331 = vperm.xlu0 %3330, %v3145
      %v3332 = vpop.permute.xlu0 %3331
      %3335 = vset.pattern.permute.xlu0 0
      %3336 = vperm.xlu0 %3335, %v3146
      %v3337 = vpop.permute.xlu0 %3336
      %3340 = vset.pattern.permute.xlu0 0
      %3341 = vperm.xlu0 %3340, %v3147
      %v3342 = vpop.permute.xlu0 %3341
      %3345 = vset.pattern.permute.xlu0 0
      %3346 = vperm.xlu0 %3345, %v3148
      %v3347 = vpop.permute.xlu0 %3346
      %3350 = vset.pattern.permute.xlu0 0
      %3351 = vperm.xlu0 %3350, %v3149
      %v3352 = vpop.permute.xlu0 %3351
      %3355 = vset.pattern.permute.xlu0 0
      %3356 = vperm.xlu0 %3355, %v3150
      %v3357 = vpop.permute.xlu0 %3356
      %3360 = vset.pattern.permute.xlu0 0
      %3361 = vperm.xlu0 %3360, %v3151
      %v3362 = vpop.permute.xlu0 %3361
      %3365 = vset.pattern.permute.xlu0 0
      %3366 = vperm.xlu0 %3365, %v3152
      %v3367 = vpop.permute.xlu0 %3366
      %3370 = vset.pattern.permute.xlu0 0
      %3371 = vperm.xlu0 %3370, %v3153
      %v3372 = vpop.permute.xlu0 %3371
      %3375 = vset.pattern.permute.xlu0 0
      %3376 = vperm.xlu0 %3375, %v3154
      %v3377 = vpop.permute.xlu0 %3376
      %3380 = vset.pattern.permute.xlu0 0
      %3381 = vperm.xlu0 %3380, %v3155
      %v3382 = vpop.permute.xlu0 %3381
      %3385 = vset.pattern.permute.xlu0 0
      %3386 = vperm.xlu0 %3385, %v3156
      %v3387 = vpop.permute.xlu0 %3386
      %3390 = vset.pattern.permute.xlu0 0
      %3391 = vperm.xlu0 %3390, %v3157
      %v3392 = vpop.permute.xlu0 %3391
      %3395 = vset.pattern.permute.xlu0 0
      %3396 = vperm.xlu0 %3395, %v3158
      %v3397 = vpop.permute.xlu0 %3396
      %3400 = vset.pattern.permute.xlu0 0
      %3401 = vperm.xlu0 %3400, %v3159
      %v3402 = vpop.permute.xlu0 %3401
      %3405 = vset.pattern.permute.xlu0 0
      %3406 = vperm.xlu0 %3405, %v3160
      %v3407 = vpop.permute.xlu0 %3406
      %3410 = vset.pattern.permute.xlu0 0
      %3411 = vperm.xlu0 %3410, %v3161
      %v3412 = vpop.permute.xlu0 %3411
      %3415 = vset.pattern.permute.xlu0 0
      %3416 = vperm.xlu0 %3415, %v3162
      %v3417 = vpop.permute.xlu0 %3416
      %3420 = vset.pattern.permute.xlu0 0
      %3421 = vperm.xlu0 %3420, %v3163
      %v3422 = vpop.permute.xlu0 %3421
      %3425 = vset.pattern.permute.xlu0 0
      %3426 = vperm.xlu0 %3425, %v3164
      %v3427 = vpop.permute.xlu0 %3426
      %3430 = vset.pattern.permute.xlu0 0
      %3431 = vperm.xlu0 %3430, %v3165
      %v3432 = vpop.permute.xlu0 %3431
      %3435 = vset.pattern.permute.xlu0 0
      %3436 = vperm.xlu0 %3435, %v3166
      %v3437 = vpop.permute.xlu0 %3436
      %3440 = vset.pattern.permute.xlu0 0
      %3441 = vperm.xlu0 %3440, %v3167
      %v3442 = vpop.permute.xlu0 %3441
      %3445 = vset.pattern.permute.xlu0 0
      %3446 = vperm.xlu0 %3445, %v3168
      %v3447 = vpop.permute.xlu0 %3446
      %3450 = vset.pattern.permute.xlu0 0
      %3451 = vperm.xlu0 %3450, %v3169
      %v3452 = vpop.permute.xlu0 %3451
      %3455 = vset.pattern.permute.xlu0 0
      %3456 = vperm.xlu0 %3455, %v3170
      %v3457 = vpop.permute.xlu0 %3456
      %3460 = vset.pattern.permute.xlu0 0
      %3461 = vperm.xlu0 %3460, %v3171
      %v3462 = vpop.permute.xlu0 %3461
      %3465 = vset.pattern.permute.xlu0 0
      %3466 = vperm.xlu0 %3465, %v3172
      %v3467 = vpop.permute.xlu0 %3466
      %3470 = vset.pattern.permute.xlu0 0
      %3471 = vperm.xlu0 %3470, %v3173
      %v3472 = vpop.permute.xlu0 %3471
      %3475 = vset.pattern.permute.xlu0 0
      %3476 = vperm.xlu0 %3475, %v3174
      %v3477 = vpop.permute.xlu0 %3476
      %3480 = vset.pattern.permute.xlu0 0
      %3481 = vperm.xlu0 %3480, %v3175
      %v3482 = vpop.permute.xlu0 %3481
      %3485 = vset.pattern.permute.xlu0 0
      %3486 = vperm.xlu0 %3485, %v3176
      %v3487 = vpop.permute.xlu0 %3486
      %3490 = vset.pattern.permute.xlu0 0
      %3491 = vperm.xlu0 %3490, %v3177
      %v3492 = vpop.permute.xlu0 %3491
      %3495 = vset.pattern.permute.xlu0 0
      %3496 = vperm.xlu0 %3495, %v3178
      %v3497 = vpop.permute.xlu0 %3496
      %v3627 = vunpack.c.l.b16 %v2987
      %v3628 = vunpack.c.h.b16 %v2987
      %v3629 = vunpack.c.l.b16 %v2988
      %v3630 = vunpack.c.h.b16 %v2988
      %v3631 = vunpack.c.l.b16 %v2989
      %v3632 = vunpack.c.h.b16 %v2989
      %v3633 = vunpack.c.l.b16 %v2990
      %v3634 = vunpack.c.h.b16 %v2990
      %v3635 = vunpack.c.l.b16 %v2991
      %v3636 = vunpack.c.h.b16 %v2991
      %v3637 = vunpack.c.l.b16 %v2992
      %v3638 = vunpack.c.h.b16 %v2992
      %v3639 = vunpack.c.l.b16 %v2993
      %v3640 = vunpack.c.h.b16 %v2993
      %v3641 = vunpack.c.l.b16 %v2994
      %v3642 = vunpack.c.h.b16 %v2994
      %v3643 = vunpack.c.l.b16 %v2995
      %v3644 = vunpack.c.h.b16 %v2995
      %v3645 = vunpack.c.l.b16 %v2996
      %v3646 = vunpack.c.h.b16 %v2996
      %v3647 = vunpack.c.l.b16 %v2997
      %v3648 = vunpack.c.h.b16 %v2997
      %v3649 = vunpack.c.l.b16 %v2998
      %v3650 = vunpack.c.h.b16 %v2998
      %v3651 = vunpack.c.l.b16 %v2999
      %v3652 = vunpack.c.h.b16 %v2999
      %v3653 = vunpack.c.l.b16 %v3000
      %v3654 = vunpack.c.h.b16 %v3000
      %v3655 = vunpack.c.l.b16 %v3001
      %v3656 = vunpack.c.h.b16 %v3001
      %v3657 = vunpack.c.l.b16 %v3002
      %v3658 = vunpack.c.h.b16 %v3002
      %v3659 = vunpack.c.l.b16 %v3003
      %v3660 = vunpack.c.h.b16 %v3003
      %v3661 = vunpack.c.l.b16 %v3004
      %v3662 = vunpack.c.h.b16 %v3004
      %v3663 = vunpack.c.l.b16 %v3005
      %v3664 = vunpack.c.h.b16 %v3005
      %v3665 = vunpack.c.l.b16 %v3006
      %v3666 = vunpack.c.h.b16 %v3006
      %v3667 = vunpack.c.l.b16 %v3007
      %v3668 = vunpack.c.h.b16 %v3007
      %v3669 = vunpack.c.l.b16 %v3008
      %v3670 = vunpack.c.h.b16 %v3008
      %v3671 = vunpack.c.l.b16 %v3009
      %v3672 = vunpack.c.h.b16 %v3009
      %v3673 = vunpack.c.l.b16 %v3010
      %v3674 = vunpack.c.h.b16 %v3010
      %v3675 = vunpack.c.l.b16 %v3011
      %v3676 = vunpack.c.h.b16 %v3011
      %v3677 = vunpack.c.l.b16 %v3012
      %v3678 = vunpack.c.h.b16 %v3012
      %v3679 = vunpack.c.l.b16 %v3013
      %v3680 = vunpack.c.h.b16 %v3013
      %v3681 = vunpack.c.l.b16 %v3014
      %v3682 = vunpack.c.h.b16 %v3014
      %v3683 = vunpack.c.l.b16 %v3015
      %v3684 = vunpack.c.h.b16 %v3015
      %v3685 = vunpack.c.l.b16 %v3016
      %v3686 = vunpack.c.h.b16 %v3016
      %v3687 = vunpack.c.l.b16 %v3017
      %v3688 = vunpack.c.h.b16 %v3017
      %v3689 = vunpack.c.l.b16 %v3018
      %v3690 = vunpack.c.h.b16 %v3018
      %v3691 = vunpack.c.l.b16 %v3019
      %v3692 = vunpack.c.h.b16 %v3019
      %v3693 = vunpack.c.l.b16 %v3020
      %v3694 = vunpack.c.h.b16 %v3020
      %v3695 = vunpack.c.l.b16 %v3021
      %v3696 = vunpack.c.h.b16 %v3021
      %v3697 = vunpack.c.l.b16 %v3022
      %v3698 = vunpack.c.h.b16 %v3022
      %v3699 = vunpack.c.l.b16 %v3023
      %v3700 = vunpack.c.h.b16 %v3023
      %v3701 = vunpack.c.l.b16 %v3024
      %v3702 = vunpack.c.h.b16 %v3024
      %v3703 = vunpack.c.l.b16 %v3025
      %v3704 = vunpack.c.h.b16 %v3025
      %v3705 = vunpack.c.l.b16 %v3026
      %v3706 = vunpack.c.h.b16 %v3026
      %v3707 = vunpack.c.l.b16 %v3027
      %v3708 = vunpack.c.h.b16 %v3027
      %v3709 = vunpack.c.l.b16 %v3028
      %v3710 = vunpack.c.h.b16 %v3028
      %v3711 = vunpack.c.l.b16 %v3029
      %v3712 = vunpack.c.h.b16 %v3029
      %v3713 = vunpack.c.l.b16 %v3030
      %v3714 = vunpack.c.h.b16 %v3030
      %v3715 = vunpack.c.l.b16 %v3031
      %v3716 = vunpack.c.h.b16 %v3031
      %v3717 = vunpack.c.l.b16 %v3032
      %v3718 = vunpack.c.h.b16 %v3032
      %v3719 = vunpack.c.l.b16 %v3033
      %v3720 = vunpack.c.h.b16 %v3033
      %v3721 = vunpack.c.l.b16 %v3034
      %v3722 = vunpack.c.h.b16 %v3034
      %v3723 = vunpack.c.l.b16 %v3035
      %v3724 = vunpack.c.h.b16 %v3035
      %v3725 = vunpack.c.l.b16 %v3036
      %v3726 = vunpack.c.h.b16 %v3036
      %v3727 = vunpack.c.l.b16 %v3037
      %v3728 = vunpack.c.h.b16 %v3037
      %v3729 = vunpack.c.l.b16 %v3038
      %v3730 = vunpack.c.h.b16 %v3038
      %v3731 = vunpack.c.l.b16 %v3039
      %v3732 = vunpack.c.h.b16 %v3039
      %v3733 = vunpack.c.l.b16 %v3040
      %v3734 = vunpack.c.h.b16 %v3040
      %v3735 = vunpack.c.l.b16 %v3041
      %v3736 = vunpack.c.h.b16 %v3041
      %v3737 = vunpack.c.l.b16 %v3042
      %v3738 = vunpack.c.h.b16 %v3042
      %v3739 = vunpack.c.l.b16 %v3043
      %v3740 = vunpack.c.h.b16 %v3043
      %v3741 = vunpack.c.l.b16 %v3044
      %v3742 = vunpack.c.h.b16 %v3044
      %v3743 = vunpack.c.l.b16 %v3045
      %v3744 = vunpack.c.h.b16 %v3045
      %v3745 = vunpack.c.l.b16 %v3046
      %v3746 = vunpack.c.h.b16 %v3046
      %v3747 = vunpack.c.l.b16 %v3047
      %v3748 = vunpack.c.h.b16 %v3047
      %v3749 = vunpack.c.l.b16 %v3048
      %v3750 = vunpack.c.h.b16 %v3048
      %v3751 = vunpack.c.l.b16 %v3049
      %v3752 = vunpack.c.h.b16 %v3049
      %v3753 = vunpack.c.l.b16 %v3050
      %v3754 = vunpack.c.h.b16 %v3050
      %v3755 = vunpack.c.l.b16 %v3051
      %v3756 = vunpack.c.h.b16 %v3051
      %v3757 = vunpack.c.l.b16 %v3052
      %v3758 = vunpack.c.h.b16 %v3052
      %v3759 = vunpack.c.l.b16 %v3053
      %v3760 = vunpack.c.h.b16 %v3053
      %v3761 = vunpack.c.l.b16 %v3054
      %v3762 = vunpack.c.h.b16 %v3054
      %v3763 = vunpack.c.l.b16 %v3055
      %v3764 = vunpack.c.h.b16 %v3055
      %v3765 = vunpack.c.l.b16 %v3056
      %v3766 = vunpack.c.h.b16 %v3056
      %v3767 = vunpack.c.l.b16 %v3057
      %v3768 = vunpack.c.h.b16 %v3057
      %v3769 = vunpack.c.l.b16 %v3058
      %v3770 = vunpack.c.h.b16 %v3058
      %v3771 = vunpack.c.l.b16 %v3059
      %v3772 = vunpack.c.h.b16 %v3059
      %v3773 = vunpack.c.l.b16 %v3060
      %v3774 = vunpack.c.h.b16 %v3060
      %v3775 = vunpack.c.l.b16 %v3061
      %v3776 = vunpack.c.h.b16 %v3061
      %v3777 = vunpack.c.l.b16 %v3062
      %v3778 = vunpack.c.h.b16 %v3062
      %v3779 = vunpack.c.l.b16 %v3063
      %v3780 = vunpack.c.h.b16 %v3063
      %v3781 = vunpack.c.l.b16 %v3064
      %v3782 = vunpack.c.h.b16 %v3064
      %v3783 = vunpack.c.l.b16 %v3065
      %v3784 = vunpack.c.h.b16 %v3065
      %v3785 = vunpack.c.l.b16 %v3066
      %v3786 = vunpack.c.h.b16 %v3066
      %v3787 = vunpack.c.l.b16 %v3067
      %v3788 = vunpack.c.h.b16 %v3067
      %v3789 = vunpack.c.l.b16 %v3068
      %v3790 = vunpack.c.h.b16 %v3068
      %v3791 = vunpack.c.l.b16 %v3069
      %v3792 = vunpack.c.h.b16 %v3069
      %v3793 = vunpack.c.l.b16 %v3070
      %v3794 = vunpack.c.h.b16 %v3070
      %v3795 = vunpack.c.l.b16 %v3071
      %v3796 = vunpack.c.h.b16 %v3071
      %v3797 = vunpack.c.l.b16 %v3072
      %v3798 = vunpack.c.h.b16 %v3072
      %v3799 = vunpack.c.l.b16 %v3073
      %v3800 = vunpack.c.h.b16 %v3073
      %v3801 = vunpack.c.l.b16 %v3074
      %v3802 = vunpack.c.h.b16 %v3074
      %v3803 = vunpack.c.l.b16 %v3075
      %v3804 = vunpack.c.h.b16 %v3075
      %v3805 = vunpack.c.l.b16 %v3076
      %v3806 = vunpack.c.h.b16 %v3076
      %v3807 = vunpack.c.l.b16 %v3077
      %v3808 = vunpack.c.h.b16 %v3077
      %v3809 = vunpack.c.l.b16 %v3078
      %v3810 = vunpack.c.h.b16 %v3078
      %v3811 = vunpack.c.l.b16 %v3079
      %v3812 = vunpack.c.h.b16 %v3079
      %v3813 = vunpack.c.l.b16 %v3080
      %v3814 = vunpack.c.h.b16 %v3080
      %v3815 = vunpack.c.l.b16 %v3081
      %v3816 = vunpack.c.h.b16 %v3081
      %v3817 = vunpack.c.l.b16 %v3082
      %v3818 = vunpack.c.h.b16 %v3082
      %v3819 = vunpack.c.l.b16 %v3083
      %v3820 = vunpack.c.h.b16 %v3083
      %v3821 = vunpack.c.l.b16 %v3084
      %v3822 = vunpack.c.h.b16 %v3084
      %v3823 = vunpack.c.l.b16 %v3085
      %v3824 = vunpack.c.h.b16 %v3085
      %v3825 = vunpack.c.l.b16 %v3086
      %v3826 = vunpack.c.h.b16 %v3086
      %v3827 = vunpack.c.l.b16 %v3087
      %v3828 = vunpack.c.h.b16 %v3087
      %v3829 = vunpack.c.l.b16 %v3088
      %v3830 = vunpack.c.h.b16 %v3088
      %v3831 = vunpack.c.l.b16 %v3089
      %v3832 = vunpack.c.h.b16 %v3089
      %v3833 = vunpack.c.l.b16 %v3090
      %v3834 = vunpack.c.h.b16 %v3090
      %v3835 = vunpack.c.l.b16 %v3091
      %v3836 = vunpack.c.h.b16 %v3091
      %v3837 = vunpack.c.l.b16 %v3092
      %v3838 = vunpack.c.h.b16 %v3092
      %v3839 = vunpack.c.l.b16 %v3093
      %v3840 = vunpack.c.h.b16 %v3093
      %v3841 = vunpack.c.l.b16 %v3094
      %v3842 = vunpack.c.h.b16 %v3094
      %v3843 = vunpack.c.l.b16 %v3095
      %v3844 = vunpack.c.h.b16 %v3095
      %v3845 = vunpack.c.l.b16 %v3096
      %v3846 = vunpack.c.h.b16 %v3096
      %v3847 = vunpack.c.l.b16 %v3097
      %v3848 = vunpack.c.h.b16 %v3097
      %v3849 = vunpack.c.l.b16 %v3098
      %v3850 = vunpack.c.h.b16 %v3098
      %v3851 = vunpack.c.l.b16 %v3099
      %v3852 = vunpack.c.h.b16 %v3099
      %v3853 = vunpack.c.l.b16 %v3100
      %v3854 = vunpack.c.h.b16 %v3100
      %v3855 = vunpack.c.l.b16 %v3101
      %v3856 = vunpack.c.h.b16 %v3101
      %v3857 = vunpack.c.l.b16 %v3102
      %v3858 = vunpack.c.h.b16 %v3102
      %v3859 = vunpack.c.l.b16 %v3103
      %v3860 = vunpack.c.h.b16 %v3103
      %v3861 = vunpack.c.l.b16 %v3104
      %v3862 = vunpack.c.h.b16 %v3104
      %v3863 = vunpack.c.l.b16 %v3105
      %v3864 = vunpack.c.h.b16 %v3105
      %v3865 = vunpack.c.l.b16 %v3106
      %v3866 = vunpack.c.h.b16 %v3106
      %v3867 = vunpack.c.l.b16 %v3107
      %v3868 = vunpack.c.h.b16 %v3107
      %v3869 = vunpack.c.l.b16 %v3108
      %v3870 = vunpack.c.h.b16 %v3108
      %v3871 = vunpack.c.l.b16 %v3109
      %v3872 = vunpack.c.h.b16 %v3109
      %v3873 = vunpack.c.l.b16 %v3110
      %v3874 = vunpack.c.h.b16 %v3110
      %v3875 = vunpack.c.l.b16 %v3111
      %v3876 = vunpack.c.h.b16 %v3111
      %v3877 = vunpack.c.l.b16 %v3112
      %v3878 = vunpack.c.h.b16 %v3112
      %v3879 = vunpack.c.l.b16 %v3113
      %v3880 = vunpack.c.h.b16 %v3113
      %v3881 = vunpack.c.l.b16 %v3114
      %v3882 = vunpack.c.h.b16 %v3114
      %v3883 = vpack.c.b16 %v3631, %v3627
      %v3884 = vpack.c.b16 %v3632, %v3628
      %v3885 = vpack.c.b16 %v3633, %v3629
      %v3886 = vpack.c.b16 %v3634, %v3630
      %v3887 = vpack.c.b16 %v3639, %v3635
      %v3888 = vpack.c.b16 %v3640, %v3636
      %v3889 = vpack.c.b16 %v3641, %v3637
      %v3890 = vpack.c.b16 %v3642, %v3638
      %v3891 = vpack.c.b16 %v3647, %v3643
      %v3892 = vpack.c.b16 %v3648, %v3644
      %v3893 = vpack.c.b16 %v3649, %v3645
      %v3894 = vpack.c.b16 %v3650, %v3646
      %v3895 = vpack.c.b16 %v3655, %v3651
      %v3896 = vpack.c.b16 %v3656, %v3652
      %v3897 = vpack.c.b16 %v3657, %v3653
      %v3898 = vpack.c.b16 %v3658, %v3654
      %v3899 = vpack.c.b16 %v3663, %v3659
      %v3900 = vpack.c.b16 %v3664, %v3660
      %v3901 = vpack.c.b16 %v3665, %v3661
      %v3902 = vpack.c.b16 %v3666, %v3662
      %v3903 = vpack.c.b16 %v3671, %v3667
      %v3904 = vpack.c.b16 %v3672, %v3668
      %v3905 = vpack.c.b16 %v3673, %v3669
      %v3906 = vpack.c.b16 %v3674, %v3670
      %v3907 = vpack.c.b16 %v3679, %v3675
      %v3908 = vpack.c.b16 %v3680, %v3676
      %v3909 = vpack.c.b16 %v3681, %v3677
      %v3910 = vpack.c.b16 %v3682, %v3678
      %v3911 = vpack.c.b16 %v3687, %v3683
      %v3912 = vpack.c.b16 %v3688, %v3684
      %v3913 = vpack.c.b16 %v3689, %v3685
      %v3914 = vpack.c.b16 %v3690, %v3686
      %v3915 = vpack.c.b16 %v3695, %v3691
      %v3916 = vpack.c.b16 %v3696, %v3692
      %v3917 = vpack.c.b16 %v3697, %v3693
      %v3918 = vpack.c.b16 %v3698, %v3694
      %v3919 = vpack.c.b16 %v3703, %v3699
      %v3920 = vpack.c.b16 %v3704, %v3700
      %v3921 = vpack.c.b16 %v3705, %v3701
      %v3922 = vpack.c.b16 %v3706, %v3702
      %v3923 = vpack.c.b16 %v3711, %v3707
      %v3924 = vpack.c.b16 %v3712, %v3708
      %v3925 = vpack.c.b16 %v3713, %v3709
      %v3926 = vpack.c.b16 %v3714, %v3710
      %v3927 = vpack.c.b16 %v3719, %v3715
      %v3928 = vpack.c.b16 %v3720, %v3716
      %v3929 = vpack.c.b16 %v3721, %v3717
      %v3930 = vpack.c.b16 %v3722, %v3718
      %v3931 = vpack.c.b16 %v3727, %v3723
      %v3932 = vpack.c.b16 %v3728, %v3724
      %v3933 = vpack.c.b16 %v3729, %v3725
      %v3934 = vpack.c.b16 %v3730, %v3726
      %v3935 = vpack.c.b16 %v3735, %v3731
      %v3936 = vpack.c.b16 %v3736, %v3732
      %v3937 = vpack.c.b16 %v3737, %v3733
      %v3938 = vpack.c.b16 %v3738, %v3734
      %v3939 = vpack.c.b16 %v3743, %v3739
      %v3940 = vpack.c.b16 %v3744, %v3740
      %v3941 = vpack.c.b16 %v3745, %v3741
      %v3942 = vpack.c.b16 %v3746, %v3742
      %v3943 = vpack.c.b16 %v3751, %v3747
      %v3944 = vpack.c.b16 %v3752, %v3748
      %v3945 = vpack.c.b16 %v3753, %v3749
      %v3946 = vpack.c.b16 %v3754, %v3750
      %v3947 = vpack.c.b16 %v3759, %v3755
      %v3948 = vpack.c.b16 %v3760, %v3756
      %v3949 = vpack.c.b16 %v3761, %v3757
      %v3950 = vpack.c.b16 %v3762, %v3758
      %v3951 = vpack.c.b16 %v3767, %v3763
      %v3952 = vpack.c.b16 %v3768, %v3764
      %v3953 = vpack.c.b16 %v3769, %v3765
      %v3954 = vpack.c.b16 %v3770, %v3766
      %v3955 = vpack.c.b16 %v3775, %v3771
      %v3956 = vpack.c.b16 %v3776, %v3772
      %v3957 = vpack.c.b16 %v3777, %v3773
      %v3958 = vpack.c.b16 %v3778, %v3774
      %v3959 = vpack.c.b16 %v3783, %v3779
      %v3960 = vpack.c.b16 %v3784, %v3780
      %v3961 = vpack.c.b16 %v3785, %v3781
      %v3962 = vpack.c.b16 %v3786, %v3782
      %v3963 = vpack.c.b16 %v3791, %v3787
      %v3964 = vpack.c.b16 %v3792, %v3788
      %v3965 = vpack.c.b16 %v3793, %v3789
      %v3966 = vpack.c.b16 %v3794, %v3790
      %v3967 = vpack.c.b16 %v3799, %v3795
      %v3968 = vpack.c.b16 %v3800, %v3796
      %v3969 = vpack.c.b16 %v3801, %v3797
      %v3970 = vpack.c.b16 %v3802, %v3798
      %v3971 = vpack.c.b16 %v3807, %v3803
      %v3972 = vpack.c.b16 %v3808, %v3804
      %v3973 = vpack.c.b16 %v3809, %v3805
      %v3974 = vpack.c.b16 %v3810, %v3806
      %v3975 = vpack.c.b16 %v3815, %v3811
      %v3976 = vpack.c.b16 %v3816, %v3812
      %v3977 = vpack.c.b16 %v3817, %v3813
      %v3978 = vpack.c.b16 %v3818, %v3814
      %v3979 = vpack.c.b16 %v3823, %v3819
      %v3980 = vpack.c.b16 %v3824, %v3820
      %v3981 = vpack.c.b16 %v3825, %v3821
      %v3982 = vpack.c.b16 %v3826, %v3822
      %v3983 = vpack.c.b16 %v3831, %v3827
      %v3984 = vpack.c.b16 %v3832, %v3828
      %v3985 = vpack.c.b16 %v3833, %v3829
      %v3986 = vpack.c.b16 %v3834, %v3830
      %v3987 = vpack.c.b16 %v3839, %v3835
      %v3988 = vpack.c.b16 %v3840, %v3836
      %v3989 = vpack.c.b16 %v3841, %v3837
      %v3990 = vpack.c.b16 %v3842, %v3838
      %v3991 = vpack.c.b16 %v3847, %v3843
      %v3992 = vpack.c.b16 %v3848, %v3844
      %v3993 = vpack.c.b16 %v3849, %v3845
      %v3994 = vpack.c.b16 %v3850, %v3846
      %v3995 = vpack.c.b16 %v3855, %v3851
      %v3996 = vpack.c.b16 %v3856, %v3852
      %v3997 = vpack.c.b16 %v3857, %v3853
      %v3998 = vpack.c.b16 %v3858, %v3854
      %v3999 = vpack.c.b16 %v3863, %v3859
      %v4000 = vpack.c.b16 %v3864, %v3860
      %v4001 = vpack.c.b16 %v3865, %v3861
      %v4002 = vpack.c.b16 %v3866, %v3862
      %v4003 = vpack.c.b16 %v3871, %v3867
      %v4004 = vpack.c.b16 %v3872, %v3868
      %v4005 = vpack.c.b16 %v3873, %v3869
      %v4006 = vpack.c.b16 %v3874, %v3870
      %v4007 = vpack.c.b16 %v3879, %v3875
      %v4008 = vpack.c.b16 %v3880, %v3876
      %v4009 = vpack.c.b16 %v3881, %v3877
      %v4010 = vpack.c.b16 %v3882, %v3878
      %4139 = vmatpush.bf16.msra.mxu0 %v2962
      %4140 = vmatpush.bf16.msra.mxu0 %v2961
      %4141 = vmatpush.bf16.msra.mxu0 %v2960
      %4142 = vmatpush.bf16.msra.mxu0 %v2959
      %4143 = vmatpush.bf16.msra.mxu0 %v2958
      %4144 = vmatpush.bf16.msra.mxu0 %v2957
      %4145 = vmatpush.bf16.msra.mxu0 %v2956
      %4146 = vmatpush.bf16.msra.mxu0 %v2955
      %4147 = vmatmul.bf16.gmra.mxu0 %v3883
      %v4148 = vpop.f32.mrf.mxu0
      %v4149 = vadd.f32 %v3182, %v4148
      %v4150 = vpop.f32.mrf.mxu0
      %v4151 = vadd.f32 %v3187, %v4150
      %4152 = vmatmul.bf16.gmra.mxu0 %v3887
      %v4153 = vpop.f32.mrf.mxu0
      %v4154 = vadd.f32 %v3192, %v4153
      %v4155 = vpop.f32.mrf.mxu0
      %v4156 = vadd.f32 %v3197, %v4155
      %4157 = vmatmul.bf16.gmra.mxu0 %v3891
      %v4158 = vpop.f32.mrf.mxu0
      %v4159 = vadd.f32 %v3202, %v4158
      %v4160 = vpop.f32.mrf.mxu0
      %v4161 = vadd.f32 %v3207, %v4160
      %4162 = vmatmul.bf16.gmra.mxu0 %v3895
      %v4163 = vpop.f32.mrf.mxu0
      %v4164 = vadd.f32 %v3212, %v4163
      %v4165 = vpop.f32.mrf.mxu0
      %v4166 = vadd.f32 %v3217, %v4165
      %4167 = vmatmul.bf16.gmra.mxu0 %v3899
      %v4168 = vpop.f32.mrf.mxu0
      %v4169 = vadd.f32 %v3222, %v4168
      %v4170 = vpop.f32.mrf.mxu0
      %v4171 = vadd.f32 %v3227, %v4170
      %4172 = vmatmul.bf16.gmra.mxu0 %v3903
      %v4173 = vpop.f32.mrf.mxu0
      %v4174 = vadd.f32 %v3232, %v4173
      %v4175 = vpop.f32.mrf.mxu0
      %v4176 = vadd.f32 %v3237, %v4175
      %4177 = vmatmul.bf16.gmra.mxu0 %v3907
      %v4178 = vpop.f32.mrf.mxu0
      %v4179 = vadd.f32 %v3242, %v4178
      %v4180 = vpop.f32.mrf.mxu0
      %v4181 = vadd.f32 %v3247, %v4180
      %4182 = vmatmul.bf16.gmra.mxu0 %v3911
      %v4183 = vpop.f32.mrf.mxu0
      %v4184 = vadd.f32 %v3252, %v4183
      %v4185 = vpop.f32.mrf.mxu0
      %v4186 = vadd.f32 %v3257, %v4185
      %4187 = vmatmul.bf16.gmra.mxu0 %v3915
      %v4188 = vpop.f32.mrf.mxu0
      %v4189 = vadd.f32 %v3262, %v4188
      %v4190 = vpop.f32.mrf.mxu0
      %v4191 = vadd.f32 %v3267, %v4190
      %4192 = vmatmul.bf16.gmra.mxu0 %v3919
      %v4193 = vpop.f32.mrf.mxu0
      %v4194 = vadd.f32 %v3272, %v4193
      %v4195 = vpop.f32.mrf.mxu0
      %v4196 = vadd.f32 %v3277, %v4195
      %4197 = vmatmul.bf16.gmra.mxu0 %v3923
      %v4198 = vpop.f32.mrf.mxu0
      %v4199 = vadd.f32 %v3282, %v4198
      %v4200 = vpop.f32.mrf.mxu0
      %v4201 = vadd.f32 %v3287, %v4200
      %4202 = vmatmul.bf16.gmra.mxu0 %v3927
      %v4203 = vpop.f32.mrf.mxu0
      %v4204 = vadd.f32 %v3292, %v4203
      %v4205 = vpop.f32.mrf.mxu0
      %v4206 = vadd.f32 %v3297, %v4205
      %4207 = vmatmul.bf16.gmra.mxu0 %v3931
      %v4208 = vpop.f32.mrf.mxu0
      %v4209 = vadd.f32 %v3302, %v4208
      %v4210 = vpop.f32.mrf.mxu0
      %v4211 = vadd.f32 %v3307, %v4210
      %4212 = vmatmul.bf16.gmra.mxu0 %v3935
      %v4213 = vpop.f32.mrf.mxu0
      %v4214 = vadd.f32 %v3312, %v4213
      %v4215 = vpop.f32.mrf.mxu0
      %v4216 = vadd.f32 %v3317, %v4215
      %4217 = vmatmul.bf16.gmra.mxu0 %v3939
      %v4218 = vpop.f32.mrf.mxu0
      %v4219 = vadd.f32 %v3322, %v4218
      %v4220 = vpop.f32.mrf.mxu0
      %v4221 = vadd.f32 %v3327, %v4220
      %4222 = vmatmul.bf16.gmra.mxu0 %v3943
      %v4223 = vpop.f32.mrf.mxu0
      %v4224 = vadd.f32 %v3332, %v4223
      %v4225 = vpop.f32.mrf.mxu0
      %v4226 = vadd.f32 %v3337, %v4225
      %4227 = vmatmul.bf16.gmra.mxu0 %v3947
      %v4228 = vpop.f32.mrf.mxu0
      %v4229 = vadd.f32 %v3342, %v4228
      %v4230 = vpop.f32.mrf.mxu0
      %v4231 = vadd.f32 %v3347, %v4230
      %4232 = vmatmul.bf16.gmra.mxu0 %v3951
      %v4233 = vpop.f32.mrf.mxu0
      %v4234 = vadd.f32 %v3352, %v4233
      %v4235 = vpop.f32.mrf.mxu0
      %v4236 = vadd.f32 %v3357, %v4235
      %4237 = vmatmul.bf16.gmra.mxu0 %v3955
      %v4238 = vpop.f32.mrf.mxu0
      %v4239 = vadd.f32 %v3362, %v4238
      %v4240 = vpop.f32.mrf.mxu0
      %v4241 = vadd.f32 %v3367, %v4240
      %4242 = vmatmul.bf16.gmra.mxu0 %v3959
      %v4243 = vpop.f32.mrf.mxu0
      %v4244 = vadd.f32 %v3372, %v4243
      %v4245 = vpop.f32.mrf.mxu0
      %v4246 = vadd.f32 %v3377, %v4245
      %4247 = vmatmul.bf16.gmra.mxu0 %v3963
      %v4248 = vpop.f32.mrf.mxu0
      %v4249 = vadd.f32 %v3382, %v4248
      %v4250 = vpop.f32.mrf.mxu0
      %v4251 = vadd.f32 %v3387, %v4250
      %4252 = vmatmul.bf16.gmra.mxu0 %v3967
      %v4253 = vpop.f32.mrf.mxu0
      %v4254 = vadd.f32 %v3392, %v4253
      %v4255 = vpop.f32.mrf.mxu0
      %v4256 = vadd.f32 %v3397, %v4255
      %4257 = vmatmul.bf16.gmra.mxu0 %v3971
      %v4258 = vpop.f32.mrf.mxu0
      %v4259 = vadd.f32 %v3402, %v4258
      %v4260 = vpop.f32.mrf.mxu0
      %v4261 = vadd.f32 %v3407, %v4260
      %4262 = vmatmul.bf16.gmra.mxu0 %v3975
      %v4263 = vpop.f32.mrf.mxu0
      %v4264 = vadd.f32 %v3412, %v4263
      %v4265 = vpop.f32.mrf.mxu0
      %v4266 = vadd.f32 %v3417, %v4265
      %4267 = vmatmul.bf16.gmra.mxu0 %v3979
      %v4268 = vpop.f32.mrf.mxu0
      %v4269 = vadd.f32 %v3422, %v4268
      %v4270 = vpop.f32.mrf.mxu0
      %v4271 = vadd.f32 %v3427, %v4270
      %4272 = vmatmul.bf16.gmra.mxu0 %v3983
      %v4273 = vpop.f32.mrf.mxu0
      %v4274 = vadd.f32 %v3432, %v4273
      %v4275 = vpop.f32.mrf.mxu0
      %v4276 = vadd.f32 %v3437, %v4275
      %4277 = vmatmul.bf16.gmra.mxu0 %v3987
      %v4278 = vpop.f32.mrf.mxu0
      %v4279 = vadd.f32 %v3442, %v4278
      %v4280 = vpop.f32.mrf.mxu0
      %v4281 = vadd.f32 %v3447, %v4280
      %4282 = vmatmul.bf16.gmra.mxu0 %v3991
      %v4283 = vpop.f32.mrf.mxu0
      %v4284 = vadd.f32 %v3452, %v4283
      %v4285 = vpop.f32.mrf.mxu0
      %v4286 = vadd.f32 %v3457, %v4285
      %4287 = vmatmul.bf16.gmra.mxu0 %v3995
      %v4288 = vpop.f32.mrf.mxu0
      %v4289 = vadd.f32 %v3462, %v4288
      %v4290 = vpop.f32.mrf.mxu0
      %v4291 = vadd.f32 %v3467, %v4290
      %4292 = vmatmul.bf16.gmra.mxu0 %v3999
      %v4293 = vpop.f32.mrf.mxu0
      %v4294 = vadd.f32 %v3472, %v4293
      %v4295 = vpop.f32.mrf.mxu0
      %v4296 = vadd.f32 %v3477, %v4295
      %4297 = vmatmul.bf16.gmra.mxu0 %v4003
      %v4298 = vpop.f32.mrf.mxu0
      %v4299 = vadd.f32 %v3482, %v4298
      %v4300 = vpop.f32.mrf.mxu0
      %v4301 = vadd.f32 %v3487, %v4300
      %4302 = vmatmul.bf16.gmra.mxu0 %v4007
      %v4303 = vpop.f32.mrf.mxu0
      %v4304 = vadd.f32 %v3492, %v4303
      %v4305 = vpop.f32.mrf.mxu0
      %v4306 = vadd.f32 %v3497, %v4305
      %4307 = vdwg.mxu0
      %4308 = vmatpush.bf16.msra.mxu0 %v2970
      %4309 = vmatpush.bf16.msra.mxu0 %v2969
      %4310 = vmatpush.bf16.msra.mxu0 %v2968
      %4311 = vmatpush.bf16.msra.mxu0 %v2967
      %4312 = vmatpush.bf16.msra.mxu0 %v2966
      %4313 = vmatpush.bf16.msra.mxu0 %v2965
      %4314 = vmatpush.bf16.msra.mxu0 %v2964
      %4315 = vmatpush.bf16.msra.mxu0 %v2963
      %4316 = vmatmul.bf16.gmra.mxu0 %v3884
      %v4317 = vpop.f32.mrf.mxu0
      %v4318 = vadd.f32 %v4149, %v4317
      %v4319 = vpop.f32.mrf.mxu0
      %v4320 = vadd.f32 %v4151, %v4319
      %4321 = vmatmul.bf16.gmra.mxu0 %v3888
      %v4322 = vpop.f32.mrf.mxu0
      %v4323 = vadd.f32 %v4154, %v4322
      %v4324 = vpop.f32.mrf.mxu0
      %v4325 = vadd.f32 %v4156, %v4324
      %4326 = vmatmul.bf16.gmra.mxu0 %v3892
      %v4327 = vpop.f32.mrf.mxu0
      %v4328 = vadd.f32 %v4159, %v4327
      %v4329 = vpop.f32.mrf.mxu0
      %v4330 = vadd.f32 %v4161, %v4329
      %4331 = vmatmul.bf16.gmra.mxu0 %v3896
      %v4332 = vpop.f32.mrf.mxu0
      %v4333 = vadd.f32 %v4164, %v4332
      %v4334 = vpop.f32.mrf.mxu0
      %v4335 = vadd.f32 %v4166, %v4334
      %4336 = vmatmul.bf16.gmra.mxu0 %v3900
      %v4337 = vpop.f32.mrf.mxu0
      %v4338 = vadd.f32 %v4169, %v4337
      %v4339 = vpop.f32.mrf.mxu0
      %v4340 = vadd.f32 %v4171, %v4339
      %4341 = vmatmul.bf16.gmra.mxu0 %v3904
      %v4342 = vpop.f32.mrf.mxu0
      %v4343 = vadd.f32 %v4174, %v4342
      %v4344 = vpop.f32.mrf.mxu0
      %v4345 = vadd.f32 %v4176, %v4344
      %4346 = vmatmul.bf16.gmra.mxu0 %v3908
      %v4347 = vpop.f32.mrf.mxu0
      %v4348 = vadd.f32 %v4179, %v4347
      %v4349 = vpop.f32.mrf.mxu0
      %v4350 = vadd.f32 %v4181, %v4349
      %4351 = vmatmul.bf16.gmra.mxu0 %v3912
      %v4352 = vpop.f32.mrf.mxu0
      %v4353 = vadd.f32 %v4184, %v4352
      %v4354 = vpop.f32.mrf.mxu0
      %v4355 = vadd.f32 %v4186, %v4354
      %4356 = vmatmul.bf16.gmra.mxu0 %v3916
      %v4357 = vpop.f32.mrf.mxu0
      %v4358 = vadd.f32 %v4189, %v4357
      %v4359 = vpop.f32.mrf.mxu0
      %v4360 = vadd.f32 %v4191, %v4359
      %4361 = vmatmul.bf16.gmra.mxu0 %v3920
      %v4362 = vpop.f32.mrf.mxu0
      %v4363 = vadd.f32 %v4194, %v4362
      %v4364 = vpop.f32.mrf.mxu0
      %v4365 = vadd.f32 %v4196, %v4364
      %4366 = vmatmul.bf16.gmra.mxu0 %v3924
      %v4367 = vpop.f32.mrf.mxu0
      %v4368 = vadd.f32 %v4199, %v4367
      %v4369 = vpop.f32.mrf.mxu0
      %v4370 = vadd.f32 %v4201, %v4369
      %4371 = vmatmul.bf16.gmra.mxu0 %v3928
      %v4372 = vpop.f32.mrf.mxu0
      %v4373 = vadd.f32 %v4204, %v4372
      %v4374 = vpop.f32.mrf.mxu0
      %v4375 = vadd.f32 %v4206, %v4374
      %4376 = vmatmul.bf16.gmra.mxu0 %v3932
      %v4377 = vpop.f32.mrf.mxu0
      %v4378 = vadd.f32 %v4209, %v4377
      %v4379 = vpop.f32.mrf.mxu0
      %v4380 = vadd.f32 %v4211, %v4379
      %4381 = vmatmul.bf16.gmra.mxu0 %v3936
      %v4382 = vpop.f32.mrf.mxu0
      %v4383 = vadd.f32 %v4214, %v4382
      %v4384 = vpop.f32.mrf.mxu0
      %v4385 = vadd.f32 %v4216, %v4384
      %4386 = vmatmul.bf16.gmra.mxu0 %v3940
      %v4387 = vpop.f32.mrf.mxu0
      %v4388 = vadd.f32 %v4219, %v4387
      %v4389 = vpop.f32.mrf.mxu0
      %v4390 = vadd.f32 %v4221, %v4389
      %4391 = vmatmul.bf16.gmra.mxu0 %v3944
      %v4392 = vpop.f32.mrf.mxu0
      %v4393 = vadd.f32 %v4224, %v4392
      %v4394 = vpop.f32.mrf.mxu0
      %v4395 = vadd.f32 %v4226, %v4394
      %4396 = vmatmul.bf16.gmra.mxu0 %v3948
      %v4397 = vpop.f32.mrf.mxu0
      %v4398 = vadd.f32 %v4229, %v4397
      %v4399 = vpop.f32.mrf.mxu0
      %v4400 = vadd.f32 %v4231, %v4399
      %4401 = vmatmul.bf16.gmra.mxu0 %v3952
      %v4402 = vpop.f32.mrf.mxu0
      %v4403 = vadd.f32 %v4234, %v4402
      %v4404 = vpop.f32.mrf.mxu0
      %v4405 = vadd.f32 %v4236, %v4404
      %4406 = vmatmul.bf16.gmra.mxu0 %v3956
      %v4407 = vpop.f32.mrf.mxu0
      %v4408 = vadd.f32 %v4239, %v4407
      %v4409 = vpop.f32.mrf.mxu0
      %v4410 = vadd.f32 %v4241, %v4409
      %4411 = vmatmul.bf16.gmra.mxu0 %v3960
      %v4412 = vpop.f32.mrf.mxu0
      %v4413 = vadd.f32 %v4244, %v4412
      %v4414 = vpop.f32.mrf.mxu0
      %v4415 = vadd.f32 %v4246, %v4414
      %4416 = vmatmul.bf16.gmra.mxu0 %v3964
      %v4417 = vpop.f32.mrf.mxu0
      %v4418 = vadd.f32 %v4249, %v4417
      %v4419 = vpop.f32.mrf.mxu0
      %v4420 = vadd.f32 %v4251, %v4419
      %4421 = vmatmul.bf16.gmra.mxu0 %v3968
      %v4422 = vpop.f32.mrf.mxu0
      %v4423 = vadd.f32 %v4254, %v4422
      %v4424 = vpop.f32.mrf.mxu0
      %v4425 = vadd.f32 %v4256, %v4424
      %4426 = vmatmul.bf16.gmra.mxu0 %v3972
      %v4427 = vpop.f32.mrf.mxu0
      %v4428 = vadd.f32 %v4259, %v4427
      %v4429 = vpop.f32.mrf.mxu0
      %v4430 = vadd.f32 %v4261, %v4429
      %4431 = vmatmul.bf16.gmra.mxu0 %v3976
      %v4432 = vpop.f32.mrf.mxu0
      %v4433 = vadd.f32 %v4264, %v4432
      %v4434 = vpop.f32.mrf.mxu0
      %v4435 = vadd.f32 %v4266, %v4434
      %4436 = vmatmul.bf16.gmra.mxu0 %v3980
      %v4437 = vpop.f32.mrf.mxu0
      %v4438 = vadd.f32 %v4269, %v4437
      %v4439 = vpop.f32.mrf.mxu0
      %v4440 = vadd.f32 %v4271, %v4439
      %4441 = vmatmul.bf16.gmra.mxu0 %v3984
      %v4442 = vpop.f32.mrf.mxu0
      %v4443 = vadd.f32 %v4274, %v4442
      %v4444 = vpop.f32.mrf.mxu0
      %v4445 = vadd.f32 %v4276, %v4444
      %4446 = vmatmul.bf16.gmra.mxu0 %v3988
      %v4447 = vpop.f32.mrf.mxu0
      %v4448 = vadd.f32 %v4279, %v4447
      %v4449 = vpop.f32.mrf.mxu0
      %v4450 = vadd.f32 %v4281, %v4449
      %4451 = vmatmul.bf16.gmra.mxu0 %v3992
      %v4452 = vpop.f32.mrf.mxu0
      %v4453 = vadd.f32 %v4284, %v4452
      %v4454 = vpop.f32.mrf.mxu0
      %v4455 = vadd.f32 %v4286, %v4454
      %4456 = vmatmul.bf16.gmra.mxu0 %v3996
      %v4457 = vpop.f32.mrf.mxu0
      %v4458 = vadd.f32 %v4289, %v4457
      %v4459 = vpop.f32.mrf.mxu0
      %v4460 = vadd.f32 %v4291, %v4459
      %4461 = vmatmul.bf16.gmra.mxu0 %v4000
      %v4462 = vpop.f32.mrf.mxu0
      %v4463 = vadd.f32 %v4294, %v4462
      %v4464 = vpop.f32.mrf.mxu0
      %v4465 = vadd.f32 %v4296, %v4464
      %4466 = vmatmul.bf16.gmra.mxu0 %v4004
      %v4467 = vpop.f32.mrf.mxu0
      %v4468 = vadd.f32 %v4299, %v4467
      %v4469 = vpop.f32.mrf.mxu0
      %v4470 = vadd.f32 %v4301, %v4469
      %4471 = vmatmul.bf16.gmra.mxu0 %v4008
      %v4472 = vpop.f32.mrf.mxu0
      %v4473 = vadd.f32 %v4304, %v4472
      %v4474 = vpop.f32.mrf.mxu0
      %v4475 = vadd.f32 %v4306, %v4474
      %4476 = vdwg.mxu0
      %4477 = vmatpush.bf16.msra.mxu0 %v2978
      %4478 = vmatpush.bf16.msra.mxu0 %v2977
      %4479 = vmatpush.bf16.msra.mxu0 %v2976
      %4480 = vmatpush.bf16.msra.mxu0 %v2975
      %4481 = vmatpush.bf16.msra.mxu0 %v2974
      %4482 = vmatpush.bf16.msra.mxu0 %v2973
      %4483 = vmatpush.bf16.msra.mxu0 %v2972
      %4484 = vmatpush.bf16.msra.mxu0 %v2971
      %4485 = vmatmul.bf16.gmra.mxu0 %v3885
      %v4486 = vpop.f32.mrf.mxu0
      %v4487 = vadd.f32 %v4318, %v4486
      %v4488 = vpop.f32.mrf.mxu0
      %v4489 = vadd.f32 %v4320, %v4488
      %4490 = vmatmul.bf16.gmra.mxu0 %v3889
      %v4491 = vpop.f32.mrf.mxu0
      %v4492 = vadd.f32 %v4323, %v4491
      %v4493 = vpop.f32.mrf.mxu0
      %v4494 = vadd.f32 %v4325, %v4493
      %4495 = vmatmul.bf16.gmra.mxu0 %v3893
      %v4496 = vpop.f32.mrf.mxu0
      %v4497 = vadd.f32 %v4328, %v4496
      %v4498 = vpop.f32.mrf.mxu0
      %v4499 = vadd.f32 %v4330, %v4498
      %4500 = vmatmul.bf16.gmra.mxu0 %v3897
      %v4501 = vpop.f32.mrf.mxu0
      %v4502 = vadd.f32 %v4333, %v4501
      %v4503 = vpop.f32.mrf.mxu0
      %v4504 = vadd.f32 %v4335, %v4503
      %4505 = vmatmul.bf16.gmra.mxu0 %v3901
      %v4506 = vpop.f32.mrf.mxu0
      %v4507 = vadd.f32 %v4338, %v4506
      %v4508 = vpop.f32.mrf.mxu0
      %v4509 = vadd.f32 %v4340, %v4508
      %4510 = vmatmul.bf16.gmra.mxu0 %v3905
      %v4511 = vpop.f32.mrf.mxu0
      %v4512 = vadd.f32 %v4343, %v4511
      %v4513 = vpop.f32.mrf.mxu0
      %v4514 = vadd.f32 %v4345, %v4513
      %4515 = vmatmul.bf16.gmra.mxu0 %v3909
      %v4516 = vpop.f32.mrf.mxu0
      %v4517 = vadd.f32 %v4348, %v4516
      %v4518 = vpop.f32.mrf.mxu0
      %v4519 = vadd.f32 %v4350, %v4518
      %4520 = vmatmul.bf16.gmra.mxu0 %v3913
      %v4521 = vpop.f32.mrf.mxu0
      %v4522 = vadd.f32 %v4353, %v4521
      %v4523 = vpop.f32.mrf.mxu0
      %v4524 = vadd.f32 %v4355, %v4523
      %4525 = vmatmul.bf16.gmra.mxu0 %v3917
      %v4526 = vpop.f32.mrf.mxu0
      %v4527 = vadd.f32 %v4358, %v4526
      %v4528 = vpop.f32.mrf.mxu0
      %v4529 = vadd.f32 %v4360, %v4528
      %4530 = vmatmul.bf16.gmra.mxu0 %v3921
      %v4531 = vpop.f32.mrf.mxu0
      %v4532 = vadd.f32 %v4363, %v4531
      %v4533 = vpop.f32.mrf.mxu0
      %v4534 = vadd.f32 %v4365, %v4533
      %4535 = vmatmul.bf16.gmra.mxu0 %v3925
      %v4536 = vpop.f32.mrf.mxu0
      %v4537 = vadd.f32 %v4368, %v4536
      %v4538 = vpop.f32.mrf.mxu0
      %v4539 = vadd.f32 %v4370, %v4538
      %4540 = vmatmul.bf16.gmra.mxu0 %v3929
      %v4541 = vpop.f32.mrf.mxu0
      %v4542 = vadd.f32 %v4373, %v4541
      %v4543 = vpop.f32.mrf.mxu0
      %v4544 = vadd.f32 %v4375, %v4543
      %4545 = vmatmul.bf16.gmra.mxu0 %v3933
      %v4546 = vpop.f32.mrf.mxu0
      %v4547 = vadd.f32 %v4378, %v4546
      %v4548 = vpop.f32.mrf.mxu0
      %v4549 = vadd.f32 %v4380, %v4548
      %4550 = vmatmul.bf16.gmra.mxu0 %v3937
      %v4551 = vpop.f32.mrf.mxu0
      %v4552 = vadd.f32 %v4383, %v4551
      %v4553 = vpop.f32.mrf.mxu0
      %v4554 = vadd.f32 %v4385, %v4553
      %4555 = vmatmul.bf16.gmra.mxu0 %v3941
      %v4556 = vpop.f32.mrf.mxu0
      %v4557 = vadd.f32 %v4388, %v4556
      %v4558 = vpop.f32.mrf.mxu0
      %v4559 = vadd.f32 %v4390, %v4558
      %4560 = vmatmul.bf16.gmra.mxu0 %v3945
      %v4561 = vpop.f32.mrf.mxu0
      %v4562 = vadd.f32 %v4393, %v4561
      %v4563 = vpop.f32.mrf.mxu0
      %v4564 = vadd.f32 %v4395, %v4563
      %4565 = vmatmul.bf16.gmra.mxu0 %v3949
      %v4566 = vpop.f32.mrf.mxu0
      %v4567 = vadd.f32 %v4398, %v4566
      %v4568 = vpop.f32.mrf.mxu0
      %v4569 = vadd.f32 %v4400, %v4568
      %4570 = vmatmul.bf16.gmra.mxu0 %v3953
      %v4571 = vpop.f32.mrf.mxu0
      %v4572 = vadd.f32 %v4403, %v4571
      %v4573 = vpop.f32.mrf.mxu0
      %v4574 = vadd.f32 %v4405, %v4573
      %4575 = vmatmul.bf16.gmra.mxu0 %v3957
      %v4576 = vpop.f32.mrf.mxu0
      %v4577 = vadd.f32 %v4408, %v4576
      %v4578 = vpop.f32.mrf.mxu0
      %v4579 = vadd.f32 %v4410, %v4578
      %4580 = vmatmul.bf16.gmra.mxu0 %v3961
      %v4581 = vpop.f32.mrf.mxu0
      %v4582 = vadd.f32 %v4413, %v4581
      %v4583 = vpop.f32.mrf.mxu0
      %v4584 = vadd.f32 %v4415, %v4583
      %4585 = vmatmul.bf16.gmra.mxu0 %v3965
      %v4586 = vpop.f32.mrf.mxu0
      %v4587 = vadd.f32 %v4418, %v4586
      %v4588 = vpop.f32.mrf.mxu0
      %v4589 = vadd.f32 %v4420, %v4588
      %4590 = vmatmul.bf16.gmra.mxu0 %v3969
      %v4591 = vpop.f32.mrf.mxu0
      %v4592 = vadd.f32 %v4423, %v4591
      %v4593 = vpop.f32.mrf.mxu0
      %v4594 = vadd.f32 %v4425, %v4593
      %4595 = vmatmul.bf16.gmra.mxu0 %v3973
      %v4596 = vpop.f32.mrf.mxu0
      %v4597 = vadd.f32 %v4428, %v4596
      %v4598 = vpop.f32.mrf.mxu0
      %v4599 = vadd.f32 %v4430, %v4598
      %4600 = vmatmul.bf16.gmra.mxu0 %v3977
      %v4601 = vpop.f32.mrf.mxu0
      %v4602 = vadd.f32 %v4433, %v4601
      %v4603 = vpop.f32.mrf.mxu0
      %v4604 = vadd.f32 %v4435, %v4603
      %4605 = vmatmul.bf16.gmra.mxu0 %v3981
      %v4606 = vpop.f32.mrf.mxu0
      %v4607 = vadd.f32 %v4438, %v4606
      %v4608 = vpop.f32.mrf.mxu0
      %v4609 = vadd.f32 %v4440, %v4608
      %4610 = vmatmul.bf16.gmra.mxu0 %v3985
      %v4611 = vpop.f32.mrf.mxu0
      %v4612 = vadd.f32 %v4443, %v4611
      %v4613 = vpop.f32.mrf.mxu0
      %v4614 = vadd.f32 %v4445, %v4613
      %4615 = vmatmul.bf16.gmra.mxu0 %v3989
      %v4616 = vpop.f32.mrf.mxu0
      %v4617 = vadd.f32 %v4448, %v4616
      %v4618 = vpop.f32.mrf.mxu0
      %v4619 = vadd.f32 %v4450, %v4618
      %4620 = vmatmul.bf16.gmra.mxu0 %v3993
      %v4621 = vpop.f32.mrf.mxu0
      %v4622 = vadd.f32 %v4453, %v4621
      %v4623 = vpop.f32.mrf.mxu0
      %v4624 = vadd.f32 %v4455, %v4623
      %4625 = vmatmul.bf16.gmra.mxu0 %v3997
      %v4626 = vpop.f32.mrf.mxu0
      %v4627 = vadd.f32 %v4458, %v4626
      %v4628 = vpop.f32.mrf.mxu0
      %v4629 = vadd.f32 %v4460, %v4628
      %4630 = vmatmul.bf16.gmra.mxu0 %v4001
      %v4631 = vpop.f32.mrf.mxu0
      %v4632 = vadd.f32 %v4463, %v4631
      %v4633 = vpop.f32.mrf.mxu0
      %v4634 = vadd.f32 %v4465, %v4633
      %4635 = vmatmul.bf16.gmra.mxu0 %v4005
      %v4636 = vpop.f32.mrf.mxu0
      %v4637 = vadd.f32 %v4468, %v4636
      %v4638 = vpop.f32.mrf.mxu0
      %v4639 = vadd.f32 %v4470, %v4638
      %4640 = vmatmul.bf16.gmra.mxu0 %v4009
      %v4641 = vpop.f32.mrf.mxu0
      %v4642 = vadd.f32 %v4473, %v4641
      %v4643 = vpop.f32.mrf.mxu0
      %v4644 = vadd.f32 %v4475, %v4643
      %4645 = vdwg.mxu0
      %4646 = vmatpush.bf16.msra.mxu0 %v2986
      %4647 = vmatpush.bf16.msra.mxu0 %v2985
      %4648 = vmatpush.bf16.msra.mxu0 %v2984
      %4649 = vmatpush.bf16.msra.mxu0 %v2983
      %4650 = vmatpush.bf16.msra.mxu0 %v2982
      %4651 = vmatpush.bf16.msra.mxu0 %v2981
      %4652 = vmatpush.bf16.msra.mxu0 %v2980
      %4653 = vmatpush.bf16.msra.mxu0 %v2979
      %4654 = vmatmul.bf16.gmra.mxu0 %v3886
      %v4655 = vpop.f32.mrf.mxu0
      %v4656 = vadd.f32 %v4487, %v4655
      %v4657 = vpop.f32.mrf.mxu0
      %v4658 = vadd.f32 %v4489, %v4657
      %4659 = vmatmul.bf16.gmra.mxu0 %v3890
      %v4660 = vpop.f32.mrf.mxu0
      %v4661 = vadd.f32 %v4492, %v4660
      %v4662 = vpop.f32.mrf.mxu0
      %v4663 = vadd.f32 %v4494, %v4662
      %4664 = vmatmul.bf16.gmra.mxu0 %v3894
      %v4665 = vpop.f32.mrf.mxu0
      %v4666 = vadd.f32 %v4497, %v4665
      %v4667 = vpop.f32.mrf.mxu0
      %v4668 = vadd.f32 %v4499, %v4667
      %4669 = vmatmul.bf16.gmra.mxu0 %v3898
      %v4670 = vpop.f32.mrf.mxu0
      %v4671 = vadd.f32 %v4502, %v4670
      %v4672 = vpop.f32.mrf.mxu0
      %v4673 = vadd.f32 %v4504, %v4672
      %4674 = vmatmul.bf16.gmra.mxu0 %v3902
      %v4675 = vpop.f32.mrf.mxu0
      %v4676 = vadd.f32 %v4507, %v4675
      %v4677 = vpop.f32.mrf.mxu0
      %v4678 = vadd.f32 %v4509, %v4677
      %4679 = vmatmul.bf16.gmra.mxu0 %v3906
      %v4680 = vpop.f32.mrf.mxu0
      %v4681 = vadd.f32 %v4512, %v4680
      %v4682 = vpop.f32.mrf.mxu0
      %v4683 = vadd.f32 %v4514, %v4682
      %4684 = vmatmul.bf16.gmra.mxu0 %v3910
      %v4685 = vpop.f32.mrf.mxu0
      %v4686 = vadd.f32 %v4517, %v4685
      %v4687 = vpop.f32.mrf.mxu0
      %v4688 = vadd.f32 %v4519, %v4687
      %4689 = vmatmul.bf16.gmra.mxu0 %v3914
      %v4690 = vpop.f32.mrf.mxu0
      %v4691 = vadd.f32 %v4522, %v4690
      %v4692 = vpop.f32.mrf.mxu0
      %v4693 = vadd.f32 %v4524, %v4692
      %4694 = vmatmul.bf16.gmra.mxu0 %v3918
      %v4695 = vpop.f32.mrf.mxu0
      %v4696 = vadd.f32 %v4527, %v4695
      %v4697 = vpop.f32.mrf.mxu0
      %v4698 = vadd.f32 %v4529, %v4697
      %4699 = vmatmul.bf16.gmra.mxu0 %v3922
      %v4700 = vpop.f32.mrf.mxu0
      %v4701 = vadd.f32 %v4532, %v4700
      %v4702 = vpop.f32.mrf.mxu0
      %v4703 = vadd.f32 %v4534, %v4702
      %4704 = vmatmul.bf16.gmra.mxu0 %v3926
      %v4705 = vpop.f32.mrf.mxu0
      %v4706 = vadd.f32 %v4537, %v4705
      %v4707 = vpop.f32.mrf.mxu0
      %v4708 = vadd.f32 %v4539, %v4707
      %4709 = vmatmul.bf16.gmra.mxu0 %v3930
      %v4710 = vpop.f32.mrf.mxu0
      %v4711 = vadd.f32 %v4542, %v4710
      %v4712 = vpop.f32.mrf.mxu0
      %v4713 = vadd.f32 %v4544, %v4712
      %4714 = vmatmul.bf16.gmra.mxu0 %v3934
      %v4715 = vpop.f32.mrf.mxu0
      %v4716 = vadd.f32 %v4547, %v4715
      %v4717 = vpop.f32.mrf.mxu0
      %v4718 = vadd.f32 %v4549, %v4717
      %4719 = vmatmul.bf16.gmra.mxu0 %v3938
      %v4720 = vpop.f32.mrf.mxu0
      %v4721 = vadd.f32 %v4552, %v4720
      %v4722 = vpop.f32.mrf.mxu0
      %v4723 = vadd.f32 %v4554, %v4722
      %4724 = vmatmul.bf16.gmra.mxu0 %v3942
      %v4725 = vpop.f32.mrf.mxu0
      %v4726 = vadd.f32 %v4557, %v4725
      %v4727 = vpop.f32.mrf.mxu0
      %v4728 = vadd.f32 %v4559, %v4727
      %4729 = vmatmul.bf16.gmra.mxu0 %v3946
      %v4730 = vpop.f32.mrf.mxu0
      %v4731 = vadd.f32 %v4562, %v4730
      %v4732 = vpop.f32.mrf.mxu0
      %v4733 = vadd.f32 %v4564, %v4732
      %4734 = vmatmul.bf16.gmra.mxu0 %v3950
      %v4735 = vpop.f32.mrf.mxu0
      %v4736 = vadd.f32 %v4567, %v4735
      %v4737 = vpop.f32.mrf.mxu0
      %v4738 = vadd.f32 %v4569, %v4737
      %4739 = vmatmul.bf16.gmra.mxu0 %v3954
      %v4740 = vpop.f32.mrf.mxu0
      %v4741 = vadd.f32 %v4572, %v4740
      %v4742 = vpop.f32.mrf.mxu0
      %v4743 = vadd.f32 %v4574, %v4742
      %4744 = vmatmul.bf16.gmra.mxu0 %v3958
      %v4745 = vpop.f32.mrf.mxu0
      %v4746 = vadd.f32 %v4577, %v4745
      %v4747 = vpop.f32.mrf.mxu0
      %v4748 = vadd.f32 %v4579, %v4747
      %4749 = vmatmul.bf16.gmra.mxu0 %v3962
      %v4750 = vpop.f32.mrf.mxu0
      %v4751 = vadd.f32 %v4582, %v4750
      %v4752 = vpop.f32.mrf.mxu0
      %v4753 = vadd.f32 %v4584, %v4752
      %4754 = vmatmul.bf16.gmra.mxu0 %v3966
      %v4755 = vpop.f32.mrf.mxu0
      %v4756 = vadd.f32 %v4587, %v4755
      %v4757 = vpop.f32.mrf.mxu0
      %v4758 = vadd.f32 %v4589, %v4757
      %4759 = vmatmul.bf16.gmra.mxu0 %v3970
      %v4760 = vpop.f32.mrf.mxu0
      %v4761 = vadd.f32 %v4592, %v4760
      %v4762 = vpop.f32.mrf.mxu0
      %v4763 = vadd.f32 %v4594, %v4762
      %4764 = vmatmul.bf16.gmra.mxu0 %v3974
      %v4765 = vpop.f32.mrf.mxu0
      %v4766 = vadd.f32 %v4597, %v4765
      %v4767 = vpop.f32.mrf.mxu0
      %v4768 = vadd.f32 %v4599, %v4767
      %4769 = vmatmul.bf16.gmra.mxu0 %v3978
      %v4770 = vpop.f32.mrf.mxu0
      %v4771 = vadd.f32 %v4602, %v4770
      %v4772 = vpop.f32.mrf.mxu0
      %v4773 = vadd.f32 %v4604, %v4772
      %4774 = vmatmul.bf16.gmra.mxu0 %v3982
      %v4775 = vpop.f32.mrf.mxu0
      %v4776 = vadd.f32 %v4607, %v4775
      %v4777 = vpop.f32.mrf.mxu0
      %v4778 = vadd.f32 %v4609, %v4777
      %4779 = vmatmul.bf16.gmra.mxu0 %v3986
      %v4780 = vpop.f32.mrf.mxu0
      %v4781 = vadd.f32 %v4612, %v4780
      %v4782 = vpop.f32.mrf.mxu0
      %v4783 = vadd.f32 %v4614, %v4782
      %4784 = vmatmul.bf16.gmra.mxu0 %v3990
      %v4785 = vpop.f32.mrf.mxu0
      %v4786 = vadd.f32 %v4617, %v4785
      %v4787 = vpop.f32.mrf.mxu0
      %v4788 = vadd.f32 %v4619, %v4787
      %4789 = vmatmul.bf16.gmra.mxu0 %v3994
      %v4790 = vpop.f32.mrf.mxu0
      %v4791 = vadd.f32 %v4622, %v4790
      %v4792 = vpop.f32.mrf.mxu0
      %v4793 = vadd.f32 %v4624, %v4792
      %4794 = vmatmul.bf16.gmra.mxu0 %v3998
      %v4795 = vpop.f32.mrf.mxu0
      %v4796 = vadd.f32 %v4627, %v4795
      %v4797 = vpop.f32.mrf.mxu0
      %v4798 = vadd.f32 %v4629, %v4797
      %4799 = vmatmul.bf16.gmra.mxu0 %v4002
      %v4800 = vpop.f32.mrf.mxu0
      %v4801 = vadd.f32 %v4632, %v4800
      %v4802 = vpop.f32.mrf.mxu0
      %v4803 = vadd.f32 %v4634, %v4802
      %4804 = vmatmul.bf16.gmra.mxu0 %v4006
      %v4805 = vpop.f32.mrf.mxu0
      %v4806 = vadd.f32 %v4637, %v4805
      %v4807 = vpop.f32.mrf.mxu0
      %v4808 = vadd.f32 %v4639, %v4807
      %4809 = vmatmul.bf16.gmra.mxu0 %v4010
      %v4810 = vpop.f32.mrf.mxu0
      %v4811 = vadd.f32 %v4642, %v4810
      %v4812 = vpop.f32.mrf.mxu0
      %v4813 = vadd.f32 %v4644, %v4812
      %4814 = vdwg.mxu0
      %v4815 = vmax.f32 %v4656, 0.0
      %v4816 = vmax.f32 %v4658, 0.0
      %v4817 = vmax.f32 %v4661, 0.0
      %v4818 = vmax.f32 %v4663, 0.0
      %v4819 = vmax.f32 %v4666, 0.0
      %v4820 = vmax.f32 %v4668, 0.0
      %v4821 = vmax.f32 %v4671, 0.0
      %v4822 = vmax.f32 %v4673, 0.0
      %v4823 = vmax.f32 %v4676, 0.0
      %v4824 = vmax.f32 %v4678, 0.0
      %v4825 = vmax.f32 %v4681, 0.0
      %v4826 = vmax.f32 %v4683, 0.0
      %v4827 = vmax.f32 %v4686, 0.0
      %v4828 = vmax.f32 %v4688, 0.0
      %v4829 = vmax.f32 %v4691, 0.0
      %v4830 = vmax.f32 %v4693, 0.0
      %v4831 = vmax.f32 %v4696, 0.0
      %v4832 = vmax.f32 %v4698, 0.0
      %v4833 = vmax.f32 %v4701, 0.0
      %v4834 = vmax.f32 %v4703, 0.0
      %v4835 = vmax.f32 %v4706, 0.0
      %v4836 = vmax.f32 %v4708, 0.0
      %v4837 = vmax.f32 %v4711, 0.0
      %v4838 = vmax.f32 %v4713, 0.0
      %v4839 = vmax.f32 %v4716, 0.0
      %v4840 = vmax.f32 %v4718, 0.0
      %v4841 = vmax.f32 %v4721, 0.0
      %v4842 = vmax.f32 %v4723, 0.0
      %v4843 = vmax.f32 %v4726, 0.0
      %v4844 = vmax.f32 %v4728, 0.0
      %v4845 = vmax.f32 %v4731, 0.0
      %v4846 = vmax.f32 %v4733, 0.0
      %v4847 = vmax.f32 %v4736, 0.0
      %v4848 = vmax.f32 %v4738, 0.0
      %v4849 = vmax.f32 %v4741, 0.0
      %v4850 = vmax.f32 %v4743, 0.0
      %v4851 = vmax.f32 %v4746, 0.0
      %v4852 = vmax.f32 %v4748, 0.0
      %v4853 = vmax.f32 %v4751, 0.0
      %v4854 = vmax.f32 %v4753, 0.0
      %v4855 = vmax.f32 %v4756, 0.0
      %v4856 = vmax.f32 %v4758, 0.0
      %v4857 = vmax.f32 %v4761, 0.0
      %v4858 = vmax.f32 %v4763, 0.0
      %v4859 = vmax.f32 %v4766, 0.0
      %v4860 = vmax.f32 %v4768, 0.0
      %v4861 = vmax.f32 %v4771, 0.0
      %v4862 = vmax.f32 %v4773, 0.0
      %v4863 = vmax.f32 %v4776, 0.0
      %v4864 = vmax.f32 %v4778, 0.0
      %v4865 = vmax.f32 %v4781, 0.0
      %v4866 = vmax.f32 %v4783, 0.0
      %v4867 = vmax.f32 %v4786, 0.0
      %v4868 = vmax.f32 %v4788, 0.0
      %v4869 = vmax.f32 %v4791, 0.0
      %v4870 = vmax.f32 %v4793, 0.0
      %v4871 = vmax.f32 %v4796, 0.0
      %v4872 = vmax.f32 %v4798, 0.0
      %v4873 = vmax.f32 %v4801, 0.0
      %v4874 = vmax.f32 %v4803, 0.0
      %v4875 = vmax.f32 %v4806, 0.0
      %v4876 = vmax.f32 %v4808, 0.0
      %v4877 = vmax.f32 %v4811, 0.0
      %v4878 = vmax.f32 %v4813, 0.0
      %v4879 = vpack.c.bf16 %v4816, %v4815
      %v4880 = vpack.c.bf16 %v4818, %v4817
      %v4881 = vpack.c.bf16 %v4820, %v4819
      %v4882 = vpack.c.bf16 %v4822, %v4821
      %v4883 = vpack.c.bf16 %v4824, %v4823
      %v4884 = vpack.c.bf16 %v4826, %v4825
      %v4885 = vpack.c.bf16 %v4828, %v4827
      %v4886 = vpack.c.bf16 %v4830, %v4829
      %v4887 = vpack.c.bf16 %v4832, %v4831
      %v4888 = vpack.c.bf16 %v4834, %v4833
      %v4889 = vpack.c.bf16 %v4836, %v4835
      %v4890 = vpack.c.bf16 %v4838, %v4837
      %v4891 = vpack.c.bf16 %v4840, %v4839
      %v4892 = vpack.c.bf16 %v4842, %v4841
      %v4893 = vpack.c.bf16 %v4844, %v4843
      %v4894 = vpack.c.bf16 %v4846, %v4845
      %v4895 = vpack.c.bf16 %v4848, %v4847
      %v4896 = vpack.c.bf16 %v4850, %v4849
      %v4897 = vpack.c.bf16 %v4852, %v4851
      %v4898 = vpack.c.bf16 %v4854, %v4853
      %v4899 = vpack.c.bf16 %v4856, %v4855
      %v4900 = vpack.c.bf16 %v4858, %v4857
      %v4901 = vpack.c.bf16 %v4860, %v4859
      %v4902 = vpack.c.bf16 %v4862, %v4861
      %v4903 = vpack.c.bf16 %v4864, %v4863
      %v4904 = vpack.c.bf16 %v4866, %v4865
      %v4905 = vpack.c.bf16 %v4868, %v4867
      %v4906 = vpack.c.bf16 %v4870, %v4869
      %v4907 = vpack.c.bf16 %v4872, %v4871
      %v4908 = vpack.c.bf16 %v4874, %v4873
      %v4909 = vpack.c.bf16 %v4876, %v4875
      %v4910 = vpack.c.bf16 %v4878, %v4877
      %v4911 = vld [vmem:[%s5] sm:$0xff]
      %v4912 = vld [vmem:[%s6] sm:$0x7]
      %4914 = vset.pattern.permute.xlu0 0
      %4915 = vperm.xlu0 %4914, %v4912
      %v4916 = vpop.permute.xlu0 %4915
      %4919 = vst [vmem:[#allocation1] ss:$4 sm:$0xff] %v4911
      %v4920 = vld.sshfl [vmem:[#allocation1] sm:$0xff pattern:$0x73625140]
      %v4921 = vld.sshfl [vmem:[#allocation1 + $0x8] sm:$0xff pattern:$0x73625140]
      %v4922 = vld.sshfl [vmem:[#allocation1 + $0x10] sm:$0xff pattern:$0x73625140]
      %v4923 = vld.sshfl [vmem:[#allocation1 + $0x18] sm:$0xff pattern:$0x73625140]
      %4928 = vmatpush.bf16.msra.mxu0 %v4886
      %4929 = vmatpush.bf16.msra.mxu0 %v4885
      %4930 = vmatpush.bf16.msra.mxu0 %v4884
      %4931 = vmatpush.bf16.msra.mxu0 %v4883
      %4932 = vmatpush.bf16.msra.mxu0 %v4882
      %4933 = vmatpush.bf16.msra.mxu0 %v4881
      %4934 = vmatpush.bf16.msra.mxu0 %v4880
      %4935 = vmatpush.bf16.msra.mxu0 %v4879
      %4936 = vmatmul.bf16.gmra.mxu0 %v4920
      %v4937 = vpop.f32.mrf.mxu0
      %v4938 = vadd.f32 %v4916, %v4937
      %v4939 = vpop.f32.mrf.mxu0
      %4940 = vdwg.mxu0
      %4941 = vmatpush.bf16.msra.mxu0 %v4894
      %4942 = vmatpush.bf16.msra.mxu0 %v4893
      %4943 = vmatpush.bf16.msra.mxu0 %v4892
      %4944 = vmatpush.bf16.msra.mxu0 %v4891
      %4945 = vmatpush.bf16.msra.mxu0 %v4890
      %4946 = vmatpush.bf16.msra.mxu0 %v4889
      %4947 = vmatpush.bf16.msra.mxu0 %v4888
      %4948 = vmatpush.bf16.msra.mxu0 %v4887
      %4949 = vmatmul.bf16.gmra.mxu0 %v4921
      %v4950 = vpop.f32.mrf.mxu0
      %v4951 = vadd.f32 %v4938, %v4950
      %v4952 = vpop.f32.mrf.mxu0
      %4953 = vdwg.mxu0
      %4954 = vmatpush.bf16.msra.mxu0 %v4902
      %4955 = vmatpush.bf16.msra.mxu0 %v4901
      %4956 = vmatpush.bf16.msra.mxu0 %v4900
      %4957 = vmatpush.bf16.msra.mxu0 %v4899
      %4958 = vmatpush.bf16.msra.mxu0 %v4898
      %4959 = vmatpush.bf16.msra.mxu0 %v4897
      %4960 = vmatpush.bf16.msra.mxu0 %v4896
      %4961 = vmatpush.bf16.msra.mxu0 %v4895
      %4962 = vmatmul.bf16.gmra.mxu0 %v4922
      %v4963 = vpop.f32.mrf.mxu0
      %v4964 = vadd.f32 %v4951, %v4963
      %v4965 = vpop.f32.mrf.mxu0
      %4966 = vdwg.mxu0
      %4967 = vmatpush.bf16.msra.mxu0 %v4910
      %4968 = vmatpush.bf16.msra.mxu0 %v4909
      %4969 = vmatpush.bf16.msra.mxu0 %v4908
      %4970 = vmatpush.bf16.msra.mxu0 %v4907
      %4971 = vmatpush.bf16.msra.mxu0 %v4906
      %4972 = vmatpush.bf16.msra.mxu0 %v4905
      %4973 = vmatpush.bf16.msra.mxu0 %v4904
      %4974 = vmatpush.bf16.msra.mxu0 %v4903
      %4975 = vmatmul.bf16.gmra.mxu0 %v4923
      %v4976 = vpop.f32.mrf.mxu0
      %v4977 = vadd.f32 %v4964, %v4976
      %v4978 = vpop.f32.mrf.mxu0
      %4979 = vdwg.mxu0
      %4980 = vst [vmem:[%s307] sm:$0x7] %v4977
      %p4981 = scmp.lt.s32.totalorder %s22, 1
      %s4982 = scalar_select %p4981, %s22, 1
      %p4983 = scmp.lt.s32.totalorder %s23, 0
      %s4984 = scalar_select %p4983, %s23, 0
      %s4985 = sadd.s32 %s4984, %s4982
      %s4986 = smul.addr %s4985, 4
      %s4987 = scalar_lea.vmem %s7, %s4986
      // Predicated region
      $region49: #{foldingnet_dec_fold1.1} parent=47 // pred_check
        %p4988 = pneg %p204
      $region50: #{foldingnet_dec_fold1.1} parent=47 // pred_check_branch
        %4990 = sbr.rel (%p4988) target = $region52
      $region51: #{foldingnet_dec_fold1.1} parent=47 // pred_region
        _
      $region52: #{foldingnet_dec_fold1.1} parent=47 // pred_fallthru
        _
    $region48: #{foldingnet_dec_fold1.1} parent=5 // pred_fallthru
      _
    %p4991 = scmp.le.s32.totalorder 2, %s13
    // Predicated region
    $region53: #{foldingnet_dec_fold1.1} parent=5 // pred_check
      %p4992 = pneg %p4991
    $region54: #{foldingnet_dec_fold1.1} parent=5 // pred_check_branch
      %4994 = sbr.rel (%p4992) target = $region56
    $region55: #{foldingnet_dec_fold1.1} parent=5 // pred_region
      %s4995 = ssub.s32 %s13, 2
      // Predicated region
      $region57: #{foldingnet_dec_fold1.1} parent=55 // pred_check
        %p4996 = pneg %p210
      $region58: #{foldingnet_dec_fold1.1} parent=55 // pred_check_branch
        %4998 = sbr.rel (%p4996) target = $region60
      $region59: #{foldingnet_dec_fold1.1} parent=55 // pred_region
        %p4999 = scmp.lt.s32.totalorder %s24, 1
        %s5000 = scalar_select %p4999, %s24, 1
        %p5001 = scmp.lt.s32.totalorder %s25, 0
        %s5002 = scalar_select %p5001, %s25, 0
        %s5003 = sadd.s32 %s5002, %s5000
        %s5004 = smul.addr %s5003, 4
        %s5005 = scalar_lea.vmem %s7, %s5004
      $region60: #{foldingnet_dec_fold1.1} parent=55 // pred_fallthru
        _
    $region56: #{foldingnet_dec_fold1.1} parent=5 // pred_fallthru
      _
  $region6: #{foldingnet_dec_fold1.1} parent=0 // loop_footer
    %s17 = sadd.s32 1, %s13
  $region7: #{foldingnet_dec_fold1.1} parent=0 // loop_footer_branch
    %12 = sbr.rel target = $region3
  $region8: #{foldingnet_dec_fold1.1} parent=0 // loop_exit
    _

</llo_original>
